<compile_context>
chip_gen: v7x
topology: tpu7x:2x2x1
jax: 0.10.0
libtpu: 0.0.40
codegen_flags: <defaults>
</compile_context>

<pallas_src>
import jax
import jax.numpy as jnp
import numpy as np
from jax.experimental import pallas as pl
from jax.experimental.pallas import tpu as pltpu

# ------------------------- configuration (small, consistent with module) ----
BATCH = 2
SEQ = 8
NINP = 32               # embedding dim == conv filter_height (so H_out == 1)
NTOKEN = 50
NUM_FILTERS = 300
FILTER_WIDTHS = (1, 2, 3)                       # n-gram; 300 * 3 = 900 -> 900->600
MAXW = FILTER_WIDTHS[-1]
CNN_FEATS = NUM_FILTERS * len(FILTER_WIDTHS)    # 900 (hardcoded in CnnEncoder)
BOTTLENECK_OUT = 600
NCLASSES = 3
OUT_PAD = 128           # lane-aligned classifier output width (classes sliced back)
PAD_IDX = 0
SEQ_PAD = SEQ + 2       # CNN_wt pads one zero timestep left and right
NUM_WIN = SEQ_PAD       # merged width-3 im2col window starts 0..SEQ_PAD-1
SEQ_EXT = SEQ_PAD + MAXW - 1    # + (MAXW-1) extra zero rows for the merged im2col
B2 = 2 * BATCH          # both sequences stacked along batch


# ----------------------------- fused Pallas kernel ---------------------------
def fused_kernel(la_ref, ids_ref, emb_ref,
                 wconv_ref, bconv_ref, wb_ref, bb_ref,
                 wfc_ref, bfc_ref, wp_ref, bp_ref,
                 out_ref, r_ref):
    """embed -> merged conv(im2col) -> maxpool -> bottleneck -> combine -> classifier."""
    # --- embedding via one-hot matmul (bf16); ids == -1 (zero-pad slots) give 0 rows.
    ids = ids_ref[...]                                               # (2B, SEQ_EXT) int32
    tok = jax.lax.broadcasted_iota(jnp.int32, (B2, SEQ_EXT, NTOKEN), 2)
    onehot = (ids[:, :, None] == tok).astype(jnp.bfloat16)           # (2B, SEQ_EXT, V)
    x = jnp.dot(onehot.reshape(B2 * SEQ_EXT, NTOKEN), emb_ref[...],
                preferred_element_type=jnp.float32)                  # (2B*SEQ_EXT, D)
    x = x.astype(jnp.bfloat16).reshape(B2, SEQ_EXT, NINP)

    # --- merged im2col: one width-3 window per start, one matmul for all widths.
    win = jnp.concatenate([x[:, k:k + NUM_WIN, :] for k in range(MAXW)],
                          axis=-1)                                   # (2B, 10, 96) bf16
    acc = jnp.dot(win.reshape(B2 * NUM_WIN, MAXW * NINP), wconv_ref[...],
                  preferred_element_type=jnp.float32)                # (2B*10, 900)
    acc = acc.reshape(B2, NUM_WIN, CNN_FEATS)

    # mask positions that are invalid for the shorter widths before the max-pool.
    pos = jax.lax.broadcasted_iota(jnp.int32, (NUM_WIN, CNN_FEATS), 0)
    col = jax.lax.broadcasted_iota(jnp.int32, (NUM_WIN, CNN_FEATS), 1)
    invalid = ((col >= NUM_FILTERS) & (pos >= SEQ_PAD - 1)) | \
              ((col >= 2 * NUM_FILTERS) & (pos >= SEQ_PAD - 2))
    neg = jnp.where(invalid, jnp.float32(-1e30), jnp.float32(0.0))
    feats = jnp.max(acc + neg[None, :, :], axis=1) + bconv_ref[...]  # (2B, 900)

    # --- bottleneck: single 900->600 matmul + tanh.
    r = jnp.tanh(jnp.dot(feats.astype(jnp.bfloat16), wb_ref[...],
                         preferred_element_type=jnp.float32) + bb_ref[...])  # (2B, 600)
    r_ref[...] = r

    # --- classifier: wfc matmul on stacked r; la-combine hoisted after (linear).
    h = jnp.dot(r.astype(jnp.bfloat16), wfc_ref[...],
                preferred_element_type=jnp.float32)                  # (2B, 600)
    la = la_ref[0, 0]
    fc = jnp.maximum(la * h[:BATCH] + (1.0 - la) * h[BATCH:] + bfc_ref[...], 0.0)
    out_ref[...] = (jnp.dot(fc.astype(jnp.bfloat16), wp_ref[...],
                            preferred_element_type=jnp.float32) + bp_ref[...])


_VMEM = pl.BlockSpec(memory_space=pltpu.MemorySpace.VMEM)
_SMEM = pl.BlockSpec(memory_space=pltpu.MemorySpace.SMEM)

_fused_call = pl.pallas_call(
    fused_kernel,
    out_shape=(
        jax.ShapeDtypeStruct((BATCH, OUT_PAD), jnp.float32),         # padded logits
        jax.ShapeDtypeStruct((B2, BOTTLENECK_OUT), jnp.float32),     # stacked r1|r2
    ),
    in_specs=[_SMEM] + [_VMEM] * 10,
    out_specs=(_VMEM, _VMEM),
)


# ----------------------------- parameters ------------------------------------
def init_params(key):
    ks = jax.random.split(key, 16)
    p = {}
    emb = 0.02 * jax.random.normal(ks[0], (NTOKEN, NINP), jnp.float32)
    emb = emb.at[PAD_IDX].set(0.0)                  # Embed zeroes the <pad> row
    p["emb"] = emb
    p["convs"] = []
    for i, w in enumerate(FILTER_WIDTHS):
        cw = 0.05 * jax.random.normal(ks[1 + i], (NUM_FILTERS, 1, NINP, w),
                                      jnp.float32)          # PyTorch OIHW
        cb = 0.01 * jax.random.normal(ks[4 + i], (NUM_FILTERS,), jnp.float32)
        p["convs"].append((cw, cb))
    p["wb"] = 0.02 * jax.random.normal(ks[8], (BOTTLENECK_OUT, CNN_FEATS), jnp.float32)
    p["bb"] = 0.01 * jax.random.normal(ks[9], (BOTTLENECK_OUT,), jnp.float32)
    p["wfc"] = 0.02 * jax.random.normal(ks[10], (BOTTLENECK_OUT, BOTTLENECK_OUT), jnp.float32)
    p["bfc"] = 0.01 * jax.random.normal(ks[11], (BOTTLENECK_OUT,), jnp.float32)
    p["wp"] = 0.02 * jax.random.normal(ks[12], (NCLASSES, BOTTLENECK_OUT), jnp.float32)
    p["bp"] = 0.01 * jax.random.normal(ks[13], (NCLASSES,), jnp.float32)
    return p


def prepare_params(p):
    """One-time weight preprocessing into the kernel-ready (merged/padded/bf16) layout."""
    conv_blocks, conv_bias = [], []
    for (cw, cb), width in zip(p["convs"], FILTER_WIDTHS):
        F_, _, D_, w_ = cw.shape
        # (F,1,D,w) -> (w*D, F), row index k*D+d, matching the im2col column order.
        W = jnp.transpose(cw[:, 0, :, :], (2, 1, 0)).reshape(w_ * D_, F_)
        # zero-pad K up to MAXW*D so all widths share one (96, 300) block.
        W = jnp.pad(W, ((0, (MAXW - w_) * D_), (0, 0)))
        conv_blocks.append(W)
        conv_bias.append(cb)
    wconv = jnp.concatenate(conv_blocks, axis=1).astype(jnp.bfloat16)    # (96, 900)
    bconv = jnp.concatenate(conv_bias).reshape(1, -1).astype(jnp.float32)  # (1, 900)

    wp_pad = jnp.zeros((BOTTLENECK_OUT, OUT_PAD), jnp.float32)
    wp_pad = wp_pad.at[:, :NCLASSES].set(p["wp"].T)                       # (600, 128)
    bp_pad = jnp.zeros((1, OUT_PAD), jnp.float32).at[0, :NCLASSES].set(p["bp"])

    return {
        "emb": p["emb"].astype(jnp.bfloat16),            # (V, D) bf16
        "wconv": wconv,                                  # (96, 900) bf16 merged filters
        "bconv": bconv,                                  # (1, 900) f32
        "wb": p["wb"].T.astype(jnp.bfloat16),            # (900, 600) bf16
        "bb": p["bb"].reshape(1, -1),
        "wfc": p["wfc"].T.astype(jnp.bfloat16),          # (600, 600) bf16
        "bfc": p["bfc"].reshape(1, -1),
        "wp": wp_pad.astype(jnp.bfloat16),               # (600, 128) bf16 lane-aligned
        "bp": bp_pad,                                    # (1, 128) f32
    }


# --------------------------- wrapper (jitted glue) ----------------------------
@jax.jit
def _forward_impl(ids1, ids2, la_arr, prep):
    def stack_pad(ids):
        # (S,B) -> (B, S + 2 + (MAXW-1)); -1 marks zero-embedding rows:
        #   1 left / 1 right CNN_wt zero pad + (MAXW-1) extra rows for merged im2col.
        t = jnp.transpose(ids, (1, 0))
        return jnp.pad(t, ((0, 0), (1, 1 + MAXW - 1)), constant_values=-1)

    ids_all = jnp.concatenate([stack_pad(ids1), stack_pad(ids2)], axis=0)  # (2B, SEQ_EXT)
    out_pad, r = _fused_call(
        la_arr, ids_all, prep["emb"],
        prep["wconv"], prep["bconv"],
        prep["wb"], prep["bb"],
        prep["wfc"], prep["bfc"],
        prep["wp"], prep["bp"])
    out = out_pad[:, :NCLASSES]
    return out, r[:BATCH], r[BATCH:]


def pair_model_forward(ids1, ids2, prepared_params, la=0.5):
    """Returns (out, r1, r2, attention, adist) mirroring PairModel.forward."""
    la_arr = jnp.full((1, 1), la, jnp.float32)
    out, r1, r2 = _forward_impl(ids1, ids2, la_arr, prepared_params)
    # TODO(synk): attention / adist are None for the CNN encoder branch (matches PyTorch).
    return out, r1, r2, None, None


# ------------------------------ pure-JAX reference ----------------------------
def ref_forward(ids1, ids2, params, la=0.5):
    def encode(ids):
        e = params["emb"][ids]                           # (S, B, D)
        e = jnp.pad(e, ((1, 1), (0, 0), (0, 0)))
        inp = jnp.transpose(e, (1, 2, 0))[:, None, :, :]          # NCHW (B,1,D,Sp)
        feats = []
        for cw, cb in params["convs"]:
            out = jax.lax.conv_general_dilated(
                inp, cw, (1, 1), "VALID",
                dimension_numbers=("NCHW", "OIHW", "NCHW"))       # (B,F,1,L)
            out = out + cb[None, :, None, None]
            feats.append(jnp.max(out[:, :, 0, :], axis=-1))       # (B,F)
        cat = jnp.concatenate(feats, axis=1)
        return jnp.tanh(cat @ params["wb"].T + params["bb"])
    r1, r2 = encode(ids1), encode(ids2)
    rc = la * r1 + (1.0 - la) * r2
    fc = jnp.maximum(rc @ params["wfc"].T + params["bfc"], 0.0)
    out = fc @ params["wp"].T + params["bp"]
    return out, r1, r2


# ----------------------------------- main -------------------------------------
if __name__ == "__main__":
    key = jax.random.PRNGKey(0)
    k_ids1, k_ids2, k_param = jax.random.split(key, 3)
    params = init_params(k_param)
    prep = prepare_params(params)          # one-time; no per-forward weight transforms

    ids1 = jax.random.randint(k_ids1, (SEQ, BATCH), 0, NTOKEN, dtype=jnp.int32)
    ids2 = jax.random.randint(k_ids2, (SEQ, BATCH), 0, NTOKEN, dtype=jnp.int32)

    out, r1, r2, attn, adist = pair_model_forward(ids1, ids2, prep, la=0.5)
    jax.block_until_ready((out, r1, r2))

    out_ref, r1_ref, r2_ref = ref_forward(ids1, ids2, params, la=0.5)
    np.testing.assert_allclose(np.asarray(r1), np.asarray(r1_ref), atol=2e-3, rtol=2e-3)
    np.testing.assert_allclose(np.asarray(r2), np.asarray(r2_ref), atol=2e-3, rtol=2e-3)
    np.testing.assert_allclose(np.asarray(out), np.asarray(out_ref), atol=2e-3, rtol=2e-3)

    print("KERNEL_OK")
</pallas_src>

<mosaic_0001>
module attributes {stable_mosaic.version = 11 : i64} {
  func.func @fused_kernel(%arg0: memref<1x1xf32, #tpu.memory_space<smem>>, %arg1: memref<4x12xi32, #tpu.memory_space<vmem>>, %arg2: memref<50x32xbf16, #tpu.memory_space<vmem>>, %arg3: memref<96x900xbf16, #tpu.memory_space<vmem>>, %arg4: memref<1x900xf32, #tpu.memory_space<vmem>>, %arg5: memref<900x600xbf16, #tpu.memory_space<vmem>>, %arg6: memref<1x600xf32, #tpu.memory_space<vmem>>, %arg7: memref<600x600xbf16, #tpu.memory_space<vmem>>, %arg8: memref<1x600xf32, #tpu.memory_space<vmem>>, %arg9: memref<600x128xbf16, #tpu.memory_space<vmem>>, %arg10: memref<1x128xf32, #tpu.memory_space<vmem>>, %arg11: memref<2x128xf32, #tpu.memory_space<vmem>>, %arg12: memref<4x600xf32, #tpu.memory_space<vmem>>) attributes {dimension_semantics = [], scalar_prefetch = 0 : i64, scratch_operands = 0 : i64, tpu.core_type = #tpu.core_type<tc>} {
    %c0 = arith.constant 0 : index
    %c0_0 = arith.constant 0 : index
    %0 = vector.load %arg1[%c0, %c0_0] : memref<4x12xi32, #tpu.memory_space<vmem>>, vector<4x12xi32>
    %1 = tpu.iota {dimensions = array<i32: 2>} : vector<4x12x50xi32>
    %2 = vector.shape_cast %0 : vector<4x12xi32> to vector<4x12x1xi32>
    %3 = vector.broadcast %2 : vector<4x12x1xi32> to vector<4x12x50xi32>
    %4 = arith.cmpi eq, %3, %1 : vector<4x12x50xi32>
    %5 = arith.extui %4 : vector<4x12x50xi1> to vector<4x12x50xi32>
    %6 = arith.sitofp %5 : vector<4x12x50xi32> to vector<4x12x50xf32>
    %7 = arith.truncf %6 : vector<4x12x50xf32> to vector<4x12x50xbf16>
    %8 = vector.shape_cast %7 : vector<4x12x50xbf16> to vector<48x50xbf16>
    %c0_1 = arith.constant 0 : index
    %c0_2 = arith.constant 0 : index
    %9 = vector.load %arg2[%c0_1, %c0_2] : memref<50x32xbf16, #tpu.memory_space<vmem>>, vector<50x32xbf16>
    %cst = arith.constant dense<0.000000e+00> : vector<48x32xf32>
    %10 = tpu.matmul %8, %9, %cst {dimension_numbers = #tpu.dot_dimension_numbers<[1], [0], [0], [1], [0, 0, 1, 1], [], []>} : vector<48x50xbf16>, vector<50x32xbf16>, vector<48x32xf32> -> vector<48x32xf32>
    %11 = arith.truncf %10 : vector<48x32xf32> to vector<48x32xbf16>
    %12 = vector.shape_cast %11 : vector<48x32xbf16> to vector<4x12x32xbf16>
    %13 = vector.extract_strided_slice %12 {offsets = [0, 0, 0], sizes = [4, 10, 32], strides = [1, 1, 1]} : vector<4x12x32xbf16> to vector<4x10x32xbf16>
    %14 = vector.extract_strided_slice %12 {offsets = [0, 1, 0], sizes = [4, 10, 32], strides = [1, 1, 1]} : vector<4x12x32xbf16> to vector<4x10x32xbf16>
    %15 = vector.extract_strided_slice %12 {offsets = [0, 2, 0], sizes = [4, 10, 32], strides = [1, 1, 1]} : vector<4x12x32xbf16> to vector<4x10x32xbf16>
    %16 = tpu.concatenate %13, %14, %15 in 2 : vector<4x10x32xbf16>, vector<4x10x32xbf16>, vector<4x10x32xbf16> -> vector<4x10x96xbf16>
    %17 = vector.shape_cast %16 : vector<4x10x96xbf16> to vector<40x96xbf16>
    %c0_3 = arith.constant 0 : index
    %c0_4 = arith.constant 0 : index
    %18 = vector.load %arg3[%c0_3, %c0_4] : memref<96x900xbf16, #tpu.memory_space<vmem>>, vector<96x900xbf16>
    %cst_5 = arith.constant dense<0.000000e+00> : vector<40x900xf32>
    %19 = tpu.matmul %17, %18, %cst_5 {dimension_numbers = #tpu.dot_dimension_numbers<[1], [0], [0], [1], [0, 0, 1, 1], [], []>} : vector<40x96xbf16>, vector<96x900xbf16>, vector<40x900xf32> -> vector<40x900xf32>
    %20 = vector.shape_cast %19 : vector<40x900xf32> to vector<4x10x900xf32>
    %21 = tpu.iota {dimensions = array<i32: 0>} : vector<10x900xi32>
    %22 = tpu.iota {dimensions = array<i32: 1>} : vector<10x900xi32>
    %c300_i32 = arith.constant 300 : i32
    %23 = vector.broadcast %c300_i32 : i32 to vector<10x900xi32>
    %24 = arith.cmpi sge, %22, %23 : vector<10x900xi32>
    %c9_i32 = arith.constant 9 : i32
    %25 = vector.broadcast %c9_i32 : i32 to vector<10x900xi32>
    %26 = arith.cmpi sge, %21, %25 : vector<10x900xi32>
    %27 = arith.andi %24, %26 : vector<10x900xi1>
    %c600_i32 = arith.constant 600 : i32
    %28 = vector.broadcast %c600_i32 : i32 to vector<10x900xi32>
    %29 = arith.cmpi sge, %22, %28 : vector<10x900xi32>
    %c8_i32 = arith.constant 8 : i32
    %30 = vector.broadcast %c8_i32 : i32 to vector<10x900xi32>
    %31 = arith.cmpi sge, %21, %30 : vector<10x900xi32>
    %32 = arith.andi %29, %31 : vector<10x900xi1>
    %33 = arith.ori %27, %32 : vector<10x900xi1>
    %cst_6 = arith.constant -1.000000e+30 : f32
    %cst_7 = arith.constant 0.000000e+00 : f32
    %34 = vector.broadcast %cst_6 : f32 to vector<10x900xf32>
    %35 = vector.broadcast %cst_7 : f32 to vector<10x900xf32>
    %36 = arith.select %33, %34, %35 : vector<10x900xi1>, vector<10x900xf32>
    %37 = vector.shape_cast %36 : vector<10x900xf32> to vector<1x10x900xf32>
    %38 = vector.broadcast %37 : vector<1x10x900xf32> to vector<4x10x900xf32>
    %39 = arith.addf %20, %38 : vector<4x10x900xf32>
    %cst_8 = arith.constant dense<0xFF800000> : vector<4x900xf32>
    %40 = vector.multi_reduction <maximumf>, %39, %cst_8 [1] : vector<4x10x900xf32> to vector<4x900xf32>
    %c0_9 = arith.constant 0 : index
    %c0_10 = arith.constant 0 : index
    %41 = vector.load %arg4[%c0_9, %c0_10] : memref<1x900xf32, #tpu.memory_space<vmem>>, vector<1x900xf32>
    %42 = vector.broadcast %41 : vector<1x900xf32> to vector<4x900xf32>
    %43 = arith.addf %40, %42 : vector<4x900xf32>
    %44 = arith.truncf %43 : vector<4x900xf32> to vector<4x900xbf16>
    %c0_11 = arith.constant 0 : index
    %c0_12 = arith.constant 0 : index
    %45 = vector.load %arg5[%c0_11, %c0_12] : memref<900x600xbf16, #tpu.memory_space<vmem>>, vector<900x600xbf16>
    %cst_13 = arith.constant dense<0.000000e+00> : vector<4x600xf32>
    %46 = tpu.matmul %44, %45, %cst_13 {dimension_numbers = #tpu.dot_dimension_numbers<[1], [0], [0], [1], [0, 0, 1, 1], [], []>} : vector<4x900xbf16>, vector<900x600xbf16>, vector<4x600xf32> -> vector<4x600xf32>
    %c0_14 = arith.constant 0 : index
    %c0_15 = arith.constant 0 : index
    %47 = vector.load %arg6[%c0_14, %c0_15] : memref<1x600xf32, #tpu.memory_space<vmem>>, vector<1x600xf32>
    %48 = vector.broadcast %47 : vector<1x600xf32> to vector<4x600xf32>
    %49 = arith.addf %46, %48 : vector<4x600xf32>
    %50 = math.tanh %49 : vector<4x600xf32>
    %c0_16 = arith.constant 0 : index
    %c0_17 = arith.constant 0 : index
    %51 = vector.load %arg12[%c0_16, %c0_17] : memref<4x600xf32, #tpu.memory_space<vmem>>, vector<4x600xf32>
    tpu.vector_store %arg12[%c0_16, %c0_17], %50 {strides = array<i32>} : memref<4x600xf32, #tpu.memory_space<vmem>>, vector<4x600xf32>,
    %52 = arith.truncf %50 : vector<4x600xf32> to vector<4x600xbf16>
    %c0_18 = arith.constant 0 : index
    %c0_19 = arith.constant 0 : index
    %53 = vector.load %arg7[%c0_18, %c0_19] : memref<600x600xbf16, #tpu.memory_space<vmem>>, vector<600x600xbf16>
    %cst_20 = arith.constant dense<0.000000e+00> : vector<4x600xf32>
    %54 = tpu.matmul %52, %53, %cst_20 {dimension_numbers = #tpu.dot_dimension_numbers<[1], [0], [0], [1], [0, 0, 1, 1], [], []>} : vector<4x600xbf16>, vector<600x600xbf16>, vector<4x600xf32> -> vector<4x600xf32>
    %c0_21 = arith.constant 0 : index
    %c0_22 = arith.constant 0 : index
    %55 = memref.load %arg0[%c0_21, %c0_22] : memref<1x1xf32, #tpu.memory_space<smem>>
    %56 = vector.extract_strided_slice %54 {offsets = [0, 0], sizes = [2, 600], strides = [1, 1]} : vector<4x600xf32> to vector<2x600xf32>
    %57 = vector.broadcast %55 : f32 to vector<2x600xf32>
    %58 = arith.mulf %57, %56 : vector<2x600xf32>
    %cst_23 = arith.constant 1.000000e+00 : f32
    %59 = arith.subf %cst_23, %55 : f32
    %60 = vector.extract_strided_slice %54 {offsets = [2, 0], sizes = [2, 600], strides = [1, 1]} : vector<4x600xf32> to vector<2x600xf32>
    %61 = vector.broadcast %59 : f32 to vector<2x600xf32>
    %62 = arith.mulf %61, %60 : vector<2x600xf32>
    %63 = arith.addf %58, %62 : vector<2x600xf32>
    %c0_24 = arith.constant 0 : index
    %c0_25 = arith.constant 0 : index
    %64 = vector.load %arg8[%c0_24, %c0_25] : memref<1x600xf32, #tpu.memory_space<vmem>>, vector<1x600xf32>
    %65 = vector.broadcast %64 : vector<1x600xf32> to vector<2x600xf32>
    %66 = arith.addf %63, %65 : vector<2x600xf32>
    %cst_26 = arith.constant 0.000000e+00 : f32
    %67 = vector.broadcast %cst_26 : f32 to vector<2x600xf32>
    %68 = arith.maximumf %66, %67 : vector<2x600xf32>
    %69 = arith.truncf %68 : vector<2x600xf32> to vector<2x600xbf16>
    %c0_27 = arith.constant 0 : index
    %c0_28 = arith.constant 0 : index
    %70 = vector.load %arg9[%c0_27, %c0_28] : memref<600x128xbf16, #tpu.memory_space<vmem>>, vector<600x128xbf16>
    %cst_29 = arith.constant dense<0.000000e+00> : vector<2x128xf32>
    %71 = tpu.matmul %69, %70, %cst_29 {dimension_numbers = #tpu.dot_dimension_numbers<[1], [0], [0], [1], [0, 0, 1, 1], [], []>} : vector<2x600xbf16>, vector<600x128xbf16>, vector<2x128xf32> -> vector<2x128xf32>
    %c0_30 = arith.constant 0 : index
    %c0_31 = arith.constant 0 : index
    %72 = vector.load %arg10[%c0_30, %c0_31] : memref<1x128xf32, #tpu.memory_space<vmem>>, vector<1x128xf32>
    %73 = vector.broadcast %72 : vector<1x128xf32> to vector<2x128xf32>
    %74 = arith.addf %71, %73 : vector<2x128xf32>
    %c0_32 = arith.constant 0 : index
    %c0_33 = arith.constant 0 : index
    %75 = vector.load %arg11[%c0_32, %c0_33] : memref<2x128xf32, #tpu.memory_space<vmem>>, vector<2x128xf32>
    tpu.vector_store %arg11[%c0_32, %c0_33], %74 {strides = array<i32>} : memref<2x128xf32, #tpu.memory_space<vmem>>, vector<2x128xf32>,
    return
  }
}

</mosaic_0001>

<llo_original>
// kernel: _forward_impl.1
$region0: #{_forward_impl.1}
  #allocation0 [shape = 'u32[]', space=smem, size = 0x4, offset = 0x4, fixed_abs, tag = 'smem constant byte address 0x4 - core index']
  #allocation1 [shape = 'u32[144,128]{1,0:T(1,128)}', space=vmem, size = 0x12000, scoped, tag = 'internal scratch']
  #allocation2 [shape = 'f32[1,1]{1,0:T(1,128)S(6)}', space=smem, size = 0x200, scoped, tag = 'scoped memory for _forward_impl.1']
  %s0 = inlined_call_operand.<no memory space> [shape: f32[1,1], index: 0, kind: input, shape index: {}]
  %s1 = inlined_call_operand.vmem [shape: s32[4,12], index: 1, kind: input, shape index: {}]
  %s2 = inlined_call_operand.vmem [shape: bf16[50,32], index: 2, kind: input, shape index: {}]
  %s3 = inlined_call_operand.hbm [shape: bf16[96,900], index: 3, kind: input, shape index: {}]
  %s4 = inlined_call_operand.hbm [shape: f32[1,900], index: 4, kind: input, shape index: {}]
  %s5 = inlined_call_operand.hbm [shape: bf16[900,600], index: 5, kind: input, shape index: {}]
  %s6 = inlined_call_operand.hbm [shape: f32[1,600], index: 6, kind: input, shape index: {}]
  %s7 = inlined_call_operand.hbm [shape: bf16[600,600], index: 7, kind: input, shape index: {}]
  %s8 = inlined_call_operand.hbm [shape: f32[1,600], index: 8, kind: input, shape index: {}]
  %s9 = inlined_call_operand.hbm [shape: bf16[600,128], index: 9, kind: input, shape index: {}]
  %s10 = inlined_call_operand.hbm [shape: f32[1,128], index: 10, kind: input, shape index: {}]
  %s11 = inlined_call_operand.hbm [shape: f32[2,128], index: 11, kind: output, shape index: {0}]
  %s12 = inlined_call_operand.vmem [shape: f32[4,600], index: 12, kind: output, shape index: {1}]
  %13 = xla_tuple %s11, %s12
  %s14 = sld [smem:[#allocation0]]
  $region94: #{_forward_impl.1} parent=0
    _
  %s16 = ssub.s32 1, %s14
  %s17 = scalar_select 0, %s16, %s14
  %18 = sst [smem:[#allocation2]] %s0
  $region1: #{_forward_impl.1} parent=0
    #allocation3 [shape = 'u8[196608]{0}', space=vmem, size = 0x30000, scoped, tag = 'input window, operand 3, single buffered']
    #allocation4 [shape = 's32[1]{0}', space=sflag, size = 0x4, scoped, tag = 'scoped memory for _forward_impl.1']
    #allocation5 [shape = 's32[1]{0}', space=sflag, size = 0x4, scoped, tag = 'scoped memory for _forward_impl.1']
    #allocation6 [shape = 'u8[4096]{0}', space=vmem, size = 0x1000, scoped, tag = 'input window, operand 4, single buffered']
    #allocation7 [shape = 's32[1]{0}', space=sflag, size = 0x4, scoped, tag = 'scoped memory for _forward_impl.1']
    #allocation8 [shape = 'u8[1157120]{0}', space=vmem, size = 0x11a800, scoped, tag = 'input window, operand 5, single buffered']
    #allocation9 [shape = 'u8[2560]{0}', space=vmem, size = 0xc00, scoped, tag = 'input window, operand 6, single buffered']
    #allocation10 [shape = 's32[1]{0}', space=sflag, size = 0x4, scoped, tag = 'scoped memory for _forward_impl.1']
    #allocation11 [shape = 'u8[768000]{0}', space=vmem, size = 0xbb800, scoped, tag = 'input window, operand 7, single buffered']
    #allocation12 [shape = 'u8[2560]{0}', space=vmem, size = 0xc00, scoped, tag = 'input window, operand 8, single buffered']
    #allocation13 [shape = 's32[1]{0}', space=sflag, size = 0x4, scoped, tag = 'scoped memory for _forward_impl.1']
    #allocation14 [shape = 'u8[153600]{0}', space=vmem, size = 0x25800, scoped, tag = 'input window, operand 9, single buffered']
    #allocation15 [shape = 'u8[512]{0}', space=vmem, size = 0x400, scoped, tag = 'input window, operand 10, single buffered']
    #allocation16 [shape = 's32[1]{0}', space=sflag, size = 0x4, scoped, tag = 'scoped memory for _forward_impl.1']
    #allocation17 [shape = 'u8[1024]{0}', space=vmem, size = 0x400, scoped, tag = 'output window, operand 0, single buffered']
    %19 = vsyncpa [#allocation4], 0
    %20 = vsyncpa [#allocation7], 0
    %21 = vsyncpa [#allocation10], 0
    %22 = vsyncpa [#allocation13], 0
    %23 = vsyncpa [#allocation16], 0
    %24 = vsyncpa [#allocation5], 0
    // Predicated region
    $region2: #{_forward_impl.1} parent=1 // pred_check
      _
    $region3: #{_forward_impl.1} parent=1 // pred_check_branch
      %26 = sbr.rel (0) target = $region5
    $region4: #{_forward_impl.1} parent=1 // pred_region
      _
    $region5: #{_forward_impl.1} parent=1 // pred_fallthru
      _
    // Predicated region
    $region6: #{_forward_impl.1} parent=1 // pred_check
      _
    $region7: #{_forward_impl.1} parent=1 // pred_check_branch
      %28 = sbr.rel (0) target = $region9
    $region8: #{_forward_impl.1} parent=1 // pred_region
      _
    $region9: #{_forward_impl.1} parent=1 // pred_fallthru
      _
    // Predicated region
    $region10: #{_forward_impl.1} parent=1 // pred_check
      _
    $region11: #{_forward_impl.1} parent=1 // pred_check_branch
      %30 = sbr.rel (0) target = $region13
    $region12: #{_forward_impl.1} parent=1 // pred_region
      _
    $region13: #{_forward_impl.1} parent=1 // pred_fallthru
      _
    // Predicated region
    $region14: #{_forward_impl.1} parent=1 // pred_check
      _
    $region15: #{_forward_impl.1} parent=1 // pred_check_branch
      %32 = sbr.rel (0) target = $region17
    $region16: #{_forward_impl.1} parent=1 // pred_region
      %s34 = ssub.s32 6144, 6144
      %35 = vsyncadd [#allocation4], %s34
      %s36 = sshll.u32 [#allocation3], 4
      %s37 = int_to_ptr.vmem [resolvable:$true] %s36
      %42 = dma.hbm_to_vmem [thread:$0]  %s3, 6144, %s37, [#allocation4], 512, 512, 32
    $region17: #{_forward_impl.1} parent=1 // pred_fallthru
      _
    // Predicated region
    $region18: #{_forward_impl.1} parent=1 // pred_check
      _
    $region19: #{_forward_impl.1} parent=1 // pred_check_branch
      %44 = sbr.rel (0) target = $region21
    $region20: #{_forward_impl.1} parent=1 // pred_region
      %s46 = ssub.s32 128, 128
      %47 = vsyncadd [#allocation7], %s46
      %s49 = sshll.u32 [#allocation6], 4
      %s50 = int_to_ptr.vmem [resolvable:$true] %s49
      %52 = dma.hbm_to_vmem [thread:$0]  %s4, 128, %s50, [#allocation7]
    $region21: #{_forward_impl.1} parent=1 // pred_fallthru
      _
    // Predicated region
    $region22: #{_forward_impl.1} parent=1 // pred_check
      _
    $region23: #{_forward_impl.1} parent=1 // pred_check_branch
      %54 = sbr.rel (0) target = $region25
    $region24: #{_forward_impl.1} parent=1 // pred_region
      %s56 = ssub.s32 36160, 36160
      %57 = vsyncadd [#allocation7], %s56
      %s58 = sshll.u32 [#allocation8], 4
      %s59 = int_to_ptr.vmem [resolvable:$true] %s58
      %64 = dma.hbm_to_vmem [thread:$0]  %s5, 36160, %s59, [#allocation7], 320, 320, 20
    $region25: #{_forward_impl.1} parent=1 // pred_fallthru
      _
    // Predicated region
    $region26: #{_forward_impl.1} parent=1 // pred_check
      _
    $region27: #{_forward_impl.1} parent=1 // pred_check_branch
      %66 = sbr.rel (0) target = $region29
    $region28: #{_forward_impl.1} parent=1 // pred_region
      %s68 = ssub.s32 80, 80
      %69 = vsyncadd [#allocation10], %s68
      %s71 = sshll.u32 [#allocation9], 4
      %s72 = int_to_ptr.vmem [resolvable:$true] %s71
      %74 = dma.hbm_to_vmem [thread:$0]  %s6, 80, %s72, [#allocation10]
    $region29: #{_forward_impl.1} parent=1 // pred_fallthru
      _
    // Predicated region
    $region30: #{_forward_impl.1} parent=1 // pred_check
      _
    $region31: #{_forward_impl.1} parent=1 // pred_check_branch
      %76 = sbr.rel (0) target = $region33
    $region32: #{_forward_impl.1} parent=1 // pred_region
      %s78 = ssub.s32 24000, 24000
      %79 = vsyncadd [#allocation10], %s78
      %s80 = sshll.u32 [#allocation11], 4
      %s81 = int_to_ptr.vmem [resolvable:$true] %s80
      %86 = dma.hbm_to_vmem [thread:$0]  %s7, 24000, %s81, [#allocation10], 320, 320, 20
    $region33: #{_forward_impl.1} parent=1 // pred_fallthru
      _
    // Predicated region
    $region34: #{_forward_impl.1} parent=1 // pred_check
      _
    $region35: #{_forward_impl.1} parent=1 // pred_check_branch
      %88 = sbr.rel (0) target = $region37
    $region36: #{_forward_impl.1} parent=1 // pred_region
      %s90 = ssub.s32 80, 80
      %91 = vsyncadd [#allocation13], %s90
      %s93 = sshll.u32 [#allocation12], 4
      %s94 = int_to_ptr.vmem [resolvable:$true] %s93
      %96 = dma.hbm_to_vmem [thread:$0]  %s8, 80, %s94, [#allocation13]
    $region37: #{_forward_impl.1} parent=1 // pred_fallthru
      _
    // Predicated region
    $region38: #{_forward_impl.1} parent=1 // pred_check
      _
    $region39: #{_forward_impl.1} parent=1 // pred_check_branch
      %98 = sbr.rel (0) target = $region41
    $region40: #{_forward_impl.1} parent=1 // pred_region
      %s100 = ssub.s32 4800, 4800
      %101 = vsyncadd [#allocation13], %s100
      %s102 = sshll.u32 [#allocation14], 4
      %s103 = int_to_ptr.vmem [resolvable:$true] %s102
      %108 = dma.hbm_to_vmem [thread:$0]  %s9, 4800, %s103, [#allocation13], 64, 64, 4
    $region41: #{_forward_impl.1} parent=1 // pred_fallthru
      _
    // Predicated region
    $region42: #{_forward_impl.1} parent=1 // pred_check
      _
    $region43: #{_forward_impl.1} parent=1 // pred_check_branch
      %110 = sbr.rel (0) target = $region45
    $region44: #{_forward_impl.1} parent=1 // pred_region
      %s112 = ssub.s32 16, 16
      %113 = vsyncadd [#allocation16], %s112
      %s115 = sshll.u32 [#allocation15], 4
      %s116 = int_to_ptr.vmem [resolvable:$true] %s115
      %118 = dma.hbm_to_vmem [thread:$0]  %s10, 16, %s116, [#allocation16]
    $region45: #{_forward_impl.1} parent=1 // pred_fallthru
      _
    // Predicated region
    $region46: #{_forward_impl.1} parent=1 // pred_check
      _
    $region47: #{_forward_impl.1} parent=1 // pred_check_branch
      %120 = sbr.rel (0) target = $region49
    $region48: #{_forward_impl.1} parent=1 // pred_region
      %121 = dma.done [#allocation4], 6144
    $region49: #{_forward_impl.1} parent=1 // pred_fallthru
      _
    // Predicated region
    $region50: #{_forward_impl.1} parent=1 // pred_check
      _
    $region51: #{_forward_impl.1} parent=1 // pred_check_branch
      %123 = sbr.rel (0) target = $region53
    $region52: #{_forward_impl.1} parent=1 // pred_region
      %124 = dma.done [#allocation7], 128
    $region53: #{_forward_impl.1} parent=1 // pred_fallthru
      _
    // Predicated region
    $region54: #{_forward_impl.1} parent=1 // pred_check
      _
    $region55: #{_forward_impl.1} parent=1 // pred_check_branch
      %126 = sbr.rel (0) target = $region57
    $region56: #{_forward_impl.1} parent=1 // pred_region
      %127 = dma.done [#allocation7], 36160
    $region57: #{_forward_impl.1} parent=1 // pred_fallthru
      _
    // Predicated region
    $region58: #{_forward_impl.1} parent=1 // pred_check
      _
    $region59: #{_forward_impl.1} parent=1 // pred_check_branch
      %129 = sbr.rel (0) target = $region61
    $region60: #{_forward_impl.1} parent=1 // pred_region
      %130 = dma.done [#allocation10], 80
    $region61: #{_forward_impl.1} parent=1 // pred_fallthru
      _
    // Predicated region
    $region62: #{_forward_impl.1} parent=1 // pred_check
      _
    $region63: #{_forward_impl.1} parent=1 // pred_check_branch
      %132 = sbr.rel (0) target = $region65
    $region64: #{_forward_impl.1} parent=1 // pred_region
      %133 = dma.done [#allocation10], 24000
    $region65: #{_forward_impl.1} parent=1 // pred_fallthru
      _
    // Predicated region
    $region66: #{_forward_impl.1} parent=1 // pred_check
      _
    $region67: #{_forward_impl.1} parent=1 // pred_check_branch
      %135 = sbr.rel (0) target = $region69
    $region68: #{_forward_impl.1} parent=1 // pred_region
      %136 = dma.done [#allocation13], 80
    $region69: #{_forward_impl.1} parent=1 // pred_fallthru
      _
    // Predicated region
    $region70: #{_forward_impl.1} parent=1 // pred_check
      _
    $region71: #{_forward_impl.1} parent=1 // pred_check_branch
      %138 = sbr.rel (0) target = $region73
    $region72: #{_forward_impl.1} parent=1 // pred_region
      %139 = dma.done [#allocation13], 4800
    $region73: #{_forward_impl.1} parent=1 // pred_fallthru
      _
    // Predicated region
    $region74: #{_forward_impl.1} parent=1 // pred_check
      _
    $region75: #{_forward_impl.1} parent=1 // pred_check_branch
      %141 = sbr.rel (0) target = $region77
    $region76: #{_forward_impl.1} parent=1 // pred_region
      %142 = dma.done [#allocation16], 16
    $region77: #{_forward_impl.1} parent=1 // pred_fallthru
      _
    %v144 = vld [vmem:[%s1] sm:$0xf]
    %v145 = vlaneseq
    %v146 = vand.u32 %v145, 127
    %v147 = vlaneseq
    %v148 = vshrl.u32 %v147, 7
    %v149 = vsub.s32 0, %v148
    %v150 = vrot.slane %v144, %v149
    %152 = vbcast.lane.b32.xlu0 %v150, 256
    %v153 = vpop.permute.xlu0 %152
    %s155 = sor.u32 256, 8
    %156 = vbcast.lane.b32.xlu0 %v150, %s155
    %v157 = vpop.permute.xlu0 %156
    %v158 = vlaneseq
    %v159 = vshrl.u32 %v158, 7
    %v160 = vsub.s32 1, %v159
    %v161 = vrot.slane %v144, %v160
    %163 = vbcast.lane.b32.xlu0 %v161, 256
    %v164 = vpop.permute.xlu0 %163
    %s166 = sor.u32 256, 8
    %167 = vbcast.lane.b32.xlu0 %v161, %s166
    %v168 = vpop.permute.xlu0 %167
    %v169 = vlaneseq
    %v170 = vshrl.u32 %v169, 7
    %v171 = vsub.s32 2, %v170
    %v172 = vrot.slane %v144, %v171
    %174 = vbcast.lane.b32.xlu0 %v172, 256
    %v175 = vpop.permute.xlu0 %174
    %s177 = sor.u32 256, 8
    %178 = vbcast.lane.b32.xlu0 %v172, %s177
    %v179 = vpop.permute.xlu0 %178
    %v180 = vlaneseq
    %v181 = vshrl.u32 %v180, 7
    %v182 = vsub.s32 3, %v181
    %v183 = vrot.slane %v144, %v182
    %185 = vbcast.lane.b32.xlu0 %v183, 256
    %v186 = vpop.permute.xlu0 %185
    %s188 = sor.u32 256, 8
    %189 = vbcast.lane.b32.xlu0 %v183, %s188
    %v190 = vpop.permute.xlu0 %189
    %vm191 = vcmp.eq.s32.totalorder %v153, %v146
    %vm192 = vcmp.eq.s32.totalorder %v157, %v146
    %vm193 = vcmp.eq.s32.totalorder %v164, %v146
    %vm194 = vcmp.eq.s32.totalorder %v168, %v146
    %vm195 = vcmp.eq.s32.totalorder %v175, %v146
    %vm196 = vcmp.eq.s32.totalorder %v179, %v146
    %vm197 = vcmp.eq.s32.totalorder %v186, %v146
    %vm198 = vcmp.eq.s32.totalorder %v190, %v146
    %v199 = vsel %vm191, 1, 0
    %v200 = vsel %vm192, 1, 0
    %v201 = vsel %vm193, 1, 0
    %v202 = vsel %vm194, 1, 0
    %v203 = vsel %vm195, 1, 0
    %v204 = vsel %vm196, 1, 0
    %v205 = vsel %vm197, 1, 0
    %v206 = vsel %vm198, 1, 0
    %v207 = vcvt.s32.f32 %v199
    %v208 = vcvt.s32.f32 %v200
    %v209 = vcvt.s32.f32 %v201
    %v210 = vcvt.s32.f32 %v202
    %v211 = vcvt.s32.f32 %v203
    %v212 = vcvt.s32.f32 %v204
    %v213 = vcvt.s32.f32 %v205
    %v214 = vcvt.s32.f32 %v206
    %v215 = vpack.c.bf16 %v208, %v207
    %v216 = vpack.c.bf16 %v210, %v209
    %v217 = vpack.c.bf16 %v212, %v211
    %v218 = vpack.c.bf16 %v214, %v213
    %v223 = vcombine.high %v215, %v215
    %v225 = vunpack.c.l.s4 1983009808
    %v226 = vunpack.c.0.s8 %v225
    %v227 = vlaneseq
    %v228 = vshrl.u32 %v227, 7
    %v229 = vsub.s32 %v226, %v228
    %v230 = vrot.slane %v215, %v229
    %v232 = vunpack.c.l.s4 1983009808
    %v233 = vunpack.c.0.s8 %v232
    %v234 = vlaneseq
    %v235 = vshrl.u32 %v234, 7
    %v236 = vsub.s32 %v233, %v235
    %v237 = vrot.slane %v223, %v236
    %v238 = vcombine.high %v230, %v230
    %v239 = vcombine.high %v216, %v216
    %v241 = vunpack.c.l.s4 1983009808
    %v242 = vunpack.c.0.s8 %v241
    %v243 = vlaneseq
    %v244 = vshrl.u32 %v243, 7
    %v245 = vsub.s32 %v242, %v244
    %v246 = vrot.slane %v216, %v245
    %v248 = vunpack.c.l.s4 1983009808
    %v249 = vunpack.c.0.s8 %v248
    %v250 = vlaneseq
    %v251 = vshrl.u32 %v250, 7
    %v252 = vsub.s32 %v249, %v251
    %v253 = vrot.slane %v239, %v252
    %v254 = vcombine.high %v246, %v246
    %v255 = vcombine.high %v217, %v217
    %v257 = vunpack.c.l.s4 1983009808
    %v258 = vunpack.c.0.s8 %v257
    %v259 = vlaneseq
    %v260 = vshrl.u32 %v259, 7
    %v261 = vsub.s32 %v258, %v260
    %v262 = vrot.slane %v217, %v261
    %v264 = vunpack.c.l.s4 1983009808
    %v265 = vunpack.c.0.s8 %v264
    %v266 = vlaneseq
    %v267 = vshrl.u32 %v266, 7
    %v268 = vsub.s32 %v265, %v267
    %v269 = vrot.slane %v255, %v268
    %v270 = vcombine.high %v262, %v262
    %v271 = vcombine.high %v218, %v218
    %v273 = vunpack.c.l.s4 1983009808
    %v274 = vunpack.c.0.s8 %v273
    %v275 = vlaneseq
    %v276 = vshrl.u32 %v275, 7
    %v277 = vsub.s32 %v274, %v276
    %v278 = vrot.slane %v218, %v277
    %v280 = vunpack.c.l.s4 1983009808
    %v281 = vunpack.c.0.s8 %v280
    %v282 = vlaneseq
    %v283 = vshrl.u32 %v282, 7
    %v284 = vsub.s32 %v281, %v283
    %v285 = vrot.slane %v271, %v284
    %v286 = vcombine.high %v278, %v278
    %v287 = vld [vmem:[%s2] sm:$0xf]
    %v288 = vld [vmem:[%s2 + $0x4] sm:$0xf]
    %v289 = vld [vmem:[%s2 + $0x8] sm:$0xf]
    %v290 = vld [vmem:[%s2 + $0xc] sm:$0xf]
    %v291 = vld [vmem:[%s2 + $0x10] sm:$0xf]
    %v292 = vld [vmem:[%s2 + $0x14] sm:$0xf]
    %v293 = vld [vmem:[%s2 + $0x18] sm:$0x1]
    %v294 = vcombine.low %v230, %v238
    %v295 = vcombine.low %v237, %v246
    %v297 = vunpack.c.l.s4 1983009808
    %v298 = vunpack.c.0.s8 %v297
    %v299 = vlaneseq
    %v300 = vshrl.u32 %v299, 7
    %v301 = vsub.s32 %v298, %v300
    %v302 = vrot.slane %v294, %v301
    %v304 = vunpack.c.l.s4 1983009808
    %v305 = vunpack.c.0.s8 %v304
    %v306 = vlaneseq
    %v307 = vshrl.u32 %v306, 7
    %v308 = vsub.s32 %v305, %v307
    %v309 = vrot.slane %v295, %v308
    %v310 = vcombine.low %v302, %v309
    %v311 = vcombine.low %v254, %v253
    %v312 = vcombine.low %v262, %v270
    %v314 = vunpack.c.l.s4 1983009808
    %v315 = vunpack.c.0.s8 %v314
    %v316 = vlaneseq
    %v317 = vshrl.u32 %v316, 7
    %v318 = vsub.s32 %v315, %v317
    %v319 = vrot.slane %v311, %v318
    %v321 = vunpack.c.l.s4 1983009808
    %v322 = vunpack.c.0.s8 %v321
    %v323 = vlaneseq
    %v324 = vshrl.u32 %v323, 7
    %v325 = vsub.s32 %v322, %v324
    %v326 = vrot.slane %v312, %v325
    %v327 = vcombine.low %v319, %v326
    %v328 = vcombine.low %v269, %v278
    %v329 = vcombine.low %v286, %v285
    %v331 = vunpack.c.l.s4 1983009808
    %v332 = vunpack.c.0.s8 %v331
    %v333 = vlaneseq
    %v334 = vshrl.u32 %v333, 7
    %v335 = vsub.s32 %v332, %v334
    %v336 = vrot.slane %v328, %v335
    %v338 = vunpack.c.l.s4 1983009808
    %v339 = vunpack.c.0.s8 %v338
    %v340 = vlaneseq
    %v341 = vshrl.u32 %v340, 7
    %v342 = vsub.s32 %v339, %v341
    %v343 = vrot.slane %v329, %v342
    %v344 = vcombine.low %v336, %v343
    %v352 = vunpack.c.l.b16 %v287
    %v353 = vunpack.c.l.b16 %v288
    %v354 = vunpack.c.l.b16 %v289
    %v355 = vunpack.c.l.b16 %v290
    %v356 = vunpack.c.l.b16 %v291
    %v357 = vunpack.c.l.b16 %v292
    %v358 = vunpack.c.l.b16 %v293
    %v359 = vpack.c.b16 %v353, %v352
    %v360 = vpack.c.b16 %v355, %v354
    %v361 = vpack.c.b16 %v357, %v356
    %v362 = vpack.c.b16 %v358, %v358
    %vm366 = vcmask 408576
    %v368 = vsel %vm366, %v310, 0
    %v371 = vsel %vm366, %v327, 0
    %v374 = vsel %vm366, %v344, 0
    %vm376 = vcmask 1040384
    %v378 = vsel %vm376, %v362, 0
    %380 = vmatprep.subr.bf16.mxu0 0
    %381 = vmatpush1.bf16.msra.mxu0 %v359
    %382 = vmatprep.subr.bf16.mxu0 0
    %383 = vmatpush1.bf16.msra.mxu0 %v360
    %384 = vmatprep.subr.bf16.mxu0 0
    %385 = vmatpush1.bf16.msra.mxu0 %v361
    %386 = vmatprep.subr.bf16.mxu0 0
    %387 = vmatpush1.bf16.msra.mxu0 %v378
    %388 = vmatprep.subr.bf16.mxu0 0
    %389 = vmatpush1.bf16.msra.mxu0 0
    %390 = vmatprep.subr.bf16.mxu0 0
    %391 = vmatpush1.bf16.msra.mxu0 0
    %392 = vmatprep.subr.bf16.mxu0 0
    %393 = vmatpush1.bf16.msra.mxu0 0
    %394 = vmatprep.subr.bf16.mxu0 0
    %395 = vmatpush1.bf16.msra.mxu0 0
    %396 = vmatprep.subr.bf16.mxu0 0
    %397 = vmatpush1.bf16.msra.mxu0 0
    %398 = vmatprep.subr.bf16.mxu0 0
    %399 = vmatpush1.bf16.msra.mxu0 0
    %400 = vmatprep.subr.bf16.mxu0 0
    %401 = vmatpush1.bf16.msra.mxu0 0
    %402 = vmatprep.subr.bf16.mxu0 0
    %403 = vmatpush1.bf16.msra.mxu0 0
    %404 = vmatprep.subr.bf16.mxu0 0
    %405 = vmatpush1.bf16.msra.mxu0 0
    %406 = vmatprep.subr.bf16.mxu0 0
    %407 = vmatpush1.bf16.msra.mxu0 0
    %408 = vmatprep.subr.bf16.mxu0 0
    %409 = vmatpush1.bf16.msra.mxu0 0
    %410 = vmatprep.subr.bf16.mxu0 0
    %411 = vmatpush1.bf16.msra.mxu0 0
    %412 = vmatprep.mubr.bf16.mxu0 0
    %413 = vmatmul.mubr.bf16.gmra.mrb[0].mxu0 %v368
    %v414 = vpop.f32.mrb[0].mxu0
    %v415 = vadd.f32 0.0, %v414
    %v416 = vpop.f32.mrb[0].mxu0
    %v417 = vpop.f32.mrb[0].mxu0
    %v418 = vadd.f32 0.0, %v417
    %v419 = vpop.f32.mrb[0].mxu0
    %420 = vmatprep.mubr.bf16.mxu0 0
    %421 = vmatmul.mubr.bf16.gmra.mrb[0].mxu0 %v371
    %v422 = vpop.f32.mrb[0].mxu0
    %v423 = vadd.f32 0.0, %v422
    %v424 = vpop.f32.mrb[0].mxu0
    %v425 = vpop.f32.mrb[0].mxu0
    %v426 = vadd.f32 0.0, %v425
    %v427 = vpop.f32.mrb[0].mxu0
    %428 = vmatprep.mubr.bf16.mxu0 0
    %429 = vmatmul.mubr.bf16.gmra.mrb[0].mxu0 %v374
    %v430 = vpop.f32.mrb[0].mxu0
    %v431 = vadd.f32 0.0, %v430
    %v432 = vpop.f32.mrb[0].mxu0
    %v433 = vpop.f32.mrb[0].mxu0
    %v434 = vadd.f32 0.0, %v433
    %v435 = vpop.f32.mrb[0].mxu0
    %436 = vdwg.mxu0
    %v437 = vpack.c.bf16 %v418, %v415
    %v438 = vpack.c.bf16 %v426, %v423
    %v439 = vpack.c.bf16 %v434, %v431
    %v443 = vcombine.high %v437, %v437
    %v445 = vunpack.c.l.s4 1983009808
    %v446 = vunpack.c.0.s8 %v445
    %v447 = vlaneseq
    %v448 = vshrl.u32 %v447, 7
    %v449 = vsub.s32 %v446, %v448
    %v450 = vrot.slane %v437, %v449
    %v452 = vunpack.c.l.s4 1983009808
    %v453 = vunpack.c.0.s8 %v452
    %v454 = vlaneseq
    %v455 = vshrl.u32 %v454, 7
    %v456 = vsub.s32 %v453, %v455
    %v457 = vrot.slane %v443, %v456
    %v458 = vcombine.high %v450, %v450
    %v459 = vcombine.high %v457, %v457
    %v460 = vcombine.high %v438, %v438
    %v462 = vunpack.c.l.s4 1983009808
    %v463 = vunpack.c.0.s8 %v462
    %v464 = vlaneseq
    %v465 = vshrl.u32 %v464, 7
    %v466 = vsub.s32 %v463, %v465
    %v467 = vrot.slane %v438, %v466
    %v469 = vunpack.c.l.s4 1983009808
    %v470 = vunpack.c.0.s8 %v469
    %v471 = vlaneseq
    %v472 = vshrl.u32 %v471, 7
    %v473 = vsub.s32 %v470, %v472
    %v474 = vrot.slane %v460, %v473
    %v475 = vcombine.high %v467, %v467
    %v476 = vcombine.high %v474, %v474
    %v477 = vcombine.high %v439, %v439
    %v479 = vunpack.c.l.s4 1983009808
    %v480 = vunpack.c.0.s8 %v479
    %v481 = vlaneseq
    %v482 = vshrl.u32 %v481, 7
    %v483 = vsub.s32 %v480, %v482
    %v484 = vrot.slane %v439, %v483
    %v486 = vunpack.c.l.s4 1983009808
    %v487 = vunpack.c.0.s8 %v486
    %v488 = vlaneseq
    %v489 = vshrl.u32 %v488, 7
    %v490 = vsub.s32 %v487, %v489
    %v491 = vrot.slane %v477, %v490
    %v492 = vcombine.high %v484, %v484
    %v493 = vcombine.high %v491, %v491
    %v494 = vcombine.low %v450, %v458
    %v496 = vunpack.c.l.s4 1983009808
    %v497 = vunpack.c.0.s8 %v496
    %v498 = vlaneseq
    %v499 = vshrl.u32 %v498, 7
    %v500 = vsub.s32 %v497, %v499
    %v501 = vrot.slane %v494, %v500
    %v503 = vunpack.c.l.s4 1983009808
    %v504 = vunpack.c.0.s8 %v503
    %v505 = vlaneseq
    %v506 = vshrl.u32 %v505, 7
    %v507 = vsub.s32 %v504, %v506
    %v508 = vrot.slane %v457, %v507
    %v509 = vcombine.low %v501, %v508
    %v510 = vcombine.low %v459, %v467
    %v512 = vunpack.c.l.s4 1983009808
    %v513 = vunpack.c.0.s8 %v512
    %v514 = vlaneseq
    %v515 = vshrl.u32 %v514, 7
    %v516 = vsub.s32 %v513, %v515
    %v517 = vrot.slane %v510, %v516
    %v519 = vunpack.c.l.s4 1983009808
    %v520 = vunpack.c.0.s8 %v519
    %v521 = vlaneseq
    %v522 = vshrl.u32 %v521, 7
    %v523 = vsub.s32 %v520, %v522
    %v524 = vrot.slane %v475, %v523
    %v525 = vcombine.low %v517, %v524
    %v526 = vcombine.low %v474, %v476
    %v528 = vunpack.c.l.s4 1983009808
    %v529 = vunpack.c.0.s8 %v528
    %v530 = vlaneseq
    %v531 = vshrl.u32 %v530, 7
    %v532 = vsub.s32 %v529, %v531
    %v533 = vrot.slane %v526, %v532
    %v535 = vunpack.c.l.s4 1983009808
    %v536 = vunpack.c.0.s8 %v535
    %v537 = vlaneseq
    %v538 = vshrl.u32 %v537, 7
    %v539 = vsub.s32 %v536, %v538
    %v540 = vrot.slane %v484, %v539
    %v541 = vcombine.low %v533, %v540
    %v542 = vcombine.low %v492, %v491
    %v544 = vunpack.c.l.s4 1983009808
    %v545 = vunpack.c.0.s8 %v544
    %v546 = vlaneseq
    %v547 = vshrl.u32 %v546, 7
    %v548 = vsub.s32 %v545, %v547
    %v549 = vrot.slane %v542, %v548
    %v551 = vunpack.c.l.s4 1983009808
    %v552 = vunpack.c.0.s8 %v551
    %v553 = vlaneseq
    %v554 = vshrl.u32 %v553, 7
    %v555 = vsub.s32 %v552, %v554
    %v556 = vrot.slane %v493, %v555
    %v557 = vcombine.low %v549, %v556
    %v559 = vshrl.u32 %v509, 16
    %v561 = vshll.u32 %v509, 16
    %v563 = vrot.slane %v561, 1
    %v564 = vor.u32 %v559, %v563
    %v566 = vshrl.u32 %v525, 16
    %v568 = vshll.u32 %v525, 16
    %v570 = vrot.slane %v568, 1
    %v571 = vor.u32 %v566, %v570
    %v573 = vshrl.u32 %v541, 16
    %v575 = vshll.u32 %v541, 16
    %v577 = vrot.slane %v575, 1
    %v578 = vor.u32 %v573, %v577
    %v580 = vshrl.u32 %v557, 16
    %v582 = vshll.u32 %v557, 16
    %v584 = vrot.slane %v582, 1
    %v585 = vor.u32 %v580, %v584
    %586 = vrot.lane.b32.xlu0 %v564, 32
    %v587 = vpop.permute.xlu0 %586
    %588 = vrot.lane.b32.xlu0 %v571, 32
    %v589 = vpop.permute.xlu0 %588
    %590 = vrot.lane.b32.xlu0 %v578, 32
    %v591 = vpop.permute.xlu0 %590
    %592 = vrot.lane.b32.xlu0 %v585, 32
    %v593 = vpop.permute.xlu0 %592
    %v594 = vrot.slane %v509, 1
    %v595 = vrot.slane %v525, 1
    %v596 = vrot.slane %v541, 1
    %v597 = vrot.slane %v557, 1
    %598 = vrot.lane.b32.xlu0 %v594, 64
    %v599 = vpop.permute.xlu0 %598
    %600 = vrot.lane.b32.xlu0 %v595, 64
    %v601 = vpop.permute.xlu0 %600
    %602 = vrot.lane.b32.xlu0 %v596, 64
    %v603 = vpop.permute.xlu0 %602
    %604 = vrot.lane.b32.xlu0 %v597, 64
    %v605 = vpop.permute.xlu0 %604
    %vm606 = vcmask 261120
    %v608 = vsel %vm606, %v509, %v587
    %v610 = vsel %vm606, %v525, %v589
    %v612 = vsel %vm606, %v541, %v591
    %v614 = vsel %vm606, %v557, %v593
    %vm615 = vcmask 523264
    %v617 = vsel %vm615, %v608, %v599
    %v619 = vsel %vm615, %v610, %v601
    %v621 = vsel %vm615, %v612, %v603
    %v623 = vsel %vm615, %v614, %v605
    %v628 = vcombine.high %v617, %v617
    %v630 = vunpack.c.l.s4 1966171168
    %v631 = vunpack.c.0.s8 %v630
    %v632 = vlaneseq
    %v633 = vshrl.u32 %v632, 7
    %v634 = vsub.s32 %v631, %v633
    %v635 = vrot.slane %v617, %v634
    %v637 = vunpack.c.l.s4 1966171168
    %v638 = vunpack.c.0.s8 %v637
    %v639 = vlaneseq
    %v640 = vshrl.u32 %v639, 7
    %v641 = vsub.s32 %v638, %v640
    %v642 = vrot.slane %v628, %v641
    %v643 = vcombine.high %v635, %v635
    %v645 = vunpack.c.l.s4 1966171168
    %v646 = vunpack.c.0.s8 %v645
    %v647 = vlaneseq
    %v648 = vshrl.u32 %v647, 7
    %v649 = vsub.s32 %v646, %v648
    %v650 = vrot.slane %v635, %v649
    %v652 = vunpack.c.l.s4 1966171168
    %v653 = vunpack.c.0.s8 %v652
    %v654 = vlaneseq
    %v655 = vshrl.u32 %v654, 7
    %v656 = vsub.s32 %v653, %v655
    %v657 = vrot.slane %v642, %v656
    %v659 = vunpack.c.l.s4 1966171168
    %v660 = vunpack.c.0.s8 %v659
    %v661 = vlaneseq
    %v662 = vshrl.u32 %v661, 7
    %v663 = vsub.s32 %v660, %v662
    %v664 = vrot.slane %v643, %v663
    %v665 = vcombine.high %v650, %v650
    %v666 = vcombine.high %v664, %v664
    %v667 = vcombine.high %v619, %v619
    %v669 = vunpack.c.l.s4 1966171168
    %v670 = vunpack.c.0.s8 %v669
    %v671 = vlaneseq
    %v672 = vshrl.u32 %v671, 7
    %v673 = vsub.s32 %v670, %v672
    %v674 = vrot.slane %v619, %v673
    %v676 = vunpack.c.l.s4 1966171168
    %v677 = vunpack.c.0.s8 %v676
    %v678 = vlaneseq
    %v679 = vshrl.u32 %v678, 7
    %v680 = vsub.s32 %v677, %v679
    %v681 = vrot.slane %v667, %v680
    %v682 = vcombine.high %v674, %v674
    %v684 = vunpack.c.l.s4 1966171168
    %v685 = vunpack.c.0.s8 %v684
    %v686 = vlaneseq
    %v687 = vshrl.u32 %v686, 7
    %v688 = vsub.s32 %v685, %v687
    %v689 = vrot.slane %v674, %v688
    %v691 = vunpack.c.l.s4 1966171168
    %v692 = vunpack.c.0.s8 %v691
    %v693 = vlaneseq
    %v694 = vshrl.u32 %v693, 7
    %v695 = vsub.s32 %v692, %v694
    %v696 = vrot.slane %v681, %v695
    %v698 = vunpack.c.l.s4 1966171168
    %v699 = vunpack.c.0.s8 %v698
    %v700 = vlaneseq
    %v701 = vshrl.u32 %v700, 7
    %v702 = vsub.s32 %v699, %v701
    %v703 = vrot.slane %v682, %v702
    %v704 = vcombine.high %v689, %v689
    %v705 = vcombine.high %v703, %v703
    %v706 = vcombine.high %v621, %v621
    %v708 = vunpack.c.l.s4 1966171168
    %v709 = vunpack.c.0.s8 %v708
    %v710 = vlaneseq
    %v711 = vshrl.u32 %v710, 7
    %v712 = vsub.s32 %v709, %v711
    %v713 = vrot.slane %v621, %v712
    %v715 = vunpack.c.l.s4 1966171168
    %v716 = vunpack.c.0.s8 %v715
    %v717 = vlaneseq
    %v718 = vshrl.u32 %v717, 7
    %v719 = vsub.s32 %v716, %v718
    %v720 = vrot.slane %v706, %v719
    %v721 = vcombine.high %v713, %v713
    %v723 = vunpack.c.l.s4 1966171168
    %v724 = vunpack.c.0.s8 %v723
    %v725 = vlaneseq
    %v726 = vshrl.u32 %v725, 7
    %v727 = vsub.s32 %v724, %v726
    %v728 = vrot.slane %v713, %v727
    %v730 = vunpack.c.l.s4 1966171168
    %v731 = vunpack.c.0.s8 %v730
    %v732 = vlaneseq
    %v733 = vshrl.u32 %v732, 7
    %v734 = vsub.s32 %v731, %v733
    %v735 = vrot.slane %v720, %v734
    %v737 = vunpack.c.l.s4 1966171168
    %v738 = vunpack.c.0.s8 %v737
    %v739 = vlaneseq
    %v740 = vshrl.u32 %v739, 7
    %v741 = vsub.s32 %v738, %v740
    %v742 = vrot.slane %v721, %v741
    %v743 = vcombine.high %v728, %v728
    %v744 = vcombine.high %v742, %v742
    %v745 = vcombine.high %v623, %v623
    %v747 = vunpack.c.l.s4 1966171168
    %v748 = vunpack.c.0.s8 %v747
    %v749 = vlaneseq
    %v750 = vshrl.u32 %v749, 7
    %v751 = vsub.s32 %v748, %v750
    %v752 = vrot.slane %v623, %v751
    %v754 = vunpack.c.l.s4 1966171168
    %v755 = vunpack.c.0.s8 %v754
    %v756 = vlaneseq
    %v757 = vshrl.u32 %v756, 7
    %v758 = vsub.s32 %v755, %v757
    %v759 = vrot.slane %v745, %v758
    %v760 = vcombine.high %v752, %v752
    %v762 = vunpack.c.l.s4 1966171168
    %v763 = vunpack.c.0.s8 %v762
    %v764 = vlaneseq
    %v765 = vshrl.u32 %v764, 7
    %v766 = vsub.s32 %v763, %v765
    %v767 = vrot.slane %v752, %v766
    %v769 = vunpack.c.l.s4 1966171168
    %v770 = vunpack.c.0.s8 %v769
    %v771 = vlaneseq
    %v772 = vshrl.u32 %v771, 7
    %v773 = vsub.s32 %v770, %v772
    %v774 = vrot.slane %v759, %v773
    %v776 = vunpack.c.l.s4 1966171168
    %v777 = vunpack.c.0.s8 %v776
    %v778 = vlaneseq
    %v779 = vshrl.u32 %v778, 7
    %v780 = vsub.s32 %v777, %v779
    %v781 = vrot.slane %v760, %v780
    %v782 = vcombine.high %v767, %v767
    %v783 = vcombine.high %v781, %v781
    %v784 = vld [vmem:[#allocation3] sm:$0xff]
    %v785 = vld [vmem:[#allocation3 + $0x8] sm:$0xff]
    %v786 = vld [vmem:[#allocation3 + $0x10] sm:$0xff]
    %v787 = vld [vmem:[#allocation3 + $0x18] sm:$0xff]
    %v788 = vld [vmem:[#allocation3 + $0x20] sm:$0xff]
    %v789 = vld [vmem:[#allocation3 + $0x28] sm:$0xff]
    %v790 = vld [vmem:[#allocation3 + $0x30] sm:$0xff]
    %v791 = vld [vmem:[#allocation3 + $0x38] sm:$0xff]
    %v792 = vld [vmem:[#allocation3 + $0x40] sm:$0xff]
    %v793 = vld [vmem:[#allocation3 + $0x48] sm:$0xff]
    %v794 = vld [vmem:[#allocation3 + $0x50] sm:$0xff]
    %v795 = vld [vmem:[#allocation3 + $0x58] sm:$0xff]
    %v796 = vld [vmem:[#allocation3 + $0x60] sm:$0xff]
    %v797 = vld [vmem:[#allocation3 + $0x68] sm:$0xff]
    %v798 = vld [vmem:[#allocation3 + $0x70] sm:$0xff]
    %v799 = vld [vmem:[#allocation3 + $0x78] sm:$0xff]
    %v800 = vld [vmem:[#allocation3 + $0x80] sm:$0xff]
    %v801 = vld [vmem:[#allocation3 + $0x88] sm:$0xff]
    %v802 = vld [vmem:[#allocation3 + $0x90] sm:$0xff]
    %v803 = vld [vmem:[#allocation3 + $0x98] sm:$0xff]
    %v804 = vld [vmem:[#allocation3 + $0xa0] sm:$0xff]
    %v805 = vld [vmem:[#allocation3 + $0xa8] sm:$0xff]
    %v806 = vld [vmem:[#allocation3 + $0xb0] sm:$0xff]
    %v807 = vld [vmem:[#allocation3 + $0xb8] sm:$0xff]
    %v808 = vld [vmem:[#allocation3 + $0xc0] sm:$0xff]
    %v809 = vld [vmem:[#allocation3 + $0xc8] sm:$0xff]
    %v810 = vld [vmem:[#allocation3 + $0xd0] sm:$0xff]
    %v811 = vld [vmem:[#allocation3 + $0xd8] sm:$0xff]
    %v812 = vld [vmem:[#allocation3 + $0xe0] sm:$0xff]
    %v813 = vld [vmem:[#allocation3 + $0xe8] sm:$0xff]
    %v814 = vld [vmem:[#allocation3 + $0xf0] sm:$0xff]
    %v815 = vld [vmem:[#allocation3 + $0xf8] sm:$0xff]
    %v816 = vld [vmem:[#allocation3 + $0x100] sm:$0xff]
    %v817 = vld [vmem:[#allocation3 + $0x108] sm:$0xff]
    %v818 = vld [vmem:[#allocation3 + $0x110] sm:$0xff]
    %v819 = vld [vmem:[#allocation3 + $0x118] sm:$0xff]
    %v820 = vld [vmem:[#allocation3 + $0x120] sm:$0xff]
    %v821 = vld [vmem:[#allocation3 + $0x128] sm:$0xff]
    %v822 = vld [vmem:[#allocation3 + $0x130] sm:$0xff]
    %v823 = vld [vmem:[#allocation3 + $0x138] sm:$0xff]
    %v824 = vld [vmem:[#allocation3 + $0x140] sm:$0xff]
    %v825 = vld [vmem:[#allocation3 + $0x148] sm:$0xff]
    %v826 = vld [vmem:[#allocation3 + $0x150] sm:$0xff]
    %v827 = vld [vmem:[#allocation3 + $0x158] sm:$0xff]
    %v828 = vld [vmem:[#allocation3 + $0x160] sm:$0xff]
    %v829 = vld [vmem:[#allocation3 + $0x168] sm:$0xff]
    %v830 = vld [vmem:[#allocation3 + $0x170] sm:$0xff]
    %v831 = vld [vmem:[#allocation3 + $0x178] sm:$0xff]
    %v832 = vcombine.low %v650, %v664
    %v833 = vcombine.low %v665, %v666
    %v834 = vcombine.low %v657, %v689
    %v835 = vcombine.low %v703, %v704
    %v837 = vunpack.c.l.s4 1966171168
    %v838 = vunpack.c.0.s8 %v837
    %v839 = vlaneseq
    %v840 = vshrl.u32 %v839, 7
    %v841 = vsub.s32 %v838, %v840
    %v842 = vrot.slane %v832, %v841
    %v844 = vunpack.c.l.s4 1966171168
    %v845 = vunpack.c.0.s8 %v844
    %v846 = vlaneseq
    %v847 = vshrl.u32 %v846, 7
    %v848 = vsub.s32 %v845, %v847
    %v849 = vrot.slane %v833, %v848
    %v851 = vunpack.c.l.s4 1966171168
    %v852 = vunpack.c.0.s8 %v851
    %v853 = vlaneseq
    %v854 = vshrl.u32 %v853, 7
    %v855 = vsub.s32 %v852, %v854
    %v856 = vrot.slane %v834, %v855
    %v858 = vunpack.c.l.s4 1966171168
    %v859 = vunpack.c.0.s8 %v858
    %v860 = vlaneseq
    %v861 = vshrl.u32 %v860, 7
    %v862 = vsub.s32 %v859, %v861
    %v863 = vrot.slane %v835, %v862
    %v864 = vcombine.low %v842, %v849
    %v865 = vcombine.low %v856, %v863
    %v867 = vunpack.c.l.s4 1966171168
    %v868 = vunpack.c.0.s8 %v867
    %v869 = vlaneseq
    %v870 = vshrl.u32 %v869, 7
    %v871 = vsub.s32 %v868, %v870
    %v872 = vrot.slane %v864, %v871
    %v874 = vunpack.c.l.s4 1966171168
    %v875 = vunpack.c.0.s8 %v874
    %v876 = vlaneseq
    %v877 = vshrl.u32 %v876, 7
    %v878 = vsub.s32 %v875, %v877
    %v879 = vrot.slane %v865, %v878
    %v880 = vcombine.low %v872, %v879
    %v881 = vcombine.low %v705, %v696
    %v882 = vcombine.low %v728, %v742
    %v883 = vcombine.low %v743, %v744
    %v884 = vcombine.low %v735, %v767
    %v886 = vunpack.c.l.s4 1966171168
    %v887 = vunpack.c.0.s8 %v886
    %v888 = vlaneseq
    %v889 = vshrl.u32 %v888, 7
    %v890 = vsub.s32 %v887, %v889
    %v891 = vrot.slane %v881, %v890
    %v893 = vunpack.c.l.s4 1966171168
    %v894 = vunpack.c.0.s8 %v893
    %v895 = vlaneseq
    %v896 = vshrl.u32 %v895, 7
    %v897 = vsub.s32 %v894, %v896
    %v898 = vrot.slane %v882, %v897
    %v900 = vunpack.c.l.s4 1966171168
    %v901 = vunpack.c.0.s8 %v900
    %v902 = vlaneseq
    %v903 = vshrl.u32 %v902, 7
    %v904 = vsub.s32 %v901, %v903
    %v905 = vrot.slane %v883, %v904
    %v907 = vunpack.c.l.s4 1966171168
    %v908 = vunpack.c.0.s8 %v907
    %v909 = vlaneseq
    %v910 = vshrl.u32 %v909, 7
    %v911 = vsub.s32 %v908, %v910
    %v912 = vrot.slane %v884, %v911
    %v913 = vcombine.low %v891, %v898
    %v914 = vcombine.low %v905, %v912
    %v916 = vunpack.c.l.s4 1966171168
    %v917 = vunpack.c.0.s8 %v916
    %v918 = vlaneseq
    %v919 = vshrl.u32 %v918, 7
    %v920 = vsub.s32 %v917, %v919
    %v921 = vrot.slane %v913, %v920
    %v923 = vunpack.c.l.s4 1966171168
    %v924 = vunpack.c.0.s8 %v923
    %v925 = vlaneseq
    %v926 = vshrl.u32 %v925, 7
    %v927 = vsub.s32 %v924, %v926
    %v928 = vrot.slane %v914, %v927
    %v929 = vcombine.low %v921, %v928
    %v930 = vcombine.low %v781, %v782
    %v931 = vcombine.low %v783, %v774
    %v933 = vunpack.c.l.s4 1966171168
    %v934 = vunpack.c.0.s8 %v933
    %v935 = vlaneseq
    %v936 = vshrl.u32 %v935, 7
    %v937 = vsub.s32 %v934, %v936
    %v938 = vrot.slane %v930, %v937
    %v940 = vunpack.c.l.s4 1966171168
    %v941 = vunpack.c.0.s8 %v940
    %v942 = vlaneseq
    %v943 = vshrl.u32 %v942, 7
    %v944 = vsub.s32 %v941, %v943
    %v945 = vrot.slane %v931, %v944
    %v946 = vcombine.low %v938, %v945
    %v948 = vunpack.c.l.s4 1966171168
    %v949 = vunpack.c.0.s8 %v948
    %v950 = vlaneseq
    %v951 = vshrl.u32 %v950, 7
    %v952 = vsub.s32 %v949, %v951
    %v953 = vrot.slane %v946, %v952
    %v1002 = vunpack.c.l.b16 %v784
    %v1003 = vunpack.c.h.b16 %v784
    %v1004 = vunpack.c.l.b16 %v785
    %v1005 = vunpack.c.h.b16 %v785
    %v1006 = vunpack.c.l.b16 %v786
    %v1007 = vunpack.c.h.b16 %v786
    %v1008 = vunpack.c.l.b16 %v787
    %v1009 = vunpack.c.h.b16 %v787
    %v1010 = vunpack.c.l.b16 %v788
    %v1011 = vunpack.c.h.b16 %v788
    %v1012 = vunpack.c.l.b16 %v789
    %v1013 = vunpack.c.h.b16 %v789
    %v1014 = vunpack.c.l.b16 %v790
    %v1015 = vunpack.c.h.b16 %v790
    %v1016 = vunpack.c.l.b16 %v791
    %v1017 = vunpack.c.h.b16 %v791
    %v1018 = vunpack.c.l.b16 %v792
    %v1019 = vunpack.c.h.b16 %v792
    %v1020 = vunpack.c.l.b16 %v793
    %v1021 = vunpack.c.h.b16 %v793
    %v1022 = vunpack.c.l.b16 %v794
    %v1023 = vunpack.c.h.b16 %v794
    %v1024 = vunpack.c.l.b16 %v795
    %v1025 = vunpack.c.h.b16 %v795
    %v1026 = vunpack.c.l.b16 %v796
    %v1027 = vunpack.c.h.b16 %v796
    %v1028 = vunpack.c.l.b16 %v797
    %v1029 = vunpack.c.h.b16 %v797
    %v1030 = vunpack.c.l.b16 %v798
    %v1031 = vunpack.c.h.b16 %v798
    %v1032 = vunpack.c.l.b16 %v799
    %v1033 = vunpack.c.h.b16 %v799
    %v1034 = vunpack.c.l.b16 %v800
    %v1035 = vunpack.c.h.b16 %v800
    %v1036 = vunpack.c.l.b16 %v801
    %v1037 = vunpack.c.h.b16 %v801
    %v1038 = vunpack.c.l.b16 %v802
    %v1039 = vunpack.c.h.b16 %v802
    %v1040 = vunpack.c.l.b16 %v803
    %v1041 = vunpack.c.h.b16 %v803
    %v1042 = vunpack.c.l.b16 %v804
    %v1043 = vunpack.c.h.b16 %v804
    %v1044 = vunpack.c.l.b16 %v805
    %v1045 = vunpack.c.h.b16 %v805
    %v1046 = vunpack.c.l.b16 %v806
    %v1047 = vunpack.c.h.b16 %v806
    %v1048 = vunpack.c.l.b16 %v807
    %v1049 = vunpack.c.h.b16 %v807
    %v1050 = vunpack.c.l.b16 %v808
    %v1051 = vunpack.c.h.b16 %v808
    %v1052 = vunpack.c.l.b16 %v809
    %v1053 = vunpack.c.h.b16 %v809
    %v1054 = vunpack.c.l.b16 %v810
    %v1055 = vunpack.c.h.b16 %v810
    %v1056 = vunpack.c.l.b16 %v811
    %v1057 = vunpack.c.h.b16 %v811
    %v1058 = vunpack.c.l.b16 %v812
    %v1059 = vunpack.c.h.b16 %v812
    %v1060 = vunpack.c.l.b16 %v813
    %v1061 = vunpack.c.h.b16 %v813
    %v1062 = vunpack.c.l.b16 %v814
    %v1063 = vunpack.c.h.b16 %v814
    %v1064 = vunpack.c.l.b16 %v815
    %v1065 = vunpack.c.h.b16 %v815
    %v1066 = vunpack.c.l.b16 %v816
    %v1067 = vunpack.c.h.b16 %v816
    %v1068 = vunpack.c.l.b16 %v817
    %v1069 = vunpack.c.h.b16 %v817
    %v1070 = vunpack.c.l.b16 %v818
    %v1071 = vunpack.c.h.b16 %v818
    %v1072 = vunpack.c.l.b16 %v819
    %v1073 = vunpack.c.h.b16 %v819
    %v1074 = vunpack.c.l.b16 %v820
    %v1075 = vunpack.c.h.b16 %v820
    %v1076 = vunpack.c.l.b16 %v821
    %v1077 = vunpack.c.h.b16 %v821
    %v1078 = vunpack.c.l.b16 %v822
    %v1079 = vunpack.c.h.b16 %v822
    %v1080 = vunpack.c.l.b16 %v823
    %v1081 = vunpack.c.h.b16 %v823
    %v1082 = vunpack.c.l.b16 %v824
    %v1083 = vunpack.c.h.b16 %v824
    %v1084 = vunpack.c.l.b16 %v825
    %v1085 = vunpack.c.h.b16 %v825
    %v1086 = vunpack.c.l.b16 %v826
    %v1087 = vunpack.c.h.b16 %v826
    %v1088 = vunpack.c.l.b16 %v827
    %v1089 = vunpack.c.h.b16 %v827
    %v1090 = vunpack.c.l.b16 %v828
    %v1091 = vunpack.c.h.b16 %v828
    %v1092 = vunpack.c.l.b16 %v829
    %v1093 = vunpack.c.h.b16 %v829
    %v1094 = vunpack.c.l.b16 %v830
    %v1095 = vunpack.c.h.b16 %v830
    %v1096 = vunpack.c.l.b16 %v831
    %v1097 = vunpack.c.h.b16 %v831
    %v1098 = vpack.c.b16 %v1010, %v1002
    %v1099 = vpack.c.b16 %v1011, %v1003
    %v1100 = vpack.c.b16 %v1012, %v1004
    %v1101 = vpack.c.b16 %v1013, %v1005
    %v1102 = vpack.c.b16 %v1014, %v1006
    %v1103 = vpack.c.b16 %v1015, %v1007
    %v1104 = vpack.c.b16 %v1016, %v1008
    %v1105 = vpack.c.b16 %v1017, %v1009
    %v1106 = vpack.c.b16 %v1026, %v1018
    %v1107 = vpack.c.b16 %v1027, %v1019
    %v1108 = vpack.c.b16 %v1028, %v1020
    %v1109 = vpack.c.b16 %v1029, %v1021
    %v1110 = vpack.c.b16 %v1030, %v1022
    %v1111 = vpack.c.b16 %v1031, %v1023
    %v1112 = vpack.c.b16 %v1032, %v1024
    %v1113 = vpack.c.b16 %v1033, %v1025
    %v1114 = vpack.c.b16 %v1042, %v1034
    %v1115 = vpack.c.b16 %v1043, %v1035
    %v1116 = vpack.c.b16 %v1044, %v1036
    %v1117 = vpack.c.b16 %v1045, %v1037
    %v1118 = vpack.c.b16 %v1046, %v1038
    %v1119 = vpack.c.b16 %v1047, %v1039
    %v1120 = vpack.c.b16 %v1048, %v1040
    %v1121 = vpack.c.b16 %v1049, %v1041
    %v1122 = vpack.c.b16 %v1058, %v1050
    %v1123 = vpack.c.b16 %v1059, %v1051
    %v1124 = vpack.c.b16 %v1060, %v1052
    %v1125 = vpack.c.b16 %v1061, %v1053
    %v1126 = vpack.c.b16 %v1062, %v1054
    %v1127 = vpack.c.b16 %v1063, %v1055
    %v1128 = vpack.c.b16 %v1064, %v1056
    %v1129 = vpack.c.b16 %v1065, %v1057
    %v1130 = vpack.c.b16 %v1074, %v1066
    %v1131 = vpack.c.b16 %v1075, %v1067
    %v1132 = vpack.c.b16 %v1076, %v1068
    %v1133 = vpack.c.b16 %v1077, %v1069
    %v1134 = vpack.c.b16 %v1078, %v1070
    %v1135 = vpack.c.b16 %v1079, %v1071
    %v1136 = vpack.c.b16 %v1080, %v1072
    %v1137 = vpack.c.b16 %v1081, %v1073
    %v1138 = vpack.c.b16 %v1090, %v1082
    %v1139 = vpack.c.b16 %v1091, %v1083
    %v1140 = vpack.c.b16 %v1092, %v1084
    %v1141 = vpack.c.b16 %v1093, %v1085
    %v1142 = vpack.c.b16 %v1094, %v1086
    %v1143 = vpack.c.b16 %v1095, %v1087
    %v1144 = vpack.c.b16 %v1096, %v1088
    %v1145 = vpack.c.b16 %v1097, %v1089
    %vm1194 = vcmask 785408
    %v1196 = vsel %vm1194, %v880, 0
    %v1199 = vsel %vm1194, %v929, 0
    %v1202 = vsel %vm1194, %v953, 0
    %1204 = vmatprep.subr.bf16.mxu0 %v1099
    %1205 = vmatpush1.bf16.msra.mxu0 %v1098
    %1206 = vmatprep.subr.bf16.mxu0 %v1107
    %1207 = vmatpush1.bf16.msra.mxu0 %v1106
    %1208 = vmatprep.subr.bf16.mxu0 %v1115
    %1209 = vmatpush1.bf16.msra.mxu0 %v1114
    %1210 = vmatprep.subr.bf16.mxu0 %v1123
    %1211 = vmatpush1.bf16.msra.mxu0 %v1122
    %1212 = vmatprep.subr.bf16.mxu0 %v1131
    %1213 = vmatpush1.bf16.msra.mxu0 %v1130
    %1214 = vmatprep.subr.bf16.mxu0 %v1139
    %1215 = vmatpush1.bf16.msra.mxu0 %v1138
    %1216 = vmatprep.subr.bf16.mxu0 0
    %1217 = vmatpush1.bf16.msra.mxu0 0
    %1218 = vmatprep.subr.bf16.mxu0 0
    %1219 = vmatpush1.bf16.msra.mxu0 0
    %1220 = vmatprep.subr.bf16.mxu0 0
    %1221 = vmatpush1.bf16.msra.mxu0 0
    %1222 = vmatprep.subr.bf16.mxu0 0
    %1223 = vmatpush1.bf16.msra.mxu0 0
    %1224 = vmatprep.subr.bf16.mxu0 0
    %1225 = vmatpush1.bf16.msra.mxu0 0
    %1226 = vmatprep.subr.bf16.mxu0 0
    %1227 = vmatpush1.bf16.msra.mxu0 0
    %1228 = vmatprep.subr.bf16.mxu0 0
    %1229 = vmatpush1.bf16.msra.mxu0 0
    %1230 = vmatprep.subr.bf16.mxu0 0
    %1231 = vmatpush1.bf16.msra.mxu0 0
    %1232 = vmatprep.subr.bf16.mxu0 0
    %1233 = vmatpush1.bf16.msra.mxu0 0
    %1234 = vmatprep.subr.bf16.mxu0 0
    %1235 = vmatpush1.bf16.msra.mxu0 0
    %1236 = vmatprep.mubr.bf16.mxu0 0
    %1237 = vmatmul.mubr.bf16.gmra.mrb[0].mxu0 %v1196
    %v1238 = vpop.f32.mrb[0].mxu0
    %v1239 = vadd.f32 0.0, %v1238
    %v1240 = vpop.f32.mrb[0].mxu0
    %v1241 = vadd.f32 0.0, %v1240
    %v1242 = vpop.f32.mrb[0].mxu0
    %v1243 = vadd.f32 0.0, %v1242
    %v1244 = vpop.f32.mrb[0].mxu0
    %v1245 = vadd.f32 0.0, %v1244
    %1246 = vmatprep.mubr.bf16.mxu0 0
    %1247 = vmatmul.mubr.bf16.gmra.mrb[0].mxu0 %v1199
    %v1248 = vpop.f32.mrb[0].mxu0
    %v1249 = vadd.f32 0.0, %v1248
    %v1250 = vpop.f32.mrb[0].mxu0
    %v1251 = vadd.f32 0.0, %v1250
    %v1252 = vpop.f32.mrb[0].mxu0
    %v1253 = vadd.f32 0.0, %v1252
    %v1254 = vpop.f32.mrb[0].mxu0
    %v1255 = vadd.f32 0.0, %v1254
    %1256 = vmatprep.mubr.bf16.mxu0 0
    %1257 = vmatmul.mubr.bf16.gmra.mrb[0].mxu0 %v1202
    %v1258 = vpop.f32.mrb[0].mxu0
    %v1259 = vadd.f32 0.0, %v1258
    %v1260 = vpop.f32.mrb[0].mxu0
    %v1261 = vadd.f32 0.0, %v1260
    %v1262 = vpop.f32.mrb[0].mxu0
    %v1263 = vpop.f32.mrb[0].mxu0
    %1264 = vdwg.mxu0
    %1265 = vmatprep.subr.bf16.mxu0 %v1101
    %1266 = vmatpush1.bf16.msra.mxu0 %v1100
    %1267 = vmatprep.subr.bf16.mxu0 %v1109
    %1268 = vmatpush1.bf16.msra.mxu0 %v1108
    %1269 = vmatprep.subr.bf16.mxu0 %v1117
    %1270 = vmatpush1.bf16.msra.mxu0 %v1116
    %1271 = vmatprep.subr.bf16.mxu0 %v1125
    %1272 = vmatpush1.bf16.msra.mxu0 %v1124
    %1273 = vmatprep.subr.bf16.mxu0 %v1133
    %1274 = vmatpush1.bf16.msra.mxu0 %v1132
    %1275 = vmatprep.subr.bf16.mxu0 %v1141
    %1276 = vmatpush1.bf16.msra.mxu0 %v1140
    %1277 = vmatprep.subr.bf16.mxu0 0
    %1278 = vmatpush1.bf16.msra.mxu0 0
    %1279 = vmatprep.subr.bf16.mxu0 0
    %1280 = vmatpush1.bf16.msra.mxu0 0
    %1281 = vmatprep.subr.bf16.mxu0 0
    %1282 = vmatpush1.bf16.msra.mxu0 0
    %1283 = vmatprep.subr.bf16.mxu0 0
    %1284 = vmatpush1.bf16.msra.mxu0 0
    %1285 = vmatprep.subr.bf16.mxu0 0
    %1286 = vmatpush1.bf16.msra.mxu0 0
    %1287 = vmatprep.subr.bf16.mxu0 0
    %1288 = vmatpush1.bf16.msra.mxu0 0
    %1289 = vmatprep.subr.bf16.mxu0 0
    %1290 = vmatpush1.bf16.msra.mxu0 0
    %1291 = vmatprep.subr.bf16.mxu0 0
    %1292 = vmatpush1.bf16.msra.mxu0 0
    %1293 = vmatprep.subr.bf16.mxu0 0
    %1294 = vmatpush1.bf16.msra.mxu0 0
    %1295 = vmatprep.subr.bf16.mxu0 0
    %1296 = vmatpush1.bf16.msra.mxu0 0
    %1297 = vmatprep.mubr.bf16.mxu0 0
    %1298 = vmatmul.mubr.bf16.gmra.mrb[0].mxu0 %v1196
    %v1299 = vpop.f32.mrb[0].mxu0
    %v1300 = vadd.f32 0.0, %v1299
    %v1301 = vpop.f32.mrb[0].mxu0
    %v1302 = vadd.f32 0.0, %v1301
    %v1303 = vpop.f32.mrb[0].mxu0
    %v1304 = vadd.f32 0.0, %v1303
    %v1305 = vpop.f32.mrb[0].mxu0
    %v1306 = vadd.f32 0.0, %v1305
    %1307 = vmatprep.mubr.bf16.mxu0 0
    %1308 = vmatmul.mubr.bf16.gmra.mrb[0].mxu0 %v1199
    %v1309 = vpop.f32.mrb[0].mxu0
    %v1310 = vadd.f32 0.0, %v1309
    %v1311 = vpop.f32.mrb[0].mxu0
    %v1312 = vadd.f32 0.0, %v1311
    %v1313 = vpop.f32.mrb[0].mxu0
    %v1314 = vadd.f32 0.0, %v1313
    %v1315 = vpop.f32.mrb[0].mxu0
    %v1316 = vadd.f32 0.0, %v1315
    %1317 = vmatprep.mubr.bf16.mxu0 0
    %1318 = vmatmul.mubr.bf16.gmra.mrb[0].mxu0 %v1202
    %v1319 = vpop.f32.mrb[0].mxu0
    %v1320 = vadd.f32 0.0, %v1319
    %v1321 = vpop.f32.mrb[0].mxu0
    %v1322 = vadd.f32 0.0, %v1321
    %v1323 = vpop.f32.mrb[0].mxu0
    %v1324 = vpop.f32.mrb[0].mxu0
    %1325 = vdwg.mxu0
    %1326 = vmatprep.subr.bf16.mxu0 %v1103
    %1327 = vmatpush1.bf16.msra.mxu0 %v1102
    %1328 = vmatprep.subr.bf16.mxu0 %v1111
    %1329 = vmatpush1.bf16.msra.mxu0 %v1110
    %1330 = vmatprep.subr.bf16.mxu0 %v1119
    %1331 = vmatpush1.bf16.msra.mxu0 %v1118
    %1332 = vmatprep.subr.bf16.mxu0 %v1127
    %1333 = vmatpush1.bf16.msra.mxu0 %v1126
    %1334 = vmatprep.subr.bf16.mxu0 %v1135
    %1335 = vmatpush1.bf16.msra.mxu0 %v1134
    %1336 = vmatprep.subr.bf16.mxu0 %v1143
    %1337 = vmatpush1.bf16.msra.mxu0 %v1142
    %1338 = vmatprep.subr.bf16.mxu0 0
    %1339 = vmatpush1.bf16.msra.mxu0 0
    %1340 = vmatprep.subr.bf16.mxu0 0
    %1341 = vmatpush1.bf16.msra.mxu0 0
    %1342 = vmatprep.subr.bf16.mxu0 0
    %1343 = vmatpush1.bf16.msra.mxu0 0
    %1344 = vmatprep.subr.bf16.mxu0 0
    %1345 = vmatpush1.bf16.msra.mxu0 0
    %1346 = vmatprep.subr.bf16.mxu0 0
    %1347 = vmatpush1.bf16.msra.mxu0 0
    %1348 = vmatprep.subr.bf16.mxu0 0
    %1349 = vmatpush1.bf16.msra.mxu0 0
    %1350 = vmatprep.subr.bf16.mxu0 0
    %1351 = vmatpush1.bf16.msra.mxu0 0
    %1352 = vmatprep.subr.bf16.mxu0 0
    %1353 = vmatpush1.bf16.msra.mxu0 0
    %1354 = vmatprep.subr.bf16.mxu0 0
    %1355 = vmatpush1.bf16.msra.mxu0 0
    %1356 = vmatprep.subr.bf16.mxu0 0
    %1357 = vmatpush1.bf16.msra.mxu0 0
    %1358 = vmatprep.mubr.bf16.mxu0 0
    %1359 = vmatmul.mubr.bf16.gmra.mrb[0].mxu0 %v1196
    %v1360 = vpop.f32.mrb[0].mxu0
    %v1361 = vadd.f32 0.0, %v1360
    %v1362 = vpop.f32.mrb[0].mxu0
    %v1363 = vadd.f32 0.0, %v1362
    %v1364 = vpop.f32.mrb[0].mxu0
    %v1365 = vadd.f32 0.0, %v1364
    %v1366 = vpop.f32.mrb[0].mxu0
    %v1367 = vadd.f32 0.0, %v1366
    %1368 = vmatprep.mubr.bf16.mxu0 0
    %1369 = vmatmul.mubr.bf16.gmra.mrb[0].mxu0 %v1199
    %v1370 = vpop.f32.mrb[0].mxu0
    %v1371 = vadd.f32 0.0, %v1370
    %v1372 = vpop.f32.mrb[0].mxu0
    %v1373 = vadd.f32 0.0, %v1372
    %v1374 = vpop.f32.mrb[0].mxu0
    %v1375 = vadd.f32 0.0, %v1374
    %v1376 = vpop.f32.mrb[0].mxu0
    %v1377 = vadd.f32 0.0, %v1376
    %1378 = vmatprep.mubr.bf16.mxu0 0
    %1379 = vmatmul.mubr.bf16.gmra.mrb[0].mxu0 %v1202
    %v1380 = vpop.f32.mrb[0].mxu0
    %v1381 = vadd.f32 0.0, %v1380
    %v1382 = vpop.f32.mrb[0].mxu0
    %v1383 = vadd.f32 0.0, %v1382
    %v1384 = vpop.f32.mrb[0].mxu0
    %v1385 = vpop.f32.mrb[0].mxu0
    %1386 = vdwg.mxu0
    %1387 = vmatprep.subr.bf16.mxu0 %v1105
    %1388 = vmatpush1.bf16.msra.mxu0 %v1104
    %1389 = vmatprep.subr.bf16.mxu0 %v1113
    %1390 = vmatpush1.bf16.msra.mxu0 %v1112
    %1391 = vmatprep.subr.bf16.mxu0 %v1121
    %1392 = vmatpush1.bf16.msra.mxu0 %v1120
    %1393 = vmatprep.subr.bf16.mxu0 %v1129
    %1394 = vmatpush1.bf16.msra.mxu0 %v1128
    %1395 = vmatprep.subr.bf16.mxu0 %v1137
    %1396 = vmatpush1.bf16.msra.mxu0 %v1136
    %1397 = vmatprep.subr.bf16.mxu0 %v1145
    %1398 = vmatpush1.bf16.msra.mxu0 %v1144
    %1399 = vmatprep.subr.bf16.mxu0 0
    %1400 = vmatpush1.bf16.msra.mxu0 0
    %1401 = vmatprep.subr.bf16.mxu0 0
    %1402 = vmatpush1.bf16.msra.mxu0 0
    %1403 = vmatprep.subr.bf16.mxu0 0
    %1404 = vmatpush1.bf16.msra.mxu0 0
    %1405 = vmatprep.subr.bf16.mxu0 0
    %1406 = vmatpush1.bf16.msra.mxu0 0
    %1407 = vmatprep.subr.bf16.mxu0 0
    %1408 = vmatpush1.bf16.msra.mxu0 0
    %1409 = vmatprep.subr.bf16.mxu0 0
    %1410 = vmatpush1.bf16.msra.mxu0 0
    %1411 = vmatprep.subr.bf16.mxu0 0
    %1412 = vmatpush1.bf16.msra.mxu0 0
    %1413 = vmatprep.subr.bf16.mxu0 0
    %1414 = vmatpush1.bf16.msra.mxu0 0
    %1415 = vmatprep.subr.bf16.mxu0 0
    %1416 = vmatpush1.bf16.msra.mxu0 0
    %1417 = vmatprep.subr.bf16.mxu0 0
    %1418 = vmatpush1.bf16.msra.mxu0 0
    %1419 = vmatprep.mubr.bf16.mxu0 0
    %1420 = vmatmul.mubr.bf16.gmra.mrb[0].mxu0 %v1196
    %v1421 = vpop.f32.mrb[0].mxu0
    %v1422 = vadd.f32 0.0, %v1421
    %v1423 = vpop.f32.mrb[0].mxu0
    %v1424 = vadd.f32 0.0, %v1423
    %v1425 = vpop.f32.mrb[0].mxu0
    %v1426 = vadd.f32 0.0, %v1425
    %v1427 = vpop.f32.mrb[0].mxu0
    %v1428 = vadd.f32 0.0, %v1427
    %1429 = vmatprep.mubr.bf16.mxu0 0
    %1430 = vmatmul.mubr.bf16.gmra.mrb[0].mxu0 %v1199
    %v1431 = vpop.f32.mrb[0].mxu0
    %v1432 = vadd.f32 0.0, %v1431
    %v1433 = vpop.f32.mrb[0].mxu0
    %v1434 = vadd.f32 0.0, %v1433
    %v1435 = vpop.f32.mrb[0].mxu0
    %v1436 = vadd.f32 0.0, %v1435
    %v1437 = vpop.f32.mrb[0].mxu0
    %v1438 = vadd.f32 0.0, %v1437
    %1439 = vmatprep.mubr.bf16.mxu0 0
    %1440 = vmatmul.mubr.bf16.gmra.mrb[0].mxu0 %v1202
    %v1441 = vpop.f32.mrb[0].mxu0
    %v1442 = vadd.f32 0.0, %v1441
    %v1443 = vpop.f32.mrb[0].mxu0
    %v1444 = vadd.f32 0.0, %v1443
    %v1445 = vpop.f32.mrb[0].mxu0
    %v1446 = vpop.f32.mrb[0].mxu0
    %1447 = vdwg.mxu0
    %v1488 = vcombine.low %v1239, %v1241
    %v1489 = vcombine.high %v1239, %v1241
    %v1490 = vcombine.low %v1300, %v1302
    %v1491 = vcombine.high %v1300, %v1302
    %v1493 = vunpack.c.l.s4 1983009808
    %v1494 = vunpack.c.0.s8 %v1493
    %v1495 = vlaneseq
    %v1496 = vshrl.u32 %v1495, 7
    %v1497 = vsub.s32 %v1494, %v1496
    %v1498 = vrot.slane %v1488, %v1497
    %v1500 = vunpack.c.l.s4 1983009808
    %v1501 = vunpack.c.0.s8 %v1500
    %v1502 = vlaneseq
    %v1503 = vshrl.u32 %v1502, 7
    %v1504 = vsub.s32 %v1501, %v1503
    %v1505 = vrot.slane %v1489, %v1504
    %v1507 = vunpack.c.l.s4 1983009808
    %v1508 = vunpack.c.0.s8 %v1507
    %v1509 = vlaneseq
    %v1510 = vshrl.u32 %v1509, 7
    %v1511 = vsub.s32 %v1508, %v1510
    %v1512 = vrot.slane %v1490, %v1511
    %v1514 = vunpack.c.l.s4 1983009808
    %v1515 = vunpack.c.0.s8 %v1514
    %v1516 = vlaneseq
    %v1517 = vshrl.u32 %v1516, 7
    %v1518 = vsub.s32 %v1515, %v1517
    %v1519 = vrot.slane %v1491, %v1518
    %v1520 = vcombine.low %v1498, %v1512
    %v1521 = vcombine.high %v1498, %v1512
    %v1522 = vcombine.low %v1505, %v1519
    %v1523 = vcombine.high %v1505, %v1519
    %v1524 = vcombine.low %v1361, %v1363
    %v1525 = vcombine.high %v1361, %v1363
    %v1526 = vcombine.low %v1422, %v1424
    %v1527 = vcombine.high %v1422, %v1424
    %v1529 = vunpack.c.l.s4 1983009808
    %v1530 = vunpack.c.0.s8 %v1529
    %v1531 = vlaneseq
    %v1532 = vshrl.u32 %v1531, 7
    %v1533 = vsub.s32 %v1530, %v1532
    %v1534 = vrot.slane %v1524, %v1533
    %v1536 = vunpack.c.l.s4 1983009808
    %v1537 = vunpack.c.0.s8 %v1536
    %v1538 = vlaneseq
    %v1539 = vshrl.u32 %v1538, 7
    %v1540 = vsub.s32 %v1537, %v1539
    %v1541 = vrot.slane %v1525, %v1540
    %v1543 = vunpack.c.l.s4 1983009808
    %v1544 = vunpack.c.0.s8 %v1543
    %v1545 = vlaneseq
    %v1546 = vshrl.u32 %v1545, 7
    %v1547 = vsub.s32 %v1544, %v1546
    %v1548 = vrot.slane %v1526, %v1547
    %v1550 = vunpack.c.l.s4 1983009808
    %v1551 = vunpack.c.0.s8 %v1550
    %v1552 = vlaneseq
    %v1553 = vshrl.u32 %v1552, 7
    %v1554 = vsub.s32 %v1551, %v1553
    %v1555 = vrot.slane %v1527, %v1554
    %v1556 = vcombine.low %v1534, %v1548
    %v1557 = vcombine.high %v1534, %v1548
    %v1558 = vcombine.low %v1541, %v1555
    %v1559 = vcombine.high %v1541, %v1555
    %v1560 = vcombine.low %v1243, %v1245
    %v1561 = vcombine.high %v1243, %v1245
    %v1562 = vcombine.low %v1304, %v1306
    %v1563 = vcombine.high %v1304, %v1306
    %v1565 = vunpack.c.l.s4 1983009808
    %v1566 = vunpack.c.0.s8 %v1565
    %v1567 = vlaneseq
    %v1568 = vshrl.u32 %v1567, 7
    %v1569 = vsub.s32 %v1566, %v1568
    %v1570 = vrot.slane %v1560, %v1569
    %v1572 = vunpack.c.l.s4 1983009808
    %v1573 = vunpack.c.0.s8 %v1572
    %v1574 = vlaneseq
    %v1575 = vshrl.u32 %v1574, 7
    %v1576 = vsub.s32 %v1573, %v1575
    %v1577 = vrot.slane %v1561, %v1576
    %v1579 = vunpack.c.l.s4 1983009808
    %v1580 = vunpack.c.0.s8 %v1579
    %v1581 = vlaneseq
    %v1582 = vshrl.u32 %v1581, 7
    %v1583 = vsub.s32 %v1580, %v1582
    %v1584 = vrot.slane %v1562, %v1583
    %v1586 = vunpack.c.l.s4 1983009808
    %v1587 = vunpack.c.0.s8 %v1586
    %v1588 = vlaneseq
    %v1589 = vshrl.u32 %v1588, 7
    %v1590 = vsub.s32 %v1587, %v1589
    %v1591 = vrot.slane %v1563, %v1590
    %v1592 = vcombine.low %v1570, %v1584
    %v1593 = vcombine.high %v1570, %v1584
    %v1594 = vcombine.low %v1577, %v1591
    %v1595 = vcombine.high %v1577, %v1591
    %v1596 = vcombine.low %v1365, %v1367
    %v1597 = vcombine.high %v1365, %v1367
    %v1598 = vcombine.low %v1426, %v1428
    %v1599 = vcombine.high %v1426, %v1428
    %v1601 = vunpack.c.l.s4 1983009808
    %v1602 = vunpack.c.0.s8 %v1601
    %v1603 = vlaneseq
    %v1604 = vshrl.u32 %v1603, 7
    %v1605 = vsub.s32 %v1602, %v1604
    %v1606 = vrot.slane %v1596, %v1605
    %v1608 = vunpack.c.l.s4 1983009808
    %v1609 = vunpack.c.0.s8 %v1608
    %v1610 = vlaneseq
    %v1611 = vshrl.u32 %v1610, 7
    %v1612 = vsub.s32 %v1609, %v1611
    %v1613 = vrot.slane %v1597, %v1612
    %v1615 = vunpack.c.l.s4 1983009808
    %v1616 = vunpack.c.0.s8 %v1615
    %v1617 = vlaneseq
    %v1618 = vshrl.u32 %v1617, 7
    %v1619 = vsub.s32 %v1616, %v1618
    %v1620 = vrot.slane %v1598, %v1619
    %v1622 = vunpack.c.l.s4 1983009808
    %v1623 = vunpack.c.0.s8 %v1622
    %v1624 = vlaneseq
    %v1625 = vshrl.u32 %v1624, 7
    %v1626 = vsub.s32 %v1623, %v1625
    %v1627 = vrot.slane %v1599, %v1626
    %v1628 = vcombine.low %v1606, %v1620
    %v1629 = vcombine.high %v1606, %v1620
    %v1630 = vcombine.low %v1613, %v1627
    %v1631 = vcombine.high %v1613, %v1627
    %v1632 = vcombine.low %v1249, %v1251
    %v1633 = vcombine.high %v1249, %v1251
    %v1634 = vcombine.low %v1310, %v1312
    %v1635 = vcombine.high %v1310, %v1312
    %v1637 = vunpack.c.l.s4 1983009808
    %v1638 = vunpack.c.0.s8 %v1637
    %v1639 = vlaneseq
    %v1640 = vshrl.u32 %v1639, 7
    %v1641 = vsub.s32 %v1638, %v1640
    %v1642 = vrot.slane %v1632, %v1641
    %v1644 = vunpack.c.l.s4 1983009808
    %v1645 = vunpack.c.0.s8 %v1644
    %v1646 = vlaneseq
    %v1647 = vshrl.u32 %v1646, 7
    %v1648 = vsub.s32 %v1645, %v1647
    %v1649 = vrot.slane %v1633, %v1648
    %v1651 = vunpack.c.l.s4 1983009808
    %v1652 = vunpack.c.0.s8 %v1651
    %v1653 = vlaneseq
    %v1654 = vshrl.u32 %v1653, 7
    %v1655 = vsub.s32 %v1652, %v1654
    %v1656 = vrot.slane %v1634, %v1655
    %v1658 = vunpack.c.l.s4 1983009808
    %v1659 = vunpack.c.0.s8 %v1658
    %v1660 = vlaneseq
    %v1661 = vshrl.u32 %v1660, 7
    %v1662 = vsub.s32 %v1659, %v1661
    %v1663 = vrot.slane %v1635, %v1662
    %v1664 = vcombine.low %v1642, %v1656
    %v1665 = vcombine.high %v1642, %v1656
    %v1666 = vcombine.low %v1649, %v1663
    %v1667 = vcombine.high %v1649, %v1663
    %v1668 = vcombine.low %v1371, %v1373
    %v1669 = vcombine.high %v1371, %v1373
    %v1670 = vcombine.low %v1432, %v1434
    %v1671 = vcombine.high %v1432, %v1434
    %v1673 = vunpack.c.l.s4 1983009808
    %v1674 = vunpack.c.0.s8 %v1673
    %v1675 = vlaneseq
    %v1676 = vshrl.u32 %v1675, 7
    %v1677 = vsub.s32 %v1674, %v1676
    %v1678 = vrot.slane %v1668, %v1677
    %v1680 = vunpack.c.l.s4 1983009808
    %v1681 = vunpack.c.0.s8 %v1680
    %v1682 = vlaneseq
    %v1683 = vshrl.u32 %v1682, 7
    %v1684 = vsub.s32 %v1681, %v1683
    %v1685 = vrot.slane %v1669, %v1684
    %v1687 = vunpack.c.l.s4 1983009808
    %v1688 = vunpack.c.0.s8 %v1687
    %v1689 = vlaneseq
    %v1690 = vshrl.u32 %v1689, 7
    %v1691 = vsub.s32 %v1688, %v1690
    %v1692 = vrot.slane %v1670, %v1691
    %v1694 = vunpack.c.l.s4 1983009808
    %v1695 = vunpack.c.0.s8 %v1694
    %v1696 = vlaneseq
    %v1697 = vshrl.u32 %v1696, 7
    %v1698 = vsub.s32 %v1695, %v1697
    %v1699 = vrot.slane %v1671, %v1698
    %v1700 = vcombine.low %v1678, %v1692
    %v1701 = vcombine.high %v1678, %v1692
    %v1702 = vcombine.low %v1685, %v1699
    %v1703 = vcombine.high %v1685, %v1699
    %v1704 = vcombine.low %v1253, %v1255
    %v1705 = vcombine.high %v1253, %v1255
    %v1706 = vcombine.low %v1314, %v1316
    %v1707 = vcombine.high %v1314, %v1316
    %v1709 = vunpack.c.l.s4 1983009808
    %v1710 = vunpack.c.0.s8 %v1709
    %v1711 = vlaneseq
    %v1712 = vshrl.u32 %v1711, 7
    %v1713 = vsub.s32 %v1710, %v1712
    %v1714 = vrot.slane %v1704, %v1713
    %v1716 = vunpack.c.l.s4 1983009808
    %v1717 = vunpack.c.0.s8 %v1716
    %v1718 = vlaneseq
    %v1719 = vshrl.u32 %v1718, 7
    %v1720 = vsub.s32 %v1717, %v1719
    %v1721 = vrot.slane %v1705, %v1720
    %v1723 = vunpack.c.l.s4 1983009808
    %v1724 = vunpack.c.0.s8 %v1723
    %v1725 = vlaneseq
    %v1726 = vshrl.u32 %v1725, 7
    %v1727 = vsub.s32 %v1724, %v1726
    %v1728 = vrot.slane %v1706, %v1727
    %v1730 = vunpack.c.l.s4 1983009808
    %v1731 = vunpack.c.0.s8 %v1730
    %v1732 = vlaneseq
    %v1733 = vshrl.u32 %v1732, 7
    %v1734 = vsub.s32 %v1731, %v1733
    %v1735 = vrot.slane %v1707, %v1734
    %v1736 = vcombine.low %v1714, %v1728
    %v1737 = vcombine.high %v1714, %v1728
    %v1738 = vcombine.low %v1721, %v1735
    %v1739 = vcombine.high %v1721, %v1735
    %v1740 = vcombine.low %v1375, %v1377
    %v1741 = vcombine.high %v1375, %v1377
    %v1742 = vcombine.low %v1436, %v1438
    %v1743 = vcombine.high %v1436, %v1438
    %v1745 = vunpack.c.l.s4 1983009808
    %v1746 = vunpack.c.0.s8 %v1745
    %v1747 = vlaneseq
    %v1748 = vshrl.u32 %v1747, 7
    %v1749 = vsub.s32 %v1746, %v1748
    %v1750 = vrot.slane %v1740, %v1749
    %v1752 = vunpack.c.l.s4 1983009808
    %v1753 = vunpack.c.0.s8 %v1752
    %v1754 = vlaneseq
    %v1755 = vshrl.u32 %v1754, 7
    %v1756 = vsub.s32 %v1753, %v1755
    %v1757 = vrot.slane %v1741, %v1756
    %v1759 = vunpack.c.l.s4 1983009808
    %v1760 = vunpack.c.0.s8 %v1759
    %v1761 = vlaneseq
    %v1762 = vshrl.u32 %v1761, 7
    %v1763 = vsub.s32 %v1760, %v1762
    %v1764 = vrot.slane %v1742, %v1763
    %v1766 = vunpack.c.l.s4 1983009808
    %v1767 = vunpack.c.0.s8 %v1766
    %v1768 = vlaneseq
    %v1769 = vshrl.u32 %v1768, 7
    %v1770 = vsub.s32 %v1767, %v1769
    %v1771 = vrot.slane %v1743, %v1770
    %v1772 = vcombine.low %v1750, %v1764
    %v1773 = vcombine.high %v1750, %v1764
    %v1774 = vcombine.low %v1757, %v1771
    %v1775 = vcombine.high %v1757, %v1771
    %v1776 = vcombine.low %v1259, %v1261
    %v1777 = vcombine.high %v1259, %v1261
    %v1778 = vcombine.low %v1320, %v1322
    %v1779 = vcombine.high %v1320, %v1322
    %v1781 = vunpack.c.l.s4 1983009808
    %v1782 = vunpack.c.0.s8 %v1781
    %v1783 = vlaneseq
    %v1784 = vshrl.u32 %v1783, 7
    %v1785 = vsub.s32 %v1782, %v1784
    %v1786 = vrot.slane %v1776, %v1785
    %v1788 = vunpack.c.l.s4 1983009808
    %v1789 = vunpack.c.0.s8 %v1788
    %v1790 = vlaneseq
    %v1791 = vshrl.u32 %v1790, 7
    %v1792 = vsub.s32 %v1789, %v1791
    %v1793 = vrot.slane %v1777, %v1792
    %v1795 = vunpack.c.l.s4 1983009808
    %v1796 = vunpack.c.0.s8 %v1795
    %v1797 = vlaneseq
    %v1798 = vshrl.u32 %v1797, 7
    %v1799 = vsub.s32 %v1796, %v1798
    %v1800 = vrot.slane %v1778, %v1799
    %v1802 = vunpack.c.l.s4 1983009808
    %v1803 = vunpack.c.0.s8 %v1802
    %v1804 = vlaneseq
    %v1805 = vshrl.u32 %v1804, 7
    %v1806 = vsub.s32 %v1803, %v1805
    %v1807 = vrot.slane %v1779, %v1806
    %v1808 = vcombine.low %v1786, %v1800
    %v1809 = vcombine.high %v1786, %v1800
    %v1810 = vcombine.low %v1793, %v1807
    %v1811 = vcombine.high %v1793, %v1807
    %v1812 = vcombine.low %v1381, %v1383
    %v1813 = vcombine.high %v1381, %v1383
    %v1814 = vcombine.low %v1442, %v1444
    %v1815 = vcombine.high %v1442, %v1444
    %v1817 = vunpack.c.l.s4 1983009808
    %v1818 = vunpack.c.0.s8 %v1817
    %v1819 = vlaneseq
    %v1820 = vshrl.u32 %v1819, 7
    %v1821 = vsub.s32 %v1818, %v1820
    %v1822 = vrot.slane %v1812, %v1821
    %v1824 = vunpack.c.l.s4 1983009808
    %v1825 = vunpack.c.0.s8 %v1824
    %v1826 = vlaneseq
    %v1827 = vshrl.u32 %v1826, 7
    %v1828 = vsub.s32 %v1825, %v1827
    %v1829 = vrot.slane %v1813, %v1828
    %v1831 = vunpack.c.l.s4 1983009808
    %v1832 = vunpack.c.0.s8 %v1831
    %v1833 = vlaneseq
    %v1834 = vshrl.u32 %v1833, 7
    %v1835 = vsub.s32 %v1832, %v1834
    %v1836 = vrot.slane %v1814, %v1835
    %v1838 = vunpack.c.l.s4 1983009808
    %v1839 = vunpack.c.0.s8 %v1838
    %v1840 = vlaneseq
    %v1841 = vshrl.u32 %v1840, 7
    %v1842 = vsub.s32 %v1839, %v1841
    %v1843 = vrot.slane %v1815, %v1842
    %v1844 = vcombine.low %v1822, %v1836
    %v1845 = vcombine.high %v1822, %v1836
    %v1846 = vcombine.low %v1829, %v1843
    %v1847 = vcombine.high %v1829, %v1843
    %v1888 = vlaneseq
    %v1889 = vshrl.u32 %v1888, 7
    %v1890 = vadd.s32 %v1889, 8
    %v1891 = vadd.s32 %v146, 128
    %v1892 = vadd.s32 %v146, 256
    %v1893 = vadd.s32 %v146, 384
    %v1894 = vadd.s32 %v146, 512
    %v1895 = vadd.s32 %v146, 640
    %v1896 = vadd.s32 %v146, 768
    %v1897 = vadd.s32 %v146, 896
    %vm1898 = vcmp.ge.s32.totalorder %v146, 300
    %vm1899 = vcmp.ge.s32.totalorder %v1891, 300
    %vm1900 = vcmp.ge.s32.totalorder %v1892, 300
    %vm1901 = vcmp.ge.s32.totalorder %v1893, 300
    %vm1902 = vcmp.ge.s32.totalorder %v1894, 300
    %vm1903 = vcmp.ge.s32.totalorder %v1895, 300
    %vm1904 = vcmp.ge.s32.totalorder %v1896, 300
    %vm1905 = vcmp.ge.s32.totalorder %v1897, 300
    %vm1906 = vcmp.ge.s32.totalorder %v1889, 9
    %vm1907 = vcmp.ge.s32.totalorder %v1890, 9
    %vm1908 = vmand %vm1898, %vm1906
    %vm1909 = vmand %vm1899, %vm1906
    %vm1910 = vmand %vm1900, %vm1906
    %vm1911 = vmand %vm1901, %vm1906
    %vm1912 = vmand %vm1902, %vm1906
    %vm1913 = vmand %vm1903, %vm1906
    %vm1914 = vmand %vm1904, %vm1906
    %vm1915 = vmand %vm1905, %vm1906
    %vm1916 = vmand %vm1898, %vm1907
    %vm1917 = vmand %vm1899, %vm1907
    %vm1918 = vmand %vm1900, %vm1907
    %vm1919 = vmand %vm1901, %vm1907
    %vm1920 = vmand %vm1902, %vm1907
    %vm1921 = vmand %vm1903, %vm1907
    %vm1922 = vmand %vm1904, %vm1907
    %vm1923 = vmand %vm1905, %vm1907
    %vm1924 = vcmp.ge.s32.totalorder %v146, 600
    %vm1925 = vcmp.ge.s32.totalorder %v1891, 600
    %vm1926 = vcmp.ge.s32.totalorder %v1892, 600
    %vm1927 = vcmp.ge.s32.totalorder %v1893, 600
    %vm1928 = vcmp.ge.s32.totalorder %v1894, 600
    %vm1929 = vcmp.ge.s32.totalorder %v1895, 600
    %vm1930 = vcmp.ge.s32.totalorder %v1896, 600
    %vm1931 = vcmp.ge.s32.totalorder %v1897, 600
    %vm1932 = vcmp.ge.s32.totalorder %v1889, 8
    %vm1933 = vcmp.ge.s32.totalorder %v1890, 8
    %vm1934 = vmand %vm1924, %vm1932
    %vm1935 = vmand %vm1925, %vm1932
    %vm1936 = vmand %vm1926, %vm1932
    %vm1937 = vmand %vm1927, %vm1932
    %vm1938 = vmand %vm1928, %vm1932
    %vm1939 = vmand %vm1929, %vm1932
    %vm1940 = vmand %vm1930, %vm1932
    %vm1941 = vmand %vm1931, %vm1932
    %vm1942 = vmand %vm1924, %vm1933
    %vm1943 = vmand %vm1925, %vm1933
    %vm1944 = vmand %vm1926, %vm1933
    %vm1945 = vmand %vm1927, %vm1933
    %vm1946 = vmand %vm1928, %vm1933
    %vm1947 = vmand %vm1929, %vm1933
    %vm1948 = vmand %vm1930, %vm1933
    %vm1949 = vmand %vm1931, %vm1933
    %vm1950 = vmor %vm1908, %vm1934
    %vm1951 = vmor %vm1909, %vm1935
    %vm1952 = vmor %vm1910, %vm1936
    %vm1953 = vmor %vm1911, %vm1937
    %vm1954 = vmor %vm1912, %vm1938
    %vm1955 = vmor %vm1913, %vm1939
    %vm1956 = vmor %vm1914, %vm1940
    %vm1957 = vmor %vm1915, %vm1941
    %vm1958 = vmor %vm1916, %vm1942
    %vm1959 = vmor %vm1917, %vm1943
    %vm1960 = vmor %vm1918, %vm1944
    %vm1961 = vmor %vm1919, %vm1945
    %vm1962 = vmor %vm1920, %vm1946
    %vm1963 = vmor %vm1921, %vm1947
    %vm1964 = vmor %vm1922, %vm1948
    %vm1965 = vmor %vm1923, %vm1949
    %v1966 = vsel %vm1950, -1e+30, 0.0
    %v1967 = vsel %vm1951, -1e+30, 0.0
    %v1968 = vsel %vm1952, -1e+30, 0.0
    %v1969 = vsel %vm1953, -1e+30, 0.0
    %v1970 = vsel %vm1954, -1e+30, 0.0
    %v1971 = vsel %vm1955, -1e+30, 0.0
    %v1972 = vsel %vm1956, -1e+30, 0.0
    %v1973 = vsel %vm1957, -1e+30, 0.0
    %v1974 = vsel %vm1958, -1e+30, 0.0
    %v1975 = vsel %vm1959, -1e+30, 0.0
    %v1976 = vsel %vm1960, -1e+30, 0.0
    %v1977 = vsel %vm1961, -1e+30, 0.0
    %v1978 = vsel %vm1962, -1e+30, 0.0
    %v1979 = vsel %vm1963, -1e+30, 0.0
    %v1980 = vsel %vm1964, -1e+30, 0.0
    %v1981 = vsel %vm1965, -1e+30, 0.0
    %v1998 = vcombine.low %v1966, %v1967
    %v1999 = vcombine.high %v1966, %v1967
    %v2000 = vcombine.low %v1968, %v1969
    %v2001 = vcombine.high %v1968, %v1969
    %v2003 = vunpack.c.l.s4 1983009808
    %v2004 = vunpack.c.0.s8 %v2003
    %v2005 = vlaneseq
    %v2006 = vshrl.u32 %v2005, 7
    %v2007 = vsub.s32 %v2004, %v2006
    %v2008 = vrot.slane %v1998, %v2007
    %v2010 = vunpack.c.l.s4 1983009808
    %v2011 = vunpack.c.0.s8 %v2010
    %v2012 = vlaneseq
    %v2013 = vshrl.u32 %v2012, 7
    %v2014 = vsub.s32 %v2011, %v2013
    %v2015 = vrot.slane %v1999, %v2014
    %v2017 = vunpack.c.l.s4 1983009808
    %v2018 = vunpack.c.0.s8 %v2017
    %v2019 = vlaneseq
    %v2020 = vshrl.u32 %v2019, 7
    %v2021 = vsub.s32 %v2018, %v2020
    %v2022 = vrot.slane %v2000, %v2021
    %v2024 = vunpack.c.l.s4 1983009808
    %v2025 = vunpack.c.0.s8 %v2024
    %v2026 = vlaneseq
    %v2027 = vshrl.u32 %v2026, 7
    %v2028 = vsub.s32 %v2025, %v2027
    %v2029 = vrot.slane %v2001, %v2028
    %v2030 = vcombine.low %v2008, %v2022
    %v2031 = vcombine.high %v2008, %v2022
    %v2032 = vcombine.low %v2015, %v2029
    %v2033 = vcombine.high %v2015, %v2029
    %v2034 = vcombine.low %v1970, %v1971
    %v2035 = vcombine.high %v1970, %v1971
    %v2036 = vcombine.low %v1972, %v1973
    %v2037 = vcombine.high %v1972, %v1973
    %v2039 = vunpack.c.l.s4 1983009808
    %v2040 = vunpack.c.0.s8 %v2039
    %v2041 = vlaneseq
    %v2042 = vshrl.u32 %v2041, 7
    %v2043 = vsub.s32 %v2040, %v2042
    %v2044 = vrot.slane %v2034, %v2043
    %v2046 = vunpack.c.l.s4 1983009808
    %v2047 = vunpack.c.0.s8 %v2046
    %v2048 = vlaneseq
    %v2049 = vshrl.u32 %v2048, 7
    %v2050 = vsub.s32 %v2047, %v2049
    %v2051 = vrot.slane %v2035, %v2050
    %v2053 = vunpack.c.l.s4 1983009808
    %v2054 = vunpack.c.0.s8 %v2053
    %v2055 = vlaneseq
    %v2056 = vshrl.u32 %v2055, 7
    %v2057 = vsub.s32 %v2054, %v2056
    %v2058 = vrot.slane %v2036, %v2057
    %v2060 = vunpack.c.l.s4 1983009808
    %v2061 = vunpack.c.0.s8 %v2060
    %v2062 = vlaneseq
    %v2063 = vshrl.u32 %v2062, 7
    %v2064 = vsub.s32 %v2061, %v2063
    %v2065 = vrot.slane %v2037, %v2064
    %v2066 = vcombine.low %v2044, %v2058
    %v2067 = vcombine.high %v2044, %v2058
    %v2068 = vcombine.low %v2051, %v2065
    %v2069 = vcombine.high %v2051, %v2065
    %v2070 = vcombine.low %v1974, %v1975
    %v2071 = vcombine.low %v1976, %v1977
    %v2073 = vunpack.c.l.s4 1983009808
    %v2074 = vunpack.c.0.s8 %v2073
    %v2075 = vlaneseq
    %v2076 = vshrl.u32 %v2075, 7
    %v2077 = vsub.s32 %v2074, %v2076
    %v2078 = vrot.slane %v2070, %v2077
    %v2080 = vunpack.c.l.s4 1983009808
    %v2081 = vunpack.c.0.s8 %v2080
    %v2082 = vlaneseq
    %v2083 = vshrl.u32 %v2082, 7
    %v2084 = vsub.s32 %v2081, %v2083
    %v2085 = vrot.slane %v2071, %v2084
    %v2086 = vcombine.low %v2078, %v2085
    %v2087 = vcombine.low %v1978, %v1979
    %v2088 = vcombine.low %v1980, %v1981
    %v2090 = vunpack.c.l.s4 1983009808
    %v2091 = vunpack.c.0.s8 %v2090
    %v2092 = vlaneseq
    %v2093 = vshrl.u32 %v2092, 7
    %v2094 = vsub.s32 %v2091, %v2093
    %v2095 = vrot.slane %v2087, %v2094
    %v2097 = vunpack.c.l.s4 1983009808
    %v2098 = vunpack.c.0.s8 %v2097
    %v2099 = vlaneseq
    %v2100 = vshrl.u32 %v2099, 7
    %v2101 = vsub.s32 %v2098, %v2100
    %v2102 = vrot.slane %v2088, %v2101
    %v2103 = vcombine.low %v2095, %v2102
    %v2114 = vadd.f32 %v1520, %v2030
    %v2115 = vadd.f32 %v1556, %v2066
    %v2116 = vadd.f32 %v1521, %v2031
    %v2117 = vadd.f32 %v1557, %v2067
    %v2118 = vadd.f32 %v1522, %v2032
    %v2119 = vadd.f32 %v1558, %v2068
    %v2120 = vadd.f32 %v1523, %v2033
    %v2121 = vadd.f32 %v1559, %v2069
    %v2122 = vadd.f32 %v1592, %v2086
    %v2123 = vadd.f32 %v1628, %v2103
    %v2124 = vadd.f32 %v1593, %v2030
    %v2125 = vadd.f32 %v1629, %v2066
    %v2126 = vadd.f32 %v1594, %v2031
    %v2127 = vadd.f32 %v1630, %v2067
    %v2128 = vadd.f32 %v1595, %v2032
    %v2129 = vadd.f32 %v1631, %v2068
    %v2130 = vadd.f32 %v1664, %v2033
    %v2131 = vadd.f32 %v1700, %v2069
    %v2132 = vadd.f32 %v1665, %v2086
    %v2133 = vadd.f32 %v1701, %v2103
    %v2134 = vadd.f32 %v1666, %v2030
    %v2135 = vadd.f32 %v1702, %v2066
    %v2136 = vadd.f32 %v1667, %v2031
    %v2137 = vadd.f32 %v1703, %v2067
    %v2138 = vadd.f32 %v1736, %v2032
    %v2139 = vadd.f32 %v1772, %v2068
    %v2140 = vadd.f32 %v1737, %v2033
    %v2141 = vadd.f32 %v1773, %v2069
    %v2142 = vadd.f32 %v1738, %v2086
    %v2143 = vadd.f32 %v1774, %v2103
    %v2144 = vadd.f32 %v1739, %v2030
    %v2145 = vadd.f32 %v1775, %v2066
    %v2146 = vadd.f32 %v1808, %v2031
    %v2147 = vadd.f32 %v1844, %v2067
    %v2148 = vadd.f32 %v1809, %v2032
    %v2149 = vadd.f32 %v1845, %v2068
    %v2150 = vadd.f32 %v1810, %v2033
    %v2151 = vadd.f32 %v1846, %v2069
    %v2152 = vadd.f32 %v1811, %v2086
    %v2153 = vadd.f32 %v1847, %v2103
    %v2194 = vcombine.low %v2114, %v2116
    %v2195 = vcombine.high %v2114, %v2116
    %v2196 = vcombine.low %v2118, %v2120
    %v2197 = vcombine.high %v2118, %v2120
    %v2199 = vunpack.c.l.s4 1983009808
    %v2200 = vunpack.c.0.s8 %v2199
    %v2201 = vlaneseq
    %v2202 = vshrl.u32 %v2201, 7
    %v2203 = vsub.s32 %v2200, %v2202
    %v2204 = vrot.slane %v2194, %v2203
    %v2206 = vunpack.c.l.s4 1983009808
    %v2207 = vunpack.c.0.s8 %v2206
    %v2208 = vlaneseq
    %v2209 = vshrl.u32 %v2208, 7
    %v2210 = vsub.s32 %v2207, %v2209
    %v2211 = vrot.slane %v2195, %v2210
    %v2213 = vunpack.c.l.s4 1983009808
    %v2214 = vunpack.c.0.s8 %v2213
    %v2215 = vlaneseq
    %v2216 = vshrl.u32 %v2215, 7
    %v2217 = vsub.s32 %v2214, %v2216
    %v2218 = vrot.slane %v2196, %v2217
    %v2220 = vunpack.c.l.s4 1983009808
    %v2221 = vunpack.c.0.s8 %v2220
    %v2222 = vlaneseq
    %v2223 = vshrl.u32 %v2222, 7
    %v2224 = vsub.s32 %v2221, %v2223
    %v2225 = vrot.slane %v2197, %v2224
    %v2226 = vcombine.low %v2204, %v2218
    %v2227 = vcombine.high %v2204, %v2218
    %v2228 = vcombine.low %v2211, %v2225
    %v2229 = vcombine.high %v2211, %v2225
    %v2230 = vcombine.low %v2115, %v2117
    %v2231 = vcombine.high %v2115, %v2117
    %v2232 = vcombine.low %v2119, %v2121
    %v2233 = vcombine.high %v2119, %v2121
    %v2235 = vunpack.c.l.s4 1983009808
    %v2236 = vunpack.c.0.s8 %v2235
    %v2237 = vlaneseq
    %v2238 = vshrl.u32 %v2237, 7
    %v2239 = vsub.s32 %v2236, %v2238
    %v2240 = vrot.slane %v2230, %v2239
    %v2242 = vunpack.c.l.s4 1983009808
    %v2243 = vunpack.c.0.s8 %v2242
    %v2244 = vlaneseq
    %v2245 = vshrl.u32 %v2244, 7
    %v2246 = vsub.s32 %v2243, %v2245
    %v2247 = vrot.slane %v2231, %v2246
    %v2249 = vunpack.c.l.s4 1983009808
    %v2250 = vunpack.c.0.s8 %v2249
    %v2251 = vlaneseq
    %v2252 = vshrl.u32 %v2251, 7
    %v2253 = vsub.s32 %v2250, %v2252
    %v2254 = vrot.slane %v2232, %v2253
    %v2256 = vunpack.c.l.s4 1983009808
    %v2257 = vunpack.c.0.s8 %v2256
    %v2258 = vlaneseq
    %v2259 = vshrl.u32 %v2258, 7
    %v2260 = vsub.s32 %v2257, %v2259
    %v2261 = vrot.slane %v2233, %v2260
    %v2262 = vcombine.low %v2240, %v2254
    %v2263 = vcombine.high %v2240, %v2254
    %v2264 = vcombine.low %v2247, %v2261
    %v2265 = vcombine.high %v2247, %v2261
    %v2266 = vcombine.high %v2122, %v2122
    %v2268 = vunpack.c.l.s4 1983009808
    %v2269 = vunpack.c.0.s8 %v2268
    %v2270 = vlaneseq
    %v2271 = vshrl.u32 %v2270, 7
    %v2272 = vsub.s32 %v2269, %v2271
    %v2273 = vrot.slane %v2122, %v2272
    %v2275 = vunpack.c.l.s4 1983009808
    %v2276 = vunpack.c.0.s8 %v2275
    %v2277 = vlaneseq
    %v2278 = vshrl.u32 %v2277, 7
    %v2279 = vsub.s32 %v2276, %v2278
    %v2280 = vrot.slane %v2266, %v2279
    %v2281 = vcombine.high %v2273, %v2273
    %v2282 = vcombine.high %v2280, %v2280
    %v2283 = vcombine.high %v2123, %v2123
    %v2285 = vunpack.c.l.s4 1983009808
    %v2286 = vunpack.c.0.s8 %v2285
    %v2287 = vlaneseq
    %v2288 = vshrl.u32 %v2287, 7
    %v2289 = vsub.s32 %v2286, %v2288
    %v2290 = vrot.slane %v2123, %v2289
    %v2292 = vunpack.c.l.s4 1983009808
    %v2293 = vunpack.c.0.s8 %v2292
    %v2294 = vlaneseq
    %v2295 = vshrl.u32 %v2294, 7
    %v2296 = vsub.s32 %v2293, %v2295
    %v2297 = vrot.slane %v2283, %v2296
    %v2298 = vcombine.high %v2290, %v2290
    %v2299 = vcombine.high %v2297, %v2297
    %v2300 = vcombine.low %v2124, %v2126
    %v2301 = vcombine.high %v2124, %v2126
    %v2302 = vcombine.low %v2128, %v2130
    %v2303 = vcombine.high %v2128, %v2130
    %v2305 = vunpack.c.l.s4 1983009808
    %v2306 = vunpack.c.0.s8 %v2305
    %v2307 = vlaneseq
    %v2308 = vshrl.u32 %v2307, 7
    %v2309 = vsub.s32 %v2306, %v2308
    %v2310 = vrot.slane %v2300, %v2309
    %v2312 = vunpack.c.l.s4 1983009808
    %v2313 = vunpack.c.0.s8 %v2312
    %v2314 = vlaneseq
    %v2315 = vshrl.u32 %v2314, 7
    %v2316 = vsub.s32 %v2313, %v2315
    %v2317 = vrot.slane %v2301, %v2316
    %v2319 = vunpack.c.l.s4 1983009808
    %v2320 = vunpack.c.0.s8 %v2319
    %v2321 = vlaneseq
    %v2322 = vshrl.u32 %v2321, 7
    %v2323 = vsub.s32 %v2320, %v2322
    %v2324 = vrot.slane %v2302, %v2323
    %v2326 = vunpack.c.l.s4 1983009808
    %v2327 = vunpack.c.0.s8 %v2326
    %v2328 = vlaneseq
    %v2329 = vshrl.u32 %v2328, 7
    %v2330 = vsub.s32 %v2327, %v2329
    %v2331 = vrot.slane %v2303, %v2330
    %v2332 = vcombine.low %v2310, %v2324
    %v2333 = vcombine.high %v2310, %v2324
    %v2334 = vcombine.low %v2317, %v2331
    %v2335 = vcombine.high %v2317, %v2331
    %v2336 = vcombine.low %v2125, %v2127
    %v2337 = vcombine.high %v2125, %v2127
    %v2338 = vcombine.low %v2129, %v2131
    %v2339 = vcombine.high %v2129, %v2131
    %v2341 = vunpack.c.l.s4 1983009808
    %v2342 = vunpack.c.0.s8 %v2341
    %v2343 = vlaneseq
    %v2344 = vshrl.u32 %v2343, 7
    %v2345 = vsub.s32 %v2342, %v2344
    %v2346 = vrot.slane %v2336, %v2345
    %v2348 = vunpack.c.l.s4 1983009808
    %v2349 = vunpack.c.0.s8 %v2348
    %v2350 = vlaneseq
    %v2351 = vshrl.u32 %v2350, 7
    %v2352 = vsub.s32 %v2349, %v2351
    %v2353 = vrot.slane %v2337, %v2352
    %v2355 = vunpack.c.l.s4 1983009808
    %v2356 = vunpack.c.0.s8 %v2355
    %v2357 = vlaneseq
    %v2358 = vshrl.u32 %v2357, 7
    %v2359 = vsub.s32 %v2356, %v2358
    %v2360 = vrot.slane %v2338, %v2359
    %v2362 = vunpack.c.l.s4 1983009808
    %v2363 = vunpack.c.0.s8 %v2362
    %v2364 = vlaneseq
    %v2365 = vshrl.u32 %v2364, 7
    %v2366 = vsub.s32 %v2363, %v2365
    %v2367 = vrot.slane %v2339, %v2366
    %v2368 = vcombine.low %v2346, %v2360
    %v2369 = vcombine.high %v2346, %v2360
    %v2370 = vcombine.low %v2353, %v2367
    %v2371 = vcombine.high %v2353, %v2367
    %v2372 = vcombine.high %v2132, %v2132
    %v2374 = vunpack.c.l.s4 1983009808
    %v2375 = vunpack.c.0.s8 %v2374
    %v2376 = vlaneseq
    %v2377 = vshrl.u32 %v2376, 7
    %v2378 = vsub.s32 %v2375, %v2377
    %v2379 = vrot.slane %v2132, %v2378
    %v2381 = vunpack.c.l.s4 1983009808
    %v2382 = vunpack.c.0.s8 %v2381
    %v2383 = vlaneseq
    %v2384 = vshrl.u32 %v2383, 7
    %v2385 = vsub.s32 %v2382, %v2384
    %v2386 = vrot.slane %v2372, %v2385
    %v2387 = vcombine.high %v2379, %v2379
    %v2388 = vcombine.high %v2386, %v2386
    %v2389 = vcombine.high %v2133, %v2133
    %v2391 = vunpack.c.l.s4 1983009808
    %v2392 = vunpack.c.0.s8 %v2391
    %v2393 = vlaneseq
    %v2394 = vshrl.u32 %v2393, 7
    %v2395 = vsub.s32 %v2392, %v2394
    %v2396 = vrot.slane %v2133, %v2395
    %v2398 = vunpack.c.l.s4 1983009808
    %v2399 = vunpack.c.0.s8 %v2398
    %v2400 = vlaneseq
    %v2401 = vshrl.u32 %v2400, 7
    %v2402 = vsub.s32 %v2399, %v2401
    %v2403 = vrot.slane %v2389, %v2402
    %v2404 = vcombine.high %v2396, %v2396
    %v2405 = vcombine.high %v2403, %v2403
    %v2406 = vcombine.low %v2134, %v2136
    %v2407 = vcombine.high %v2134, %v2136
    %v2408 = vcombine.low %v2138, %v2140
    %v2409 = vcombine.high %v2138, %v2140
    %v2411 = vunpack.c.l.s4 1983009808
    %v2412 = vunpack.c.0.s8 %v2411
    %v2413 = vlaneseq
    %v2414 = vshrl.u32 %v2413, 7
    %v2415 = vsub.s32 %v2412, %v2414
    %v2416 = vrot.slane %v2406, %v2415
    %v2418 = vunpack.c.l.s4 1983009808
    %v2419 = vunpack.c.0.s8 %v2418
    %v2420 = vlaneseq
    %v2421 = vshrl.u32 %v2420, 7
    %v2422 = vsub.s32 %v2419, %v2421
    %v2423 = vrot.slane %v2407, %v2422
    %v2425 = vunpack.c.l.s4 1983009808
    %v2426 = vunpack.c.0.s8 %v2425
    %v2427 = vlaneseq
    %v2428 = vshrl.u32 %v2427, 7
    %v2429 = vsub.s32 %v2426, %v2428
    %v2430 = vrot.slane %v2408, %v2429
    %v2432 = vunpack.c.l.s4 1983009808
    %v2433 = vunpack.c.0.s8 %v2432
    %v2434 = vlaneseq
    %v2435 = vshrl.u32 %v2434, 7
    %v2436 = vsub.s32 %v2433, %v2435
    %v2437 = vrot.slane %v2409, %v2436
    %v2438 = vcombine.low %v2416, %v2430
    %v2439 = vcombine.high %v2416, %v2430
    %v2440 = vcombine.low %v2423, %v2437
    %v2441 = vcombine.high %v2423, %v2437
    %v2442 = vcombine.low %v2135, %v2137
    %v2443 = vcombine.high %v2135, %v2137
    %v2444 = vcombine.low %v2139, %v2141
    %v2445 = vcombine.high %v2139, %v2141
    %v2447 = vunpack.c.l.s4 1983009808
    %v2448 = vunpack.c.0.s8 %v2447
    %v2449 = vlaneseq
    %v2450 = vshrl.u32 %v2449, 7
    %v2451 = vsub.s32 %v2448, %v2450
    %v2452 = vrot.slane %v2442, %v2451
    %v2454 = vunpack.c.l.s4 1983009808
    %v2455 = vunpack.c.0.s8 %v2454
    %v2456 = vlaneseq
    %v2457 = vshrl.u32 %v2456, 7
    %v2458 = vsub.s32 %v2455, %v2457
    %v2459 = vrot.slane %v2443, %v2458
    %v2461 = vunpack.c.l.s4 1983009808
    %v2462 = vunpack.c.0.s8 %v2461
    %v2463 = vlaneseq
    %v2464 = vshrl.u32 %v2463, 7
    %v2465 = vsub.s32 %v2462, %v2464
    %v2466 = vrot.slane %v2444, %v2465
    %v2468 = vunpack.c.l.s4 1983009808
    %v2469 = vunpack.c.0.s8 %v2468
    %v2470 = vlaneseq
    %v2471 = vshrl.u32 %v2470, 7
    %v2472 = vsub.s32 %v2469, %v2471
    %v2473 = vrot.slane %v2445, %v2472
    %v2474 = vcombine.low %v2452, %v2466
    %v2475 = vcombine.high %v2452, %v2466
    %v2476 = vcombine.low %v2459, %v2473
    %v2477 = vcombine.high %v2459, %v2473
    %v2478 = vcombine.high %v2142, %v2142
    %v2480 = vunpack.c.l.s4 1983009808
    %v2481 = vunpack.c.0.s8 %v2480
    %v2482 = vlaneseq
    %v2483 = vshrl.u32 %v2482, 7
    %v2484 = vsub.s32 %v2481, %v2483
    %v2485 = vrot.slane %v2142, %v2484
    %v2487 = vunpack.c.l.s4 1983009808
    %v2488 = vunpack.c.0.s8 %v2487
    %v2489 = vlaneseq
    %v2490 = vshrl.u32 %v2489, 7
    %v2491 = vsub.s32 %v2488, %v2490
    %v2492 = vrot.slane %v2478, %v2491
    %v2493 = vcombine.high %v2485, %v2485
    %v2494 = vcombine.high %v2492, %v2492
    %v2495 = vcombine.high %v2143, %v2143
    %v2497 = vunpack.c.l.s4 1983009808
    %v2498 = vunpack.c.0.s8 %v2497
    %v2499 = vlaneseq
    %v2500 = vshrl.u32 %v2499, 7
    %v2501 = vsub.s32 %v2498, %v2500
    %v2502 = vrot.slane %v2143, %v2501
    %v2504 = vunpack.c.l.s4 1983009808
    %v2505 = vunpack.c.0.s8 %v2504
    %v2506 = vlaneseq
    %v2507 = vshrl.u32 %v2506, 7
    %v2508 = vsub.s32 %v2505, %v2507
    %v2509 = vrot.slane %v2495, %v2508
    %v2510 = vcombine.high %v2502, %v2502
    %v2511 = vcombine.high %v2509, %v2509
    %v2512 = vcombine.low %v2144, %v2146
    %v2513 = vcombine.high %v2144, %v2146
    %v2514 = vcombine.low %v2148, %v2150
    %v2515 = vcombine.high %v2148, %v2150
    %v2517 = vunpack.c.l.s4 1983009808
    %v2518 = vunpack.c.0.s8 %v2517
    %v2519 = vlaneseq
    %v2520 = vshrl.u32 %v2519, 7
    %v2521 = vsub.s32 %v2518, %v2520
    %v2522 = vrot.slane %v2512, %v2521
    %v2524 = vunpack.c.l.s4 1983009808
    %v2525 = vunpack.c.0.s8 %v2524
    %v2526 = vlaneseq
    %v2527 = vshrl.u32 %v2526, 7
    %v2528 = vsub.s32 %v2525, %v2527
    %v2529 = vrot.slane %v2513, %v2528
    %v2531 = vunpack.c.l.s4 1983009808
    %v2532 = vunpack.c.0.s8 %v2531
    %v2533 = vlaneseq
    %v2534 = vshrl.u32 %v2533, 7
    %v2535 = vsub.s32 %v2532, %v2534
    %v2536 = vrot.slane %v2514, %v2535
    %v2538 = vunpack.c.l.s4 1983009808
    %v2539 = vunpack.c.0.s8 %v2538
    %v2540 = vlaneseq
    %v2541 = vshrl.u32 %v2540, 7
    %v2542 = vsub.s32 %v2539, %v2541
    %v2543 = vrot.slane %v2515, %v2542
    %v2544 = vcombine.low %v2522, %v2536
    %v2545 = vcombine.high %v2522, %v2536
    %v2546 = vcombine.low %v2529, %v2543
    %v2547 = vcombine.high %v2529, %v2543
    %v2548 = vcombine.low %v2145, %v2147
    %v2549 = vcombine.high %v2145, %v2147
    %v2550 = vcombine.low %v2149, %v2151
    %v2551 = vcombine.high %v2149, %v2151
    %v2553 = vunpack.c.l.s4 1983009808
    %v2554 = vunpack.c.0.s8 %v2553
    %v2555 = vlaneseq
    %v2556 = vshrl.u32 %v2555, 7
    %v2557 = vsub.s32 %v2554, %v2556
    %v2558 = vrot.slane %v2548, %v2557
    %v2560 = vunpack.c.l.s4 1983009808
    %v2561 = vunpack.c.0.s8 %v2560
    %v2562 = vlaneseq
    %v2563 = vshrl.u32 %v2562, 7
    %v2564 = vsub.s32 %v2561, %v2563
    %v2565 = vrot.slane %v2549, %v2564
    %v2567 = vunpack.c.l.s4 1983009808
    %v2568 = vunpack.c.0.s8 %v2567
    %v2569 = vlaneseq
    %v2570 = vshrl.u32 %v2569, 7
    %v2571 = vsub.s32 %v2568, %v2570
    %v2572 = vrot.slane %v2550, %v2571
    %v2574 = vunpack.c.l.s4 1983009808
    %v2575 = vunpack.c.0.s8 %v2574
    %v2576 = vlaneseq
    %v2577 = vshrl.u32 %v2576, 7
    %v2578 = vsub.s32 %v2575, %v2577
    %v2579 = vrot.slane %v2551, %v2578
    %v2580 = vcombine.low %v2558, %v2572
    %v2581 = vcombine.high %v2558, %v2572
    %v2582 = vcombine.low %v2565, %v2579
    %v2583 = vcombine.high %v2565, %v2579
    %v2584 = vcombine.high %v2152, %v2152
    %v2586 = vunpack.c.l.s4 1983009808
    %v2587 = vunpack.c.0.s8 %v2586
    %v2588 = vlaneseq
    %v2589 = vshrl.u32 %v2588, 7
    %v2590 = vsub.s32 %v2587, %v2589
    %v2591 = vrot.slane %v2152, %v2590
    %v2593 = vunpack.c.l.s4 1983009808
    %v2594 = vunpack.c.0.s8 %v2593
    %v2595 = vlaneseq
    %v2596 = vshrl.u32 %v2595, 7
    %v2597 = vsub.s32 %v2594, %v2596
    %v2598 = vrot.slane %v2584, %v2597
    %v2599 = vcombine.high %v2591, %v2591
    %v2600 = vcombine.high %v2598, %v2598
    %v2601 = vcombine.high %v2153, %v2153
    %v2603 = vunpack.c.l.s4 1983009808
    %v2604 = vunpack.c.0.s8 %v2603
    %v2605 = vlaneseq
    %v2606 = vshrl.u32 %v2605, 7
    %v2607 = vsub.s32 %v2604, %v2606
    %v2608 = vrot.slane %v2153, %v2607
    %v2610 = vunpack.c.l.s4 1983009808
    %v2611 = vunpack.c.0.s8 %v2610
    %v2612 = vlaneseq
    %v2613 = vshrl.u32 %v2612, 7
    %v2614 = vsub.s32 %v2611, %v2613
    %v2615 = vrot.slane %v2601, %v2614
    %v2616 = vcombine.high %v2608, %v2608
    %v2617 = vcombine.high %v2615, %v2615
    %vm2682 = vcmask 1041408
    %v2683 = vsel %vm2682, %v2273, -inf
    %v2684 = vmax.f32 %v2226, %v2683
    %v2685 = vrot.slane %v2684, 4
    %v2686 = vmax.f32 %v2684, %v2685
    %v2687 = vrot.slane %v2686, 2
    %v2688 = vmax.f32 %v2686, %v2687
    %v2689 = vrot.slane %v2688, 1
    %v2690 = vmax.f32 %v2688, %v2689
    %v2691 = vsel %vm2682, %v2281, -inf
    %v2692 = vmax.f32 %v2227, %v2691
    %v2693 = vrot.slane %v2692, 4
    %v2694 = vmax.f32 %v2692, %v2693
    %v2695 = vrot.slane %v2694, 2
    %v2696 = vmax.f32 %v2694, %v2695
    %v2697 = vrot.slane %v2696, 1
    %v2698 = vmax.f32 %v2696, %v2697
    %v2699 = vsel %vm2682, %v2280, -inf
    %v2700 = vmax.f32 %v2228, %v2699
    %v2701 = vrot.slane %v2700, 4
    %v2702 = vmax.f32 %v2700, %v2701
    %v2703 = vrot.slane %v2702, 2
    %v2704 = vmax.f32 %v2702, %v2703
    %v2705 = vrot.slane %v2704, 1
    %v2706 = vmax.f32 %v2704, %v2705
    %v2707 = vsel %vm2682, %v2282, -inf
    %v2708 = vmax.f32 %v2229, %v2707
    %v2709 = vrot.slane %v2708, 4
    %v2710 = vmax.f32 %v2708, %v2709
    %v2711 = vrot.slane %v2710, 2
    %v2712 = vmax.f32 %v2710, %v2711
    %v2713 = vrot.slane %v2712, 1
    %v2714 = vmax.f32 %v2712, %v2713
    %v2715 = vsel %vm2682, %v2290, -inf
    %v2716 = vmax.f32 %v2262, %v2715
    %v2717 = vrot.slane %v2716, 4
    %v2718 = vmax.f32 %v2716, %v2717
    %v2719 = vrot.slane %v2718, 2
    %v2720 = vmax.f32 %v2718, %v2719
    %v2721 = vrot.slane %v2720, 1
    %v2722 = vmax.f32 %v2720, %v2721
    %v2723 = vsel %vm2682, %v2298, -inf
    %v2724 = vmax.f32 %v2263, %v2723
    %v2725 = vrot.slane %v2724, 4
    %v2726 = vmax.f32 %v2724, %v2725
    %v2727 = vrot.slane %v2726, 2
    %v2728 = vmax.f32 %v2726, %v2727
    %v2729 = vrot.slane %v2728, 1
    %v2730 = vmax.f32 %v2728, %v2729
    %v2731 = vsel %vm2682, %v2297, -inf
    %v2732 = vmax.f32 %v2264, %v2731
    %v2733 = vrot.slane %v2732, 4
    %v2734 = vmax.f32 %v2732, %v2733
    %v2735 = vrot.slane %v2734, 2
    %v2736 = vmax.f32 %v2734, %v2735
    %v2737 = vrot.slane %v2736, 1
    %v2738 = vmax.f32 %v2736, %v2737
    %vm2739 = vcmask 31744
    %v2740 = vsel %vm2739, %v2265, -inf
    %vm2741 = vcmask 25600
    %v2742 = vsel %vm2741, %v2299, -inf
    %v2743 = vmax.f32 %v2740, %v2742
    %v2744 = vrot.slane %v2743, 4
    %v2745 = vmax.f32 %v2743, %v2744
    %v2746 = vrot.slane %v2745, 2
    %v2747 = vmax.f32 %v2745, %v2746
    %v2748 = vrot.slane %v2747, 1
    %v2749 = vmax.f32 %v2747, %v2748
    %v2750 = vsel %vm2682, %v2379, -inf
    %v2751 = vmax.f32 %v2332, %v2750
    %v2752 = vrot.slane %v2751, 4
    %v2753 = vmax.f32 %v2751, %v2752
    %v2754 = vrot.slane %v2753, 2
    %v2755 = vmax.f32 %v2753, %v2754
    %v2756 = vrot.slane %v2755, 1
    %v2757 = vmax.f32 %v2755, %v2756
    %v2758 = vsel %vm2682, %v2387, -inf
    %v2759 = vmax.f32 %v2333, %v2758
    %v2760 = vrot.slane %v2759, 4
    %v2761 = vmax.f32 %v2759, %v2760
    %v2762 = vrot.slane %v2761, 2
    %v2763 = vmax.f32 %v2761, %v2762
    %v2764 = vrot.slane %v2763, 1
    %v2765 = vmax.f32 %v2763, %v2764
    %v2766 = vsel %vm2682, %v2386, -inf
    %v2767 = vmax.f32 %v2334, %v2766
    %v2768 = vrot.slane %v2767, 4
    %v2769 = vmax.f32 %v2767, %v2768
    %v2770 = vrot.slane %v2769, 2
    %v2771 = vmax.f32 %v2769, %v2770
    %v2772 = vrot.slane %v2771, 1
    %v2773 = vmax.f32 %v2771, %v2772
    %v2774 = vsel %vm2682, %v2388, -inf
    %v2775 = vmax.f32 %v2335, %v2774
    %v2776 = vrot.slane %v2775, 4
    %v2777 = vmax.f32 %v2775, %v2776
    %v2778 = vrot.slane %v2777, 2
    %v2779 = vmax.f32 %v2777, %v2778
    %v2780 = vrot.slane %v2779, 1
    %v2781 = vmax.f32 %v2779, %v2780
    %v2782 = vsel %vm2682, %v2396, -inf
    %v2783 = vmax.f32 %v2368, %v2782
    %v2784 = vrot.slane %v2783, 4
    %v2785 = vmax.f32 %v2783, %v2784
    %v2786 = vrot.slane %v2785, 2
    %v2787 = vmax.f32 %v2785, %v2786
    %v2788 = vrot.slane %v2787, 1
    %v2789 = vmax.f32 %v2787, %v2788
    %v2790 = vsel %vm2682, %v2404, -inf
    %v2791 = vmax.f32 %v2369, %v2790
    %v2792 = vrot.slane %v2791, 4
    %v2793 = vmax.f32 %v2791, %v2792
    %v2794 = vrot.slane %v2793, 2
    %v2795 = vmax.f32 %v2793, %v2794
    %v2796 = vrot.slane %v2795, 1
    %v2797 = vmax.f32 %v2795, %v2796
    %v2798 = vsel %vm2682, %v2403, -inf
    %v2799 = vmax.f32 %v2370, %v2798
    %v2800 = vrot.slane %v2799, 4
    %v2801 = vmax.f32 %v2799, %v2800
    %v2802 = vrot.slane %v2801, 2
    %v2803 = vmax.f32 %v2801, %v2802
    %v2804 = vrot.slane %v2803, 1
    %v2805 = vmax.f32 %v2803, %v2804
    %v2806 = vsel %vm2739, %v2371, -inf
    %v2807 = vsel %vm2741, %v2405, -inf
    %v2808 = vmax.f32 %v2806, %v2807
    %v2809 = vrot.slane %v2808, 4
    %v2810 = vmax.f32 %v2808, %v2809
    %v2811 = vrot.slane %v2810, 2
    %v2812 = vmax.f32 %v2810, %v2811
    %v2813 = vrot.slane %v2812, 1
    %v2814 = vmax.f32 %v2812, %v2813
    %v2815 = vsel %vm2682, %v2485, -inf
    %v2816 = vmax.f32 %v2438, %v2815
    %v2817 = vrot.slane %v2816, 4
    %v2818 = vmax.f32 %v2816, %v2817
    %v2819 = vrot.slane %v2818, 2
    %v2820 = vmax.f32 %v2818, %v2819
    %v2821 = vrot.slane %v2820, 1
    %v2822 = vmax.f32 %v2820, %v2821
    %v2823 = vsel %vm2682, %v2493, -inf
    %v2824 = vmax.f32 %v2439, %v2823
    %v2825 = vrot.slane %v2824, 4
    %v2826 = vmax.f32 %v2824, %v2825
    %v2827 = vrot.slane %v2826, 2
    %v2828 = vmax.f32 %v2826, %v2827
    %v2829 = vrot.slane %v2828, 1
    %v2830 = vmax.f32 %v2828, %v2829
    %v2831 = vsel %vm2682, %v2492, -inf
    %v2832 = vmax.f32 %v2440, %v2831
    %v2833 = vrot.slane %v2832, 4
    %v2834 = vmax.f32 %v2832, %v2833
    %v2835 = vrot.slane %v2834, 2
    %v2836 = vmax.f32 %v2834, %v2835
    %v2837 = vrot.slane %v2836, 1
    %v2838 = vmax.f32 %v2836, %v2837
    %v2839 = vsel %vm2682, %v2494, -inf
    %v2840 = vmax.f32 %v2441, %v2839
    %v2841 = vrot.slane %v2840, 4
    %v2842 = vmax.f32 %v2840, %v2841
    %v2843 = vrot.slane %v2842, 2
    %v2844 = vmax.f32 %v2842, %v2843
    %v2845 = vrot.slane %v2844, 1
    %v2846 = vmax.f32 %v2844, %v2845
    %v2847 = vsel %vm2682, %v2502, -inf
    %v2848 = vmax.f32 %v2474, %v2847
    %v2849 = vrot.slane %v2848, 4
    %v2850 = vmax.f32 %v2848, %v2849
    %v2851 = vrot.slane %v2850, 2
    %v2852 = vmax.f32 %v2850, %v2851
    %v2853 = vrot.slane %v2852, 1
    %v2854 = vmax.f32 %v2852, %v2853
    %v2855 = vsel %vm2682, %v2510, -inf
    %v2856 = vmax.f32 %v2475, %v2855
    %v2857 = vrot.slane %v2856, 4
    %v2858 = vmax.f32 %v2856, %v2857
    %v2859 = vrot.slane %v2858, 2
    %v2860 = vmax.f32 %v2858, %v2859
    %v2861 = vrot.slane %v2860, 1
    %v2862 = vmax.f32 %v2860, %v2861
    %v2863 = vsel %vm2682, %v2509, -inf
    %v2864 = vmax.f32 %v2476, %v2863
    %v2865 = vrot.slane %v2864, 4
    %v2866 = vmax.f32 %v2864, %v2865
    %v2867 = vrot.slane %v2866, 2
    %v2868 = vmax.f32 %v2866, %v2867
    %v2869 = vrot.slane %v2868, 1
    %v2870 = vmax.f32 %v2868, %v2869
    %v2871 = vsel %vm2739, %v2477, -inf
    %v2872 = vsel %vm2741, %v2511, -inf
    %v2873 = vmax.f32 %v2871, %v2872
    %v2874 = vrot.slane %v2873, 4
    %v2875 = vmax.f32 %v2873, %v2874
    %v2876 = vrot.slane %v2875, 2
    %v2877 = vmax.f32 %v2875, %v2876
    %v2878 = vrot.slane %v2877, 1
    %v2879 = vmax.f32 %v2877, %v2878
    %v2880 = vsel %vm2682, %v2591, -inf
    %v2881 = vmax.f32 %v2544, %v2880
    %v2882 = vrot.slane %v2881, 4
    %v2883 = vmax.f32 %v2881, %v2882
    %v2884 = vrot.slane %v2883, 2
    %v2885 = vmax.f32 %v2883, %v2884
    %v2886 = vrot.slane %v2885, 1
    %v2887 = vmax.f32 %v2885, %v2886
    %v2888 = vsel %vm2682, %v2599, -inf
    %v2889 = vmax.f32 %v2545, %v2888
    %v2890 = vrot.slane %v2889, 4
    %v2891 = vmax.f32 %v2889, %v2890
    %v2892 = vrot.slane %v2891, 2
    %v2893 = vmax.f32 %v2891, %v2892
    %v2894 = vrot.slane %v2893, 1
    %v2895 = vmax.f32 %v2893, %v2894
    %v2896 = vsel %vm2682, %v2598, -inf
    %v2897 = vmax.f32 %v2546, %v2896
    %v2898 = vrot.slane %v2897, 4
    %v2899 = vmax.f32 %v2897, %v2898
    %v2900 = vrot.slane %v2899, 2
    %v2901 = vmax.f32 %v2899, %v2900
    %v2902 = vrot.slane %v2901, 1
    %v2903 = vmax.f32 %v2901, %v2902
    %v2904 = vsel %vm2682, %v2600, -inf
    %v2905 = vmax.f32 %v2547, %v2904
    %v2906 = vrot.slane %v2905, 4
    %v2907 = vmax.f32 %v2905, %v2906
    %v2908 = vrot.slane %v2907, 2
    %v2909 = vmax.f32 %v2907, %v2908
    %v2910 = vrot.slane %v2909, 1
    %v2911 = vmax.f32 %v2909, %v2910
    %v2912 = vsel %vm2682, %v2608, -inf
    %v2913 = vmax.f32 %v2580, %v2912
    %v2914 = vrot.slane %v2913, 4
    %v2915 = vmax.f32 %v2913, %v2914
    %v2916 = vrot.slane %v2915, 2
    %v2917 = vmax.f32 %v2915, %v2916
    %v2918 = vrot.slane %v2917, 1
    %v2919 = vmax.f32 %v2917, %v2918
    %v2920 = vsel %vm2682, %v2616, -inf
    %v2921 = vmax.f32 %v2581, %v2920
    %v2922 = vrot.slane %v2921, 4
    %v2923 = vmax.f32 %v2921, %v2922
    %v2924 = vrot.slane %v2923, 2
    %v2925 = vmax.f32 %v2923, %v2924
    %v2926 = vrot.slane %v2925, 1
    %v2927 = vmax.f32 %v2925, %v2926
    %v2928 = vsel %vm2682, %v2615, -inf
    %v2929 = vmax.f32 %v2582, %v2928
    %v2930 = vrot.slane %v2929, 4
    %v2931 = vmax.f32 %v2929, %v2930
    %v2932 = vrot.slane %v2931, 2
    %v2933 = vmax.f32 %v2931, %v2932
    %v2934 = vrot.slane %v2933, 1
    %v2935 = vmax.f32 %v2933, %v2934
    %v2936 = vsel %vm2739, %v2583, -inf
    %v2937 = vsel %vm2741, %v2617, -inf
    %v2938 = vmax.f32 %v2936, %v2937
    %v2939 = vrot.slane %v2938, 4
    %v2940 = vmax.f32 %v2938, %v2939
    %v2941 = vrot.slane %v2940, 2
    %v2942 = vmax.f32 %v2940, %v2941
    %v2943 = vrot.slane %v2942, 1
    %v2944 = vmax.f32 %v2942, %v2943
    %v2945 = vld [vmem:[#allocation6] sm:$0xff]
    %v2947 = vlaneseq
    %v2948 = vshrl.u32 %v2947, 7
    %v2949 = vsub.s32 0, %v2948
    %v2950 = vrot.slane %v2945, %v2949
    %v2951 = vlaneseq
    %v2952 = vshrl.u32 %v2951, 7
    %v2953 = vsub.s32 1, %v2952
    %v2954 = vrot.slane %v2945, %v2953
    %v2955 = vlaneseq
    %v2956 = vshrl.u32 %v2955, 7
    %v2957 = vsub.s32 2, %v2956
    %v2958 = vrot.slane %v2945, %v2957
    %v2959 = vlaneseq
    %v2960 = vshrl.u32 %v2959, 7
    %v2961 = vsub.s32 3, %v2960
    %v2962 = vrot.slane %v2945, %v2961
    %v2963 = vlaneseq
    %v2964 = vshrl.u32 %v2963, 7
    %v2965 = vsub.s32 4, %v2964
    %v2966 = vrot.slane %v2945, %v2965
    %v2967 = vlaneseq
    %v2968 = vshrl.u32 %v2967, 7
    %v2969 = vsub.s32 5, %v2968
    %v2970 = vrot.slane %v2945, %v2969
    %v2971 = vlaneseq
    %v2972 = vshrl.u32 %v2971, 7
    %v2973 = vsub.s32 6, %v2972
    %v2974 = vrot.slane %v2945, %v2973
    %v2975 = vlaneseq
    %v2976 = vshrl.u32 %v2975, 7
    %v2977 = vsub.s32 7, %v2976
    %v2978 = vrot.slane %v2945, %v2977
    %v2987 = vadd.f32 %v2690, %v2950
    %v2988 = vadd.f32 %v2698, %v2954
    %v2989 = vadd.f32 %v2706, %v2958
    %v2990 = vadd.f32 %v2714, %v2962
    %v2991 = vadd.f32 %v2722, %v2966
    %v2992 = vadd.f32 %v2730, %v2970
    %v2993 = vadd.f32 %v2738, %v2974
    %v2994 = vadd.f32 %v2749, %v2978
    %v2995 = vadd.f32 %v2757, %v2950
    %v2996 = vadd.f32 %v2765, %v2954
    %v2997 = vadd.f32 %v2773, %v2958
    %v2998 = vadd.f32 %v2781, %v2962
    %v2999 = vadd.f32 %v2789, %v2966
    %v3000 = vadd.f32 %v2797, %v2970
    %v3001 = vadd.f32 %v2805, %v2974
    %v3002 = vadd.f32 %v2814, %v2978
    %v3003 = vadd.f32 %v2822, %v2950
    %v3004 = vadd.f32 %v2830, %v2954
    %v3005 = vadd.f32 %v2838, %v2958
    %v3006 = vadd.f32 %v2846, %v2962
    %v3007 = vadd.f32 %v2854, %v2966
    %v3008 = vadd.f32 %v2862, %v2970
    %v3009 = vadd.f32 %v2870, %v2974
    %v3010 = vadd.f32 %v2879, %v2978
    %v3011 = vadd.f32 %v2887, %v2950
    %v3012 = vadd.f32 %v2895, %v2954
    %v3013 = vadd.f32 %v2903, %v2958
    %v3014 = vadd.f32 %v2911, %v2962
    %v3015 = vadd.f32 %v2919, %v2966
    %v3016 = vadd.f32 %v2927, %v2970
    %v3017 = vadd.f32 %v2935, %v2974
    %v3018 = vadd.f32 %v2944, %v2978
    %v3019 = vpack.c.bf16 %v2987, %v2987
    %v3020 = vpack.c.bf16 %v2988, %v2988
    %v3021 = vpack.c.bf16 %v2989, %v2989
    %v3022 = vpack.c.bf16 %v2990, %v2990
    %v3023 = vpack.c.bf16 %v2991, %v2991
    %v3024 = vpack.c.bf16 %v2992, %v2992
    %v3025 = vpack.c.bf16 %v2993, %v2993
    %v3026 = vpack.c.bf16 %v2994, %v2994
    %v3027 = vpack.c.bf16 %v2995, %v2995
    %v3028 = vpack.c.bf16 %v2996, %v2996
    %v3029 = vpack.c.bf16 %v2997, %v2997
    %v3030 = vpack.c.bf16 %v2998, %v2998
    %v3031 = vpack.c.bf16 %v2999, %v2999
    %v3032 = vpack.c.bf16 %v3000, %v3000
    %v3033 = vpack.c.bf16 %v3001, %v3001
    %v3034 = vpack.c.bf16 %v3002, %v3002
    %v3035 = vpack.c.bf16 %v3003, %v3003
    %v3036 = vpack.c.bf16 %v3004, %v3004
    %v3037 = vpack.c.bf16 %v3005, %v3005
    %v3038 = vpack.c.bf16 %v3006, %v3006
    %v3039 = vpack.c.bf16 %v3007, %v3007
    %v3040 = vpack.c.bf16 %v3008, %v3008
    %v3041 = vpack.c.bf16 %v3009, %v3009
    %v3042 = vpack.c.bf16 %v3010, %v3010
    %v3043 = vpack.c.bf16 %v3011, %v3011
    %v3044 = vpack.c.bf16 %v3012, %v3012
    %v3045 = vpack.c.bf16 %v3013, %v3013
    %v3046 = vpack.c.bf16 %v3014, %v3014
    %v3047 = vpack.c.bf16 %v3015, %v3015
    %v3048 = vpack.c.bf16 %v3016, %v3016
    %v3049 = vpack.c.bf16 %v3017, %v3017
    %v3050 = vpack.c.bf16 %v3018, %v3018
    %v3051 = vld [vmem:[#allocation8] sm:$0xff]
    %v3052 = vld [vmem:[#allocation8 + $0x8] sm:$0xff]
    %v3053 = vld [vmem:[#allocation8 + $0x10] sm:$0xf]
    %v3054 = vld [vmem:[#allocation8 + $0x14] sm:$0xff]
    %v3055 = vld [vmem:[#allocation8 + $0x1c] sm:$0xff]
    %v3056 = vld [vmem:[#allocation8 + $0x24] sm:$0xf]
    %v3057 = vld [vmem:[#allocation8 + $0x28] sm:$0xff]
    %v3058 = vld [vmem:[#allocation8 + $0x30] sm:$0xff]
    %v3059 = vld [vmem:[#allocation8 + $0x38] sm:$0xf]
    %v3060 = vld [vmem:[#allocation8 + $0x3c] sm:$0xff]
    %v3061 = vld [vmem:[#allocation8 + $0x44] sm:$0xff]
    %v3062 = vld [vmem:[#allocation8 + $0x4c] sm:$0xf]
    %v3063 = vld [vmem:[#allocation8 + $0x50] sm:$0xff]
    %v3064 = vld [vmem:[#allocation8 + $0x58] sm:$0xff]
    %v3065 = vld [vmem:[#allocation8 + $0x60] sm:$0xf]
    %v3066 = vld [vmem:[#allocation8 + $0x64] sm:$0xff]
    %v3067 = vld [vmem:[#allocation8 + $0x6c] sm:$0xff]
    %v3068 = vld [vmem:[#allocation8 + $0x74] sm:$0xf]
    %v3069 = vld [vmem:[#allocation8 + $0x78] sm:$0xff]
    %v3070 = vld [vmem:[#allocation8 + $0x80] sm:$0xff]
    %v3071 = vld [vmem:[#allocation8 + $0x88] sm:$0xf]
    %v3072 = vld [vmem:[#allocation8 + $0x8c] sm:$0xff]
    %v3073 = vld [vmem:[#allocation8 + $0x94] sm:$0xff]
    %v3074 = vld [vmem:[#allocation8 + $0x9c] sm:$0xf]
    %v3075 = vld [vmem:[#allocation8 + $0xa0] sm:$0xff]
    %v3076 = vld [vmem:[#allocation8 + $0xa8] sm:$0xff]
    %v3077 = vld [vmem:[#allocation8 + $0xb0] sm:$0xf]
    %v3078 = vld [vmem:[#allocation8 + $0xb4] sm:$0xff]
    %v3079 = vld [vmem:[#allocation8 + $0xbc] sm:$0xff]
    %v3080 = vld [vmem:[#allocation8 + $0xc4] sm:$0xf]
    %v3081 = vld [vmem:[#allocation8 + $0xc8] sm:$0xff]
    %v3082 = vld [vmem:[#allocation8 + $0xd0] sm:$0xff]
    %v3083 = vld [vmem:[#allocation8 + $0xd8] sm:$0xf]
    %v3084 = vld [vmem:[#allocation8 + $0xdc] sm:$0xff]
    %v3085 = vld [vmem:[#allocation8 + $0xe4] sm:$0xff]
    %v3086 = vld [vmem:[#allocation8 + $0xec] sm:$0xf]
    %v3087 = vld [vmem:[#allocation8 + $0xf0] sm:$0xff]
    %v3088 = vld [vmem:[#allocation8 + $0xf8] sm:$0xff]
    %v3089 = vld [vmem:[#allocation8 + $0x100] sm:$0xf]
    %v3090 = vld [vmem:[#allocation8 + $0x104] sm:$0xff]
    %v3091 = vld [vmem:[#allocation8 + $0x10c] sm:$0xff]
    %v3092 = vld [vmem:[#allocation8 + $0x114] sm:$0xf]
    %v3093 = vld [vmem:[#allocation8 + $0x118] sm:$0xff]
    %v3094 = vld [vmem:[#allocation8 + $0x120] sm:$0xff]
    %v3095 = vld [vmem:[#allocation8 + $0x128] sm:$0xf]
    %v3096 = vld [vmem:[#allocation8 + $0x12c] sm:$0xff]
    %v3097 = vld [vmem:[#allocation8 + $0x134] sm:$0xff]
    %v3098 = vld [vmem:[#allocation8 + $0x13c] sm:$0xf]
    %v3099 = vld [vmem:[#allocation8 + $0x140] sm:$0xff]
    %v3100 = vld [vmem:[#allocation8 + $0x148] sm:$0xff]
    %v3101 = vld [vmem:[#allocation8 + $0x150] sm:$0xf]
    %v3102 = vld [vmem:[#allocation8 + $0x154] sm:$0xff]
    %v3103 = vld [vmem:[#allocation8 + $0x15c] sm:$0xff]
    %v3104 = vld [vmem:[#allocation8 + $0x164] sm:$0xf]
    %v3105 = vld [vmem:[#allocation8 + $0x168] sm:$0xff]
    %v3106 = vld [vmem:[#allocation8 + $0x170] sm:$0xff]
    %v3107 = vld [vmem:[#allocation8 + $0x178] sm:$0xf]
    %v3108 = vld [vmem:[#allocation8 + $0x17c] sm:$0xff]
    %v3109 = vld [vmem:[#allocation8 + $0x184] sm:$0xff]
    %v3110 = vld [vmem:[#allocation8 + $0x18c] sm:$0xf]
    %v3111 = vld [vmem:[#allocation8 + $0x190] sm:$0xff]
    %v3112 = vld [vmem:[#allocation8 + $0x198] sm:$0xff]
    %v3113 = vld [vmem:[#allocation8 + $0x1a0] sm:$0xf]
    %v3114 = vld [vmem:[#allocation8 + $0x1a4] sm:$0xff]
    %v3115 = vld [vmem:[#allocation8 + $0x1ac] sm:$0xff]
    %v3116 = vld [vmem:[#allocation8 + $0x1b4] sm:$0xf]
    %v3117 = vld [vmem:[#allocation8 + $0x1b8] sm:$0xff]
    %v3118 = vld [vmem:[#allocation8 + $0x1c0] sm:$0xff]
    %v3119 = vld [vmem:[#allocation8 + $0x1c8] sm:$0xf]
    %v3120 = vld [vmem:[#allocation8 + $0x1cc] sm:$0xff]
    %v3121 = vld [vmem:[#allocation8 + $0x1d4] sm:$0xff]
    %v3122 = vld [vmem:[#allocation8 + $0x1dc] sm:$0xf]
    %v3123 = vld [vmem:[#allocation8 + $0x1e0] sm:$0xff]
    %v3124 = vld [vmem:[#allocation8 + $0x1e8] sm:$0xff]
    %v3125 = vld [vmem:[#allocation8 + $0x1f0] sm:$0xf]
    %v3126 = vld [vmem:[#allocation8 + $0x1f4] sm:$0xff]
    %v3127 = vld [vmem:[#allocation8 + $0x1fc] sm:$0xff]
    %v3128 = vld [vmem:[#allocation8 + $0x204] sm:$0xf]
    %v3129 = vld [vmem:[#allocation8 + $0x208] sm:$0xff]
    %v3130 = vld [vmem:[#allocation8 + $0x210] sm:$0xff]
    %v3131 = vld [vmem:[#allocation8 + $0x218] sm:$0xf]
    %v3132 = vld [vmem:[#allocation8 + $0x21c] sm:$0xff]
    %v3133 = vld [vmem:[#allocation8 + $0x224] sm:$0xff]
    %v3134 = vld [vmem:[#allocation8 + $0x22c] sm:$0xf]
    %v3135 = vld [vmem:[#allocation8 + $0x230] sm:$0xff]
    %v3136 = vld [vmem:[#allocation8 + $0x238] sm:$0xff]
    %v3137 = vld [vmem:[#allocation8 + $0x240] sm:$0xf]
    %v3138 = vld [vmem:[#allocation8 + $0x244] sm:$0xff]
    %v3139 = vld [vmem:[#allocation8 + $0x24c] sm:$0xff]
    %v3140 = vld [vmem:[#allocation8 + $0x254] sm:$0xf]
    %v3141 = vld [vmem:[#allocation8 + $0x258] sm:$0xff]
    %v3142 = vld [vmem:[#allocation8 + $0x260] sm:$0xff]
    %v3143 = vld [vmem:[#allocation8 + $0x268] sm:$0xf]
    %v3144 = vld [vmem:[#allocation8 + $0x26c] sm:$0xff]
    %v3145 = vld [vmem:[#allocation8 + $0x274] sm:$0xff]
    %v3146 = vld [vmem:[#allocation8 + $0x27c] sm:$0xf]
    %v3147 = vld [vmem:[#allocation8 + $0x280] sm:$0xff]
    %v3148 = vld [vmem:[#allocation8 + $0x288] sm:$0xff]
    %v3149 = vld [vmem:[#allocation8 + $0x290] sm:$0xf]
    %v3150 = vld [vmem:[#allocation8 + $0x294] sm:$0xff]
    %v3151 = vld [vmem:[#allocation8 + $0x29c] sm:$0xff]
    %v3152 = vld [vmem:[#allocation8 + $0x2a4] sm:$0xf]
    %v3153 = vld [vmem:[#allocation8 + $0x2a8] sm:$0xff]
    %v3154 = vld [vmem:[#allocation8 + $0x2b0] sm:$0xff]
    %v3155 = vld [vmem:[#allocation8 + $0x2b8] sm:$0xf]
    %v3156 = vld [vmem:[#allocation8 + $0x2bc] sm:$0xff]
    %v3157 = vld [vmem:[#allocation8 + $0x2c4] sm:$0xff]
    %v3158 = vld [vmem:[#allocation8 + $0x2cc] sm:$0xf]
    %v3159 = vld [vmem:[#allocation8 + $0x2d0] sm:$0xff]
    %v3160 = vld [vmem:[#allocation8 + $0x2d8] sm:$0xff]
    %v3161 = vld [vmem:[#allocation8 + $0x2e0] sm:$0xf]
    %v3162 = vld [vmem:[#allocation8 + $0x2e4] sm:$0xff]
    %v3163 = vld [vmem:[#allocation8 + $0x2ec] sm:$0xff]
    %v3164 = vld [vmem:[#allocation8 + $0x2f4] sm:$0xf]
    %v3165 = vld [vmem:[#allocation8 + $0x2f8] sm:$0xff]
    %v3166 = vld [vmem:[#allocation8 + $0x300] sm:$0xff]
    %v3167 = vld [vmem:[#allocation8 + $0x308] sm:$0xf]
    %v3168 = vld [vmem:[#allocation8 + $0x30c] sm:$0xff]
    %v3169 = vld [vmem:[#allocation8 + $0x314] sm:$0xff]
    %v3170 = vld [vmem:[#allocation8 + $0x31c] sm:$0xf]
    %v3171 = vld [vmem:[#allocation8 + $0x320] sm:$0xff]
    %v3172 = vld [vmem:[#allocation8 + $0x328] sm:$0xff]
    %v3173 = vld [vmem:[#allocation8 + $0x330] sm:$0xf]
    %v3174 = vld [vmem:[#allocation8 + $0x334] sm:$0xff]
    %v3175 = vld [vmem:[#allocation8 + $0x33c] sm:$0xff]
    %v3176 = vld [vmem:[#allocation8 + $0x344] sm:$0xf]
    %v3177 = vld [vmem:[#allocation8 + $0x348] sm:$0xff]
    %v3178 = vld [vmem:[#allocation8 + $0x350] sm:$0xff]
    %v3179 = vld [vmem:[#allocation8 + $0x358] sm:$0xf]
    %v3180 = vld [vmem:[#allocation8 + $0x35c] sm:$0xff]
    %v3181 = vld [vmem:[#allocation8 + $0x364] sm:$0xff]
    %v3182 = vld [vmem:[#allocation8 + $0x36c] sm:$0xf]
    %v3183 = vld [vmem:[#allocation8 + $0x370] sm:$0xff]
    %v3184 = vld [vmem:[#allocation8 + $0x378] sm:$0xff]
    %v3185 = vld [vmem:[#allocation8 + $0x380] sm:$0xf]
    %v3186 = vld [vmem:[#allocation8 + $0x384] sm:$0xff]
    %v3187 = vld [vmem:[#allocation8 + $0x38c] sm:$0xff]
    %v3188 = vld [vmem:[#allocation8 + $0x394] sm:$0xf]
    %v3189 = vld [vmem:[#allocation8 + $0x398] sm:$0xff]
    %v3190 = vld [vmem:[#allocation8 + $0x3a0] sm:$0xff]
    %v3191 = vld [vmem:[#allocation8 + $0x3a8] sm:$0xf]
    %v3192 = vld [vmem:[#allocation8 + $0x3ac] sm:$0xff]
    %v3193 = vld [vmem:[#allocation8 + $0x3b4] sm:$0xff]
    %v3194 = vld [vmem:[#allocation8 + $0x3bc] sm:$0xf]
    %v3195 = vld [vmem:[#allocation8 + $0x3c0] sm:$0xff]
    %v3196 = vld [vmem:[#allocation8 + $0x3c8] sm:$0xff]
    %v3197 = vld [vmem:[#allocation8 + $0x3d0] sm:$0xf]
    %v3198 = vld [vmem:[#allocation8 + $0x3d4] sm:$0xff]
    %v3199 = vld [vmem:[#allocation8 + $0x3dc] sm:$0xff]
    %v3200 = vld [vmem:[#allocation8 + $0x3e4] sm:$0xf]
    %v3201 = vld [vmem:[#allocation8 + $0x3e8] sm:$0xff]
    %v3202 = vld [vmem:[#allocation8 + $0x3f0] sm:$0xff]
    %v3203 = vld [vmem:[#allocation8 + $0x3f8] sm:$0xf]
    %v3204 = vld [vmem:[#allocation8 + $0x3fc] sm:$0xff]
    %v3205 = vld [vmem:[#allocation8 + $0x404] sm:$0xff]
    %v3206 = vld [vmem:[#allocation8 + $0x40c] sm:$0xf]
    %v3207 = vld [vmem:[#allocation8 + $0x410] sm:$0xff]
    %v3208 = vld [vmem:[#allocation8 + $0x418] sm:$0xff]
    %v3209 = vld [vmem:[#allocation8 + $0x420] sm:$0xf]
    %v3210 = vld [vmem:[#allocation8 + $0x424] sm:$0xff]
    %v3211 = vld [vmem:[#allocation8 + $0x42c] sm:$0xff]
    %v3212 = vld [vmem:[#allocation8 + $0x434] sm:$0xf]
    %v3213 = vld [vmem:[#allocation8 + $0x438] sm:$0xff]
    %v3214 = vld [vmem:[#allocation8 + $0x440] sm:$0xff]
    %v3215 = vld [vmem:[#allocation8 + $0x448] sm:$0xf]
    %v3216 = vld [vmem:[#allocation8 + $0x44c] sm:$0xff]
    %v3217 = vld [vmem:[#allocation8 + $0x454] sm:$0xff]
    %v3218 = vld [vmem:[#allocation8 + $0x45c] sm:$0xf]
    %v3219 = vld [vmem:[#allocation8 + $0x460] sm:$0xff]
    %v3220 = vld [vmem:[#allocation8 + $0x468] sm:$0xff]
    %v3221 = vld [vmem:[#allocation8 + $0x470] sm:$0xf]
    %v3222 = vld [vmem:[#allocation8 + $0x474] sm:$0xff]
    %v3223 = vld [vmem:[#allocation8 + $0x47c] sm:$0xff]
    %v3224 = vld [vmem:[#allocation8 + $0x484] sm:$0xf]
    %v3225 = vld [vmem:[#allocation8 + $0x488] sm:$0xff]
    %v3226 = vld [vmem:[#allocation8 + $0x490] sm:$0xff]
    %v3227 = vld [vmem:[#allocation8 + $0x498] sm:$0xf]
    %v3228 = vld [vmem:[#allocation8 + $0x49c] sm:$0xff]
    %v3229 = vld [vmem:[#allocation8 + $0x4a4] sm:$0xff]
    %v3230 = vld [vmem:[#allocation8 + $0x4ac] sm:$0xf]
    %v3231 = vld [vmem:[#allocation8 + $0x4b0] sm:$0xff]
    %v3232 = vld [vmem:[#allocation8 + $0x4b8] sm:$0xff]
    %v3233 = vld [vmem:[#allocation8 + $0x4c0] sm:$0xf]
    %v3234 = vld [vmem:[#allocation8 + $0x4c4] sm:$0xff]
    %v3235 = vld [vmem:[#allocation8 + $0x4cc] sm:$0xff]
    %v3236 = vld [vmem:[#allocation8 + $0x4d4] sm:$0xf]
    %v3237 = vld [vmem:[#allocation8 + $0x4d8] sm:$0xff]
    %v3238 = vld [vmem:[#allocation8 + $0x4e0] sm:$0xff]
    %v3239 = vld [vmem:[#allocation8 + $0x4e8] sm:$0xf]
    %v3240 = vld [vmem:[#allocation8 + $0x4ec] sm:$0xff]
    %v3241 = vld [vmem:[#allocation8 + $0x4f4] sm:$0xff]
    %v3242 = vld [vmem:[#allocation8 + $0x4fc] sm:$0xf]
    %v3243 = vld [vmem:[#allocation8 + $0x500] sm:$0xff]
    %v3244 = vld [vmem:[#allocation8 + $0x508] sm:$0xff]
    %v3245 = vld [vmem:[#allocation8 + $0x510] sm:$0xf]
    %v3246 = vld [vmem:[#allocation8 + $0x514] sm:$0xff]
    %v3247 = vld [vmem:[#allocation8 + $0x51c] sm:$0xff]
    %v3248 = vld [vmem:[#allocation8 + $0x524] sm:$0xf]
    %v3249 = vld [vmem:[#allocation8 + $0x528] sm:$0xff]
    %v3250 = vld [vmem:[#allocation8 + $0x530] sm:$0xff]
    %v3251 = vld [vmem:[#allocation8 + $0x538] sm:$0xf]
    %v3252 = vld [vmem:[#allocation8 + $0x53c] sm:$0xff]
    %v3253 = vld [vmem:[#allocation8 + $0x544] sm:$0xff]
    %v3254 = vld [vmem:[#allocation8 + $0x54c] sm:$0xf]
    %v3255 = vld [vmem:[#allocation8 + $0x550] sm:$0xff]
    %v3256 = vld [vmem:[#allocation8 + $0x558] sm:$0xff]
    %v3257 = vld [vmem:[#allocation8 + $0x560] sm:$0xf]
    %v3258 = vld [vmem:[#allocation8 + $0x564] sm:$0xff]
    %v3259 = vld [vmem:[#allocation8 + $0x56c] sm:$0xff]
    %v3260 = vld [vmem:[#allocation8 + $0x574] sm:$0xf]
    %v3261 = vld [vmem:[#allocation8 + $0x578] sm:$0xff]
    %v3262 = vld [vmem:[#allocation8 + $0x580] sm:$0xff]
    %v3263 = vld [vmem:[#allocation8 + $0x588] sm:$0xf]
    %v3264 = vld [vmem:[#allocation8 + $0x58c] sm:$0xff]
    %v3265 = vld [vmem:[#allocation8 + $0x594] sm:$0xff]
    %v3266 = vld [vmem:[#allocation8 + $0x59c] sm:$0xf]
    %v3267 = vld [vmem:[#allocation8 + $0x5a0] sm:$0xff]
    %v3268 = vld [vmem:[#allocation8 + $0x5a8] sm:$0xff]
    %v3269 = vld [vmem:[#allocation8 + $0x5b0] sm:$0xf]
    %v3270 = vld [vmem:[#allocation8 + $0x5b4] sm:$0xff]
    %v3271 = vld [vmem:[#allocation8 + $0x5bc] sm:$0xff]
    %v3272 = vld [vmem:[#allocation8 + $0x5c4] sm:$0xf]
    %v3273 = vld [vmem:[#allocation8 + $0x5c8] sm:$0xff]
    %v3274 = vld [vmem:[#allocation8 + $0x5d0] sm:$0xff]
    %v3275 = vld [vmem:[#allocation8 + $0x5d8] sm:$0xf]
    %v3276 = vld [vmem:[#allocation8 + $0x5dc] sm:$0xff]
    %v3277 = vld [vmem:[#allocation8 + $0x5e4] sm:$0xff]
    %v3278 = vld [vmem:[#allocation8 + $0x5ec] sm:$0xf]
    %v3279 = vld [vmem:[#allocation8 + $0x5f0] sm:$0xff]
    %v3280 = vld [vmem:[#allocation8 + $0x5f8] sm:$0xff]
    %v3281 = vld [vmem:[#allocation8 + $0x600] sm:$0xf]
    %v3282 = vld [vmem:[#allocation8 + $0x604] sm:$0xff]
    %v3283 = vld [vmem:[#allocation8 + $0x60c] sm:$0xff]
    %v3284 = vld [vmem:[#allocation8 + $0x614] sm:$0xf]
    %v3285 = vld [vmem:[#allocation8 + $0x618] sm:$0xff]
    %v3286 = vld [vmem:[#allocation8 + $0x620] sm:$0xff]
    %v3287 = vld [vmem:[#allocation8 + $0x628] sm:$0xf]
    %v3288 = vld [vmem:[#allocation8 + $0x62c] sm:$0xff]
    %v3289 = vld [vmem:[#allocation8 + $0x634] sm:$0xff]
    %v3290 = vld [vmem:[#allocation8 + $0x63c] sm:$0xf]
    %v3291 = vld [vmem:[#allocation8 + $0x640] sm:$0xff]
    %v3292 = vld [vmem:[#allocation8 + $0x648] sm:$0xff]
    %v3293 = vld [vmem:[#allocation8 + $0x650] sm:$0xf]
    %v3294 = vld [vmem:[#allocation8 + $0x654] sm:$0xff]
    %v3295 = vld [vmem:[#allocation8 + $0x65c] sm:$0xff]
    %v3296 = vld [vmem:[#allocation8 + $0x664] sm:$0xf]
    %v3297 = vld [vmem:[#allocation8 + $0x668] sm:$0xff]
    %v3298 = vld [vmem:[#allocation8 + $0x670] sm:$0xff]
    %v3299 = vld [vmem:[#allocation8 + $0x678] sm:$0xf]
    %v3300 = vld [vmem:[#allocation8 + $0x67c] sm:$0xff]
    %v3301 = vld [vmem:[#allocation8 + $0x684] sm:$0xff]
    %v3302 = vld [vmem:[#allocation8 + $0x68c] sm:$0xf]
    %v3303 = vld [vmem:[#allocation8 + $0x690] sm:$0xff]
    %v3304 = vld [vmem:[#allocation8 + $0x698] sm:$0xff]
    %v3305 = vld [vmem:[#allocation8 + $0x6a0] sm:$0xf]
    %v3306 = vld [vmem:[#allocation8 + $0x6a4] sm:$0xff]
    %v3307 = vld [vmem:[#allocation8 + $0x6ac] sm:$0xff]
    %v3308 = vld [vmem:[#allocation8 + $0x6b4] sm:$0xf]
    %v3309 = vld [vmem:[#allocation8 + $0x6b8] sm:$0xff]
    %v3310 = vld [vmem:[#allocation8 + $0x6c0] sm:$0xff]
    %v3311 = vld [vmem:[#allocation8 + $0x6c8] sm:$0xf]
    %v3312 = vld [vmem:[#allocation8 + $0x6cc] sm:$0xff]
    %v3313 = vld [vmem:[#allocation8 + $0x6d4] sm:$0xff]
    %v3314 = vld [vmem:[#allocation8 + $0x6dc] sm:$0xf]
    %v3315 = vld [vmem:[#allocation8 + $0x6e0] sm:$0xff]
    %v3316 = vld [vmem:[#allocation8 + $0x6e8] sm:$0xff]
    %v3317 = vld [vmem:[#allocation8 + $0x6f0] sm:$0xf]
    %v3318 = vld [vmem:[#allocation8 + $0x6f4] sm:$0xff]
    %v3319 = vld [vmem:[#allocation8 + $0x6fc] sm:$0xff]
    %v3320 = vld [vmem:[#allocation8 + $0x704] sm:$0xf]
    %v3321 = vld [vmem:[#allocation8 + $0x708] sm:$0xff]
    %v3322 = vld [vmem:[#allocation8 + $0x710] sm:$0xff]
    %v3323 = vld [vmem:[#allocation8 + $0x718] sm:$0xf]
    %v3324 = vld [vmem:[#allocation8 + $0x71c] sm:$0xff]
    %v3325 = vld [vmem:[#allocation8 + $0x724] sm:$0xff]
    %v3326 = vld [vmem:[#allocation8 + $0x72c] sm:$0xf]
    %v3327 = vld [vmem:[#allocation8 + $0x730] sm:$0xff]
    %v3328 = vld [vmem:[#allocation8 + $0x738] sm:$0xff]
    %v3329 = vld [vmem:[#allocation8 + $0x740] sm:$0xf]
    %v3330 = vld [vmem:[#allocation8 + $0x744] sm:$0xff]
    %v3331 = vld [vmem:[#allocation8 + $0x74c] sm:$0xff]
    %v3332 = vld [vmem:[#allocation8 + $0x754] sm:$0xf]
    %v3333 = vld [vmem:[#allocation8 + $0x758] sm:$0xff]
    %v3334 = vld [vmem:[#allocation8 + $0x760] sm:$0xff]
    %v3335 = vld [vmem:[#allocation8 + $0x768] sm:$0xf]
    %v3336 = vld [vmem:[#allocation8 + $0x76c] sm:$0xff]
    %v3337 = vld [vmem:[#allocation8 + $0x774] sm:$0xff]
    %v3338 = vld [vmem:[#allocation8 + $0x77c] sm:$0xf]
    %v3339 = vld [vmem:[#allocation8 + $0x780] sm:$0xff]
    %v3340 = vld [vmem:[#allocation8 + $0x788] sm:$0xff]
    %v3341 = vld [vmem:[#allocation8 + $0x790] sm:$0xf]
    %v3342 = vld [vmem:[#allocation8 + $0x794] sm:$0xff]
    %v3343 = vld [vmem:[#allocation8 + $0x79c] sm:$0xff]
    %v3344 = vld [vmem:[#allocation8 + $0x7a4] sm:$0xf]
    %v3345 = vld [vmem:[#allocation8 + $0x7a8] sm:$0xff]
    %v3346 = vld [vmem:[#allocation8 + $0x7b0] sm:$0xff]
    %v3347 = vld [vmem:[#allocation8 + $0x7b8] sm:$0xf]
    %v3348 = vld [vmem:[#allocation8 + $0x7bc] sm:$0xff]
    %v3349 = vld [vmem:[#allocation8 + $0x7c4] sm:$0xff]
    %v3350 = vld [vmem:[#allocation8 + $0x7cc] sm:$0xf]
    %v3351 = vld [vmem:[#allocation8 + $0x7d0] sm:$0xff]
    %v3352 = vld [vmem:[#allocation8 + $0x7d8] sm:$0xff]
    %v3353 = vld [vmem:[#allocation8 + $0x7e0] sm:$0xf]
    %v3354 = vld [vmem:[#allocation8 + $0x7e4] sm:$0xff]
    %v3355 = vld [vmem:[#allocation8 + $0x7ec] sm:$0xff]
    %v3356 = vld [vmem:[#allocation8 + $0x7f4] sm:$0xf]
    %v3357 = vld [vmem:[#allocation8 + $0x7f8] sm:$0xff]
    %v3358 = vld [vmem:[#allocation8 + $0x800] sm:$0xff]
    %v3359 = vld [vmem:[#allocation8 + $0x808] sm:$0xf]
    %v3360 = vld [vmem:[#allocation8 + $0x80c] sm:$0xff]
    %v3361 = vld [vmem:[#allocation8 + $0x814] sm:$0xff]
    %v3362 = vld [vmem:[#allocation8 + $0x81c] sm:$0xf]
    %v3363 = vld [vmem:[#allocation8 + $0x820] sm:$0xff]
    %v3364 = vld [vmem:[#allocation8 + $0x828] sm:$0xff]
    %v3365 = vld [vmem:[#allocation8 + $0x830] sm:$0xf]
    %v3366 = vld [vmem:[#allocation8 + $0x834] sm:$0xff]
    %v3367 = vld [vmem:[#allocation8 + $0x83c] sm:$0xff]
    %v3368 = vld [vmem:[#allocation8 + $0x844] sm:$0xf]
    %v3369 = vld [vmem:[#allocation8 + $0x848] sm:$0xff]
    %v3370 = vld [vmem:[#allocation8 + $0x850] sm:$0xff]
    %v3371 = vld [vmem:[#allocation8 + $0x858] sm:$0xf]
    %v3372 = vld [vmem:[#allocation8 + $0x85c] sm:$0xff]
    %v3373 = vld [vmem:[#allocation8 + $0x864] sm:$0xff]
    %v3374 = vld [vmem:[#allocation8 + $0x86c] sm:$0xf]
    %v3375 = vld [vmem:[#allocation8 + $0x870] sm:$0xff]
    %v3376 = vld [vmem:[#allocation8 + $0x878] sm:$0xff]
    %v3377 = vld [vmem:[#allocation8 + $0x880] sm:$0xf]
    %v3378 = vld [vmem:[#allocation8 + $0x884] sm:$0xff]
    %v3379 = vld [vmem:[#allocation8 + $0x88c] sm:$0xff]
    %v3380 = vld [vmem:[#allocation8 + $0x894] sm:$0xf]
    %v3381 = vld [vmem:[#allocation8 + $0x898] sm:$0xff]
    %v3382 = vld [vmem:[#allocation8 + $0x8a0] sm:$0xff]
    %v3383 = vld [vmem:[#allocation8 + $0x8a8] sm:$0xf]
    %v3384 = vld [vmem:[#allocation8 + $0x8ac] sm:$0xff]
    %v3385 = vld [vmem:[#allocation8 + $0x8b4] sm:$0xff]
    %v3386 = vld [vmem:[#allocation8 + $0x8bc] sm:$0xf]
    %v3387 = vld [vmem:[#allocation8 + $0x8c0] sm:$0x33]
    %v3388 = vld [vmem:[#allocation8 + $0x8c8] sm:$0x33]
    %v3389 = vld [vmem:[#allocation8 + $0x8d0] sm:$0x3]
    %v3390 = vld [vmem:[#allocation9] sm:$0x1f]
    %v3392 = vlaneseq
    %v3393 = vshrl.u32 %v3392, 7
    %v3394 = vsub.s32 0, %v3393
    %v3395 = vrot.slane %v3390, %v3394
    %v3396 = vlaneseq
    %v3397 = vshrl.u32 %v3396, 7
    %v3398 = vsub.s32 1, %v3397
    %v3399 = vrot.slane %v3390, %v3398
    %v3400 = vlaneseq
    %v3401 = vshrl.u32 %v3400, 7
    %v3402 = vsub.s32 2, %v3401
    %v3403 = vrot.slane %v3390, %v3402
    %v3404 = vlaneseq
    %v3405 = vshrl.u32 %v3404, 7
    %v3406 = vsub.s32 3, %v3405
    %v3407 = vrot.slane %v3390, %v3406
    %v3408 = vlaneseq
    %v3409 = vshrl.u32 %v3408, 7
    %v3410 = vsub.s32 4, %v3409
    %v3411 = vrot.slane %v3390, %v3410
    %v3449 = vunpack.c.l.b16 %v3019
    %v3450 = vunpack.c.l.b16 %v3020
    %v3451 = vunpack.c.l.b16 %v3021
    %v3452 = vunpack.c.l.b16 %v3022
    %v3453 = vunpack.c.l.b16 %v3023
    %v3454 = vunpack.c.l.b16 %v3024
    %v3455 = vunpack.c.l.b16 %v3025
    %v3456 = vunpack.c.l.b16 %v3026
    %v3457 = vunpack.c.l.b16 %v3027
    %v3458 = vunpack.c.l.b16 %v3028
    %v3459 = vunpack.c.l.b16 %v3029
    %v3460 = vunpack.c.l.b16 %v3030
    %v3461 = vunpack.c.l.b16 %v3031
    %v3462 = vunpack.c.l.b16 %v3032
    %v3463 = vunpack.c.l.b16 %v3033
    %v3464 = vunpack.c.l.b16 %v3034
    %v3465 = vunpack.c.l.b16 %v3035
    %v3466 = vunpack.c.l.b16 %v3036
    %v3467 = vunpack.c.l.b16 %v3037
    %v3468 = vunpack.c.l.b16 %v3038
    %v3469 = vunpack.c.l.b16 %v3039
    %v3470 = vunpack.c.l.b16 %v3040
    %v3471 = vunpack.c.l.b16 %v3041
    %v3472 = vunpack.c.l.b16 %v3042
    %v3473 = vunpack.c.l.b16 %v3043
    %v3474 = vunpack.c.l.b16 %v3044
    %v3475 = vunpack.c.l.b16 %v3045
    %v3476 = vunpack.c.l.b16 %v3046
    %v3477 = vunpack.c.l.b16 %v3047
    %v3478 = vunpack.c.l.b16 %v3048
    %v3479 = vunpack.c.l.b16 %v3049
    %v3480 = vunpack.c.l.b16 %v3050
    %v3481 = vrot.slane %v3457, 7
    %vm3482 = vcmask 1041409
    %v3483 = vsel %vm3482, %v3481, %v3449
    %v3484 = vrot.slane %v3465, 6
    %vm3485 = vcmask 1042434
    %v3486 = vsel %vm3485, %v3484, %v3483
    %v3487 = vrot.slane %v3473, 5
    %vm3488 = vcmask 1043459
    %v3489 = vsel %vm3488, %v3487, %v3486
    %v3490 = vrot.slane %v3458, 7
    %v3491 = vsel %vm3482, %v3490, %v3450
    %v3492 = vrot.slane %v3466, 6
    %v3493 = vsel %vm3485, %v3492, %v3491
    %v3494 = vrot.slane %v3474, 5
    %v3495 = vsel %vm3488, %v3494, %v3493
    %v3496 = vrot.slane %v3459, 7
    %v3497 = vsel %vm3482, %v3496, %v3451
    %v3498 = vrot.slane %v3467, 6
    %v3499 = vsel %vm3485, %v3498, %v3497
    %v3500 = vrot.slane %v3475, 5
    %v3501 = vsel %vm3488, %v3500, %v3499
    %v3502 = vrot.slane %v3460, 7
    %v3503 = vsel %vm3482, %v3502, %v3452
    %v3504 = vrot.slane %v3468, 6
    %v3505 = vsel %vm3485, %v3504, %v3503
    %v3506 = vrot.slane %v3476, 5
    %v3507 = vsel %vm3488, %v3506, %v3505
    %v3508 = vrot.slane %v3461, 7
    %v3509 = vsel %vm3482, %v3508, %v3453
    %v3510 = vrot.slane %v3469, 6
    %v3511 = vsel %vm3485, %v3510, %v3509
    %v3512 = vrot.slane %v3477, 5
    %v3513 = vsel %vm3488, %v3512, %v3511
    %v3514 = vrot.slane %v3462, 7
    %v3515 = vsel %vm3482, %v3514, %v3454
    %v3516 = vrot.slane %v3470, 6
    %v3517 = vsel %vm3485, %v3516, %v3515
    %v3518 = vrot.slane %v3478, 5
    %v3519 = vsel %vm3488, %v3518, %v3517
    %v3520 = vrot.slane %v3463, 7
    %v3521 = vsel %vm3482, %v3520, %v3455
    %v3522 = vrot.slane %v3471, 6
    %v3523 = vsel %vm3485, %v3522, %v3521
    %v3524 = vrot.slane %v3479, 5
    %v3525 = vsel %vm3488, %v3524, %v3523
    %v3526 = vrot.slane %v3464, 7
    %v3527 = vsel %vm3482, %v3526, %v3456
    %v3528 = vrot.slane %v3472, 6
    %v3529 = vsel %vm3485, %v3528, %v3527
    %v3530 = vrot.slane %v3480, 5
    %v3531 = vsel %vm3488, %v3530, %v3529
    %v3532 = vpack.c.b16 %v3489, %v3489
    %v3533 = vpack.c.b16 %v3495, %v3495
    %v3534 = vpack.c.b16 %v3501, %v3501
    %v3535 = vpack.c.b16 %v3507, %v3507
    %v3536 = vpack.c.b16 %v3513, %v3513
    %v3537 = vpack.c.b16 %v3519, %v3519
    %v3538 = vpack.c.b16 %v3525, %v3525
    %v3539 = vpack.c.b16 %v3531, %v3531
    %v3886 = vunpack.c.l.b16 %v3051
    %v3887 = vunpack.c.h.b16 %v3051
    %v3888 = vunpack.c.l.b16 %v3052
    %v3889 = vunpack.c.h.b16 %v3052
    %v3890 = vunpack.c.l.b16 %v3053
    %v3891 = vunpack.c.l.b16 %v3054
    %v3892 = vunpack.c.h.b16 %v3054
    %v3893 = vunpack.c.l.b16 %v3055
    %v3894 = vunpack.c.h.b16 %v3055
    %v3895 = vunpack.c.l.b16 %v3056
    %v3896 = vunpack.c.l.b16 %v3057
    %v3897 = vunpack.c.h.b16 %v3057
    %v3898 = vunpack.c.l.b16 %v3058
    %v3899 = vunpack.c.h.b16 %v3058
    %v3900 = vunpack.c.l.b16 %v3059
    %v3901 = vunpack.c.l.b16 %v3060
    %v3902 = vunpack.c.h.b16 %v3060
    %v3903 = vunpack.c.l.b16 %v3061
    %v3904 = vunpack.c.h.b16 %v3061
    %v3905 = vunpack.c.l.b16 %v3062
    %v3906 = vunpack.c.l.b16 %v3063
    %v3907 = vunpack.c.h.b16 %v3063
    %v3908 = vunpack.c.l.b16 %v3064
    %v3909 = vunpack.c.h.b16 %v3064
    %v3910 = vunpack.c.l.b16 %v3065
    %v3911 = vunpack.c.l.b16 %v3066
    %v3912 = vunpack.c.h.b16 %v3066
    %v3913 = vunpack.c.l.b16 %v3067
    %v3914 = vunpack.c.h.b16 %v3067
    %v3915 = vunpack.c.l.b16 %v3068
    %v3916 = vunpack.c.l.b16 %v3069
    %v3917 = vunpack.c.h.b16 %v3069
    %v3918 = vunpack.c.l.b16 %v3070
    %v3919 = vunpack.c.h.b16 %v3070
    %v3920 = vunpack.c.l.b16 %v3071
    %v3921 = vunpack.c.l.b16 %v3072
    %v3922 = vunpack.c.h.b16 %v3072
    %v3923 = vunpack.c.l.b16 %v3073
    %v3924 = vunpack.c.h.b16 %v3073
    %v3925 = vunpack.c.l.b16 %v3074
    %v3926 = vunpack.c.l.b16 %v3075
    %v3927 = vunpack.c.h.b16 %v3075
    %v3928 = vunpack.c.l.b16 %v3076
    %v3929 = vunpack.c.h.b16 %v3076
    %v3930 = vunpack.c.l.b16 %v3077
    %v3931 = vunpack.c.l.b16 %v3078
    %v3932 = vunpack.c.h.b16 %v3078
    %v3933 = vunpack.c.l.b16 %v3079
    %v3934 = vunpack.c.h.b16 %v3079
    %v3935 = vunpack.c.l.b16 %v3080
    %v3936 = vunpack.c.l.b16 %v3081
    %v3937 = vunpack.c.h.b16 %v3081
    %v3938 = vunpack.c.l.b16 %v3082
    %v3939 = vunpack.c.h.b16 %v3082
    %v3940 = vunpack.c.l.b16 %v3083
    %v3941 = vunpack.c.l.b16 %v3084
    %v3942 = vunpack.c.h.b16 %v3084
    %v3943 = vunpack.c.l.b16 %v3085
    %v3944 = vunpack.c.h.b16 %v3085
    %v3945 = vunpack.c.l.b16 %v3086
    %v3946 = vunpack.c.l.b16 %v3087
    %v3947 = vunpack.c.h.b16 %v3087
    %v3948 = vunpack.c.l.b16 %v3088
    %v3949 = vunpack.c.h.b16 %v3088
    %v3950 = vunpack.c.l.b16 %v3089
    %v3951 = vunpack.c.l.b16 %v3090
    %v3952 = vunpack.c.h.b16 %v3090
    %v3953 = vunpack.c.l.b16 %v3091
    %v3954 = vunpack.c.h.b16 %v3091
    %v3955 = vunpack.c.l.b16 %v3092
    %v3956 = vunpack.c.l.b16 %v3093
    %v3957 = vunpack.c.h.b16 %v3093
    %v3958 = vunpack.c.l.b16 %v3094
    %v3959 = vunpack.c.h.b16 %v3094
    %v3960 = vunpack.c.l.b16 %v3095
    %v3961 = vunpack.c.l.b16 %v3096
    %v3962 = vunpack.c.h.b16 %v3096
    %v3963 = vunpack.c.l.b16 %v3097
    %v3964 = vunpack.c.h.b16 %v3097
    %v3965 = vunpack.c.l.b16 %v3098
    %v3966 = vunpack.c.l.b16 %v3099
    %v3967 = vunpack.c.h.b16 %v3099
    %v3968 = vunpack.c.l.b16 %v3100
    %v3969 = vunpack.c.h.b16 %v3100
    %v3970 = vunpack.c.l.b16 %v3101
    %v3971 = vunpack.c.l.b16 %v3102
    %v3972 = vunpack.c.h.b16 %v3102
    %v3973 = vunpack.c.l.b16 %v3103
    %v3974 = vunpack.c.h.b16 %v3103
    %v3975 = vunpack.c.l.b16 %v3104
    %v3976 = vunpack.c.l.b16 %v3105
    %v3977 = vunpack.c.h.b16 %v3105
    %v3978 = vunpack.c.l.b16 %v3106
    %v3979 = vunpack.c.h.b16 %v3106
    %v3980 = vunpack.c.l.b16 %v3107
    %v3981 = vunpack.c.l.b16 %v3108
    %v3982 = vunpack.c.h.b16 %v3108
    %v3983 = vunpack.c.l.b16 %v3109
    %v3984 = vunpack.c.h.b16 %v3109
    %v3985 = vunpack.c.l.b16 %v3110
    %v3986 = vunpack.c.l.b16 %v3111
    %v3987 = vunpack.c.h.b16 %v3111
    %v3988 = vunpack.c.l.b16 %v3112
    %v3989 = vunpack.c.h.b16 %v3112
    %v3990 = vunpack.c.l.b16 %v3113
    %v3991 = vunpack.c.l.b16 %v3114
    %v3992 = vunpack.c.h.b16 %v3114
    %v3993 = vunpack.c.l.b16 %v3115
    %v3994 = vunpack.c.h.b16 %v3115
    %v3995 = vunpack.c.l.b16 %v3116
    %v3996 = vunpack.c.l.b16 %v3117
    %v3997 = vunpack.c.h.b16 %v3117
    %v3998 = vunpack.c.l.b16 %v3118
    %v3999 = vunpack.c.h.b16 %v3118
    %v4000 = vunpack.c.l.b16 %v3119
    %v4001 = vunpack.c.l.b16 %v3120
    %v4002 = vunpack.c.h.b16 %v3120
    %v4003 = vunpack.c.l.b16 %v3121
    %v4004 = vunpack.c.h.b16 %v3121
    %v4005 = vunpack.c.l.b16 %v3122
    %v4006 = vunpack.c.l.b16 %v3123
    %v4007 = vunpack.c.h.b16 %v3123
    %v4008 = vunpack.c.l.b16 %v3124
    %v4009 = vunpack.c.h.b16 %v3124
    %v4010 = vunpack.c.l.b16 %v3125
    %v4011 = vunpack.c.l.b16 %v3126
    %v4012 = vunpack.c.h.b16 %v3126
    %v4013 = vunpack.c.l.b16 %v3127
    %v4014 = vunpack.c.h.b16 %v3127
    %v4015 = vunpack.c.l.b16 %v3128
    %v4016 = vunpack.c.l.b16 %v3129
    %v4017 = vunpack.c.h.b16 %v3129
    %v4018 = vunpack.c.l.b16 %v3130
    %v4019 = vunpack.c.h.b16 %v3130
    %v4020 = vunpack.c.l.b16 %v3131
    %v4021 = vunpack.c.l.b16 %v3132
    %v4022 = vunpack.c.h.b16 %v3132
    %v4023 = vunpack.c.l.b16 %v3133
    %v4024 = vunpack.c.h.b16 %v3133
    %v4025 = vunpack.c.l.b16 %v3134
    %v4026 = vunpack.c.l.b16 %v3135
    %v4027 = vunpack.c.h.b16 %v3135
    %v4028 = vunpack.c.l.b16 %v3136
    %v4029 = vunpack.c.h.b16 %v3136
    %v4030 = vunpack.c.l.b16 %v3137
    %v4031 = vunpack.c.l.b16 %v3138
    %v4032 = vunpack.c.h.b16 %v3138
    %v4033 = vunpack.c.l.b16 %v3139
    %v4034 = vunpack.c.h.b16 %v3139
    %v4035 = vunpack.c.l.b16 %v3140
    %v4036 = vunpack.c.l.b16 %v3141
    %v4037 = vunpack.c.h.b16 %v3141
    %v4038 = vunpack.c.l.b16 %v3142
    %v4039 = vunpack.c.h.b16 %v3142
    %v4040 = vunpack.c.l.b16 %v3143
    %v4041 = vunpack.c.l.b16 %v3144
    %v4042 = vunpack.c.h.b16 %v3144
    %v4043 = vunpack.c.l.b16 %v3145
    %v4044 = vunpack.c.h.b16 %v3145
    %v4045 = vunpack.c.l.b16 %v3146
    %v4046 = vunpack.c.l.b16 %v3147
    %v4047 = vunpack.c.h.b16 %v3147
    %v4048 = vunpack.c.l.b16 %v3148
    %v4049 = vunpack.c.h.b16 %v3148
    %v4050 = vunpack.c.l.b16 %v3149
    %v4051 = vunpack.c.l.b16 %v3150
    %v4052 = vunpack.c.h.b16 %v3150
    %v4053 = vunpack.c.l.b16 %v3151
    %v4054 = vunpack.c.h.b16 %v3151
    %v4055 = vunpack.c.l.b16 %v3152
    %v4056 = vunpack.c.l.b16 %v3153
    %v4057 = vunpack.c.h.b16 %v3153
    %v4058 = vunpack.c.l.b16 %v3154
    %v4059 = vunpack.c.h.b16 %v3154
    %v4060 = vunpack.c.l.b16 %v3155
    %v4061 = vunpack.c.l.b16 %v3156
    %v4062 = vunpack.c.h.b16 %v3156
    %v4063 = vunpack.c.l.b16 %v3157
    %v4064 = vunpack.c.h.b16 %v3157
    %v4065 = vunpack.c.l.b16 %v3158
    %v4066 = vunpack.c.l.b16 %v3159
    %v4067 = vunpack.c.h.b16 %v3159
    %v4068 = vunpack.c.l.b16 %v3160
    %v4069 = vunpack.c.h.b16 %v3160
    %v4070 = vunpack.c.l.b16 %v3161
    %v4071 = vunpack.c.l.b16 %v3162
    %v4072 = vunpack.c.h.b16 %v3162
    %v4073 = vunpack.c.l.b16 %v3163
    %v4074 = vunpack.c.h.b16 %v3163
    %v4075 = vunpack.c.l.b16 %v3164
    %v4076 = vunpack.c.l.b16 %v3165
    %v4077 = vunpack.c.h.b16 %v3165
    %v4078 = vunpack.c.l.b16 %v3166
    %v4079 = vunpack.c.h.b16 %v3166
    %v4080 = vunpack.c.l.b16 %v3167
    %v4081 = vunpack.c.l.b16 %v3168
    %v4082 = vunpack.c.h.b16 %v3168
    %v4083 = vunpack.c.l.b16 %v3169
    %v4084 = vunpack.c.h.b16 %v3169
    %v4085 = vunpack.c.l.b16 %v3170
    %v4086 = vunpack.c.l.b16 %v3171
    %v4087 = vunpack.c.h.b16 %v3171
    %v4088 = vunpack.c.l.b16 %v3172
    %v4089 = vunpack.c.h.b16 %v3172
    %v4090 = vunpack.c.l.b16 %v3173
    %v4091 = vunpack.c.l.b16 %v3174
    %v4092 = vunpack.c.h.b16 %v3174
    %v4093 = vunpack.c.l.b16 %v3175
    %v4094 = vunpack.c.h.b16 %v3175
    %v4095 = vunpack.c.l.b16 %v3176
    %v4096 = vunpack.c.l.b16 %v3177
    %v4097 = vunpack.c.h.b16 %v3177
    %v4098 = vunpack.c.l.b16 %v3178
    %v4099 = vunpack.c.h.b16 %v3178
    %v4100 = vunpack.c.l.b16 %v3179
    %v4101 = vunpack.c.l.b16 %v3180
    %v4102 = vunpack.c.h.b16 %v3180
    %v4103 = vunpack.c.l.b16 %v3181
    %v4104 = vunpack.c.h.b16 %v3181
    %v4105 = vunpack.c.l.b16 %v3182
    %v4106 = vunpack.c.l.b16 %v3183
    %v4107 = vunpack.c.h.b16 %v3183
    %v4108 = vunpack.c.l.b16 %v3184
    %v4109 = vunpack.c.h.b16 %v3184
    %v4110 = vunpack.c.l.b16 %v3185
    %v4111 = vunpack.c.l.b16 %v3186
    %v4112 = vunpack.c.h.b16 %v3186
    %v4113 = vunpack.c.l.b16 %v3187
    %v4114 = vunpack.c.h.b16 %v3187
    %v4115 = vunpack.c.l.b16 %v3188
    %v4116 = vunpack.c.l.b16 %v3189
    %v4117 = vunpack.c.h.b16 %v3189
    %v4118 = vunpack.c.l.b16 %v3190
    %v4119 = vunpack.c.h.b16 %v3190
    %v4120 = vunpack.c.l.b16 %v3191
    %v4121 = vunpack.c.l.b16 %v3192
    %v4122 = vunpack.c.h.b16 %v3192
    %v4123 = vunpack.c.l.b16 %v3193
    %v4124 = vunpack.c.h.b16 %v3193
    %v4125 = vunpack.c.l.b16 %v3194
    %v4126 = vunpack.c.l.b16 %v3195
    %v4127 = vunpack.c.h.b16 %v3195
    %v4128 = vunpack.c.l.b16 %v3196
    %v4129 = vunpack.c.h.b16 %v3196
    %v4130 = vunpack.c.l.b16 %v3197
    %v4131 = vunpack.c.l.b16 %v3198
    %v4132 = vunpack.c.h.b16 %v3198
    %v4133 = vunpack.c.l.b16 %v3199
    %v4134 = vunpack.c.h.b16 %v3199
    %v4135 = vunpack.c.l.b16 %v3200
    %v4136 = vunpack.c.l.b16 %v3201
    %v4137 = vunpack.c.h.b16 %v3201
    %v4138 = vunpack.c.l.b16 %v3202
    %v4139 = vunpack.c.h.b16 %v3202
    %v4140 = vunpack.c.l.b16 %v3203
    %v4141 = vunpack.c.l.b16 %v3204
    %v4142 = vunpack.c.h.b16 %v3204
    %v4143 = vunpack.c.l.b16 %v3205
    %v4144 = vunpack.c.h.b16 %v3205
    %v4145 = vunpack.c.l.b16 %v3206
    %v4146 = vunpack.c.l.b16 %v3207
    %v4147 = vunpack.c.h.b16 %v3207
    %v4148 = vunpack.c.l.b16 %v3208
    %v4149 = vunpack.c.h.b16 %v3208
    %v4150 = vunpack.c.l.b16 %v3209
    %v4151 = vunpack.c.l.b16 %v3210
    %v4152 = vunpack.c.h.b16 %v3210
    %v4153 = vunpack.c.l.b16 %v3211
    %v4154 = vunpack.c.h.b16 %v3211
    %v4155 = vunpack.c.l.b16 %v3212
    %v4156 = vunpack.c.l.b16 %v3213
    %v4157 = vunpack.c.h.b16 %v3213
    %v4158 = vunpack.c.l.b16 %v3214
    %v4159 = vunpack.c.h.b16 %v3214
    %v4160 = vunpack.c.l.b16 %v3215
    %v4161 = vunpack.c.l.b16 %v3216
    %v4162 = vunpack.c.h.b16 %v3216
    %v4163 = vunpack.c.l.b16 %v3217
    %v4164 = vunpack.c.h.b16 %v3217
    %v4165 = vunpack.c.l.b16 %v3218
    %v4166 = vunpack.c.l.b16 %v3219
    %v4167 = vunpack.c.h.b16 %v3219
    %v4168 = vunpack.c.l.b16 %v3220
    %v4169 = vunpack.c.h.b16 %v3220
    %v4170 = vunpack.c.l.b16 %v3221
    %v4171 = vunpack.c.l.b16 %v3222
    %v4172 = vunpack.c.h.b16 %v3222
    %v4173 = vunpack.c.l.b16 %v3223
    %v4174 = vunpack.c.h.b16 %v3223
    %v4175 = vunpack.c.l.b16 %v3224
    %v4176 = vunpack.c.l.b16 %v3225
    %v4177 = vunpack.c.h.b16 %v3225
    %v4178 = vunpack.c.l.b16 %v3226
    %v4179 = vunpack.c.h.b16 %v3226
    %v4180 = vunpack.c.l.b16 %v3227
    %v4181 = vunpack.c.l.b16 %v3228
    %v4182 = vunpack.c.h.b16 %v3228
    %v4183 = vunpack.c.l.b16 %v3229
    %v4184 = vunpack.c.h.b16 %v3229
    %v4185 = vunpack.c.l.b16 %v3230
    %v4186 = vunpack.c.l.b16 %v3231
    %v4187 = vunpack.c.h.b16 %v3231
    %v4188 = vunpack.c.l.b16 %v3232
    %v4189 = vunpack.c.h.b16 %v3232
    %v4190 = vunpack.c.l.b16 %v3233
    %v4191 = vunpack.c.l.b16 %v3234
    %v4192 = vunpack.c.h.b16 %v3234
    %v4193 = vunpack.c.l.b16 %v3235
    %v4194 = vunpack.c.h.b16 %v3235
    %v4195 = vunpack.c.l.b16 %v3236
    %v4196 = vunpack.c.l.b16 %v3237
    %v4197 = vunpack.c.h.b16 %v3237
    %v4198 = vunpack.c.l.b16 %v3238
    %v4199 = vunpack.c.h.b16 %v3238
    %v4200 = vunpack.c.l.b16 %v3239
    %v4201 = vunpack.c.l.b16 %v3240
    %v4202 = vunpack.c.h.b16 %v3240
    %v4203 = vunpack.c.l.b16 %v3241
    %v4204 = vunpack.c.h.b16 %v3241
    %v4205 = vunpack.c.l.b16 %v3242
    %v4206 = vunpack.c.l.b16 %v3243
    %v4207 = vunpack.c.h.b16 %v3243
    %v4208 = vunpack.c.l.b16 %v3244
    %v4209 = vunpack.c.h.b16 %v3244
    %v4210 = vunpack.c.l.b16 %v3245
    %v4211 = vunpack.c.l.b16 %v3246
    %v4212 = vunpack.c.h.b16 %v3246
    %v4213 = vunpack.c.l.b16 %v3247
    %v4214 = vunpack.c.h.b16 %v3247
    %v4215 = vunpack.c.l.b16 %v3248
    %v4216 = vunpack.c.l.b16 %v3249
    %v4217 = vunpack.c.h.b16 %v3249
    %v4218 = vunpack.c.l.b16 %v3250
    %v4219 = vunpack.c.h.b16 %v3250
    %v4220 = vunpack.c.l.b16 %v3251
    %v4221 = vunpack.c.l.b16 %v3252
    %v4222 = vunpack.c.h.b16 %v3252
    %v4223 = vunpack.c.l.b16 %v3253
    %v4224 = vunpack.c.h.b16 %v3253
    %v4225 = vunpack.c.l.b16 %v3254
    %v4226 = vunpack.c.l.b16 %v3255
    %v4227 = vunpack.c.h.b16 %v3255
    %v4228 = vunpack.c.l.b16 %v3256
    %v4229 = vunpack.c.h.b16 %v3256
    %v4230 = vunpack.c.l.b16 %v3257
    %v4231 = vunpack.c.l.b16 %v3258
    %v4232 = vunpack.c.h.b16 %v3258
    %v4233 = vunpack.c.l.b16 %v3259
    %v4234 = vunpack.c.h.b16 %v3259
    %v4235 = vunpack.c.l.b16 %v3260
    %v4236 = vunpack.c.l.b16 %v3261
    %v4237 = vunpack.c.h.b16 %v3261
    %v4238 = vunpack.c.l.b16 %v3262
    %v4239 = vunpack.c.h.b16 %v3262
    %v4240 = vunpack.c.l.b16 %v3263
    %v4241 = vunpack.c.l.b16 %v3264
    %v4242 = vunpack.c.h.b16 %v3264
    %v4243 = vunpack.c.l.b16 %v3265
    %v4244 = vunpack.c.h.b16 %v3265
    %v4245 = vunpack.c.l.b16 %v3266
    %v4246 = vunpack.c.l.b16 %v3267
    %v4247 = vunpack.c.h.b16 %v3267
    %v4248 = vunpack.c.l.b16 %v3268
    %v4249 = vunpack.c.h.b16 %v3268
    %v4250 = vunpack.c.l.b16 %v3269
    %v4251 = vunpack.c.l.b16 %v3270
    %v4252 = vunpack.c.h.b16 %v3270
    %v4253 = vunpack.c.l.b16 %v3271
    %v4254 = vunpack.c.h.b16 %v3271
    %v4255 = vunpack.c.l.b16 %v3272
    %v4256 = vunpack.c.l.b16 %v3273
    %v4257 = vunpack.c.h.b16 %v3273
    %v4258 = vunpack.c.l.b16 %v3274
    %v4259 = vunpack.c.h.b16 %v3274
    %v4260 = vunpack.c.l.b16 %v3275
    %v4261 = vunpack.c.l.b16 %v3276
    %v4262 = vunpack.c.h.b16 %v3276
    %v4263 = vunpack.c.l.b16 %v3277
    %v4264 = vunpack.c.h.b16 %v3277
    %v4265 = vunpack.c.l.b16 %v3278
    %v4266 = vunpack.c.l.b16 %v3279
    %v4267 = vunpack.c.h.b16 %v3279
    %v4268 = vunpack.c.l.b16 %v3280
    %v4269 = vunpack.c.h.b16 %v3280
    %v4270 = vunpack.c.l.b16 %v3281
    %v4271 = vunpack.c.l.b16 %v3282
    %v4272 = vunpack.c.h.b16 %v3282
    %v4273 = vunpack.c.l.b16 %v3283
    %v4274 = vunpack.c.h.b16 %v3283
    %v4275 = vunpack.c.l.b16 %v3284
    %v4276 = vunpack.c.l.b16 %v3285
    %v4277 = vunpack.c.h.b16 %v3285
    %v4278 = vunpack.c.l.b16 %v3286
    %v4279 = vunpack.c.h.b16 %v3286
    %v4280 = vunpack.c.l.b16 %v3287
    %v4281 = vunpack.c.l.b16 %v3288
    %v4282 = vunpack.c.h.b16 %v3288
    %v4283 = vunpack.c.l.b16 %v3289
    %v4284 = vunpack.c.h.b16 %v3289
    %v4285 = vunpack.c.l.b16 %v3290
    %v4286 = vunpack.c.l.b16 %v3291
    %v4287 = vunpack.c.h.b16 %v3291
    %v4288 = vunpack.c.l.b16 %v3292
    %v4289 = vunpack.c.h.b16 %v3292
    %v4290 = vunpack.c.l.b16 %v3293
    %v4291 = vunpack.c.l.b16 %v3294
    %v4292 = vunpack.c.h.b16 %v3294
    %v4293 = vunpack.c.l.b16 %v3295
    %v4294 = vunpack.c.h.b16 %v3295
    %v4295 = vunpack.c.l.b16 %v3296
    %v4296 = vunpack.c.l.b16 %v3297
    %v4297 = vunpack.c.h.b16 %v3297
    %v4298 = vunpack.c.l.b16 %v3298
    %v4299 = vunpack.c.h.b16 %v3298
    %v4300 = vunpack.c.l.b16 %v3299
    %v4301 = vunpack.c.l.b16 %v3300
    %v4302 = vunpack.c.h.b16 %v3300
    %v4303 = vunpack.c.l.b16 %v3301
    %v4304 = vunpack.c.h.b16 %v3301
    %v4305 = vunpack.c.l.b16 %v3302
    %v4306 = vunpack.c.l.b16 %v3303
    %v4307 = vunpack.c.h.b16 %v3303
    %v4308 = vunpack.c.l.b16 %v3304
    %v4309 = vunpack.c.h.b16 %v3304
    %v4310 = vunpack.c.l.b16 %v3305
    %v4311 = vunpack.c.l.b16 %v3306
    %v4312 = vunpack.c.h.b16 %v3306
    %v4313 = vunpack.c.l.b16 %v3307
    %v4314 = vunpack.c.h.b16 %v3307
    %v4315 = vunpack.c.l.b16 %v3308
    %v4316 = vunpack.c.l.b16 %v3309
    %v4317 = vunpack.c.h.b16 %v3309
    %v4318 = vunpack.c.l.b16 %v3310
    %v4319 = vunpack.c.h.b16 %v3310
    %v4320 = vunpack.c.l.b16 %v3311
    %v4321 = vunpack.c.l.b16 %v3312
    %v4322 = vunpack.c.h.b16 %v3312
    %v4323 = vunpack.c.l.b16 %v3313
    %v4324 = vunpack.c.h.b16 %v3313
    %v4325 = vunpack.c.l.b16 %v3314
    %v4326 = vunpack.c.l.b16 %v3315
    %v4327 = vunpack.c.h.b16 %v3315
    %v4328 = vunpack.c.l.b16 %v3316
    %v4329 = vunpack.c.h.b16 %v3316
    %v4330 = vunpack.c.l.b16 %v3317
    %v4331 = vunpack.c.l.b16 %v3318
    %v4332 = vunpack.c.h.b16 %v3318
    %v4333 = vunpack.c.l.b16 %v3319
    %v4334 = vunpack.c.h.b16 %v3319
    %v4335 = vunpack.c.l.b16 %v3320
    %v4336 = vunpack.c.l.b16 %v3321
    %v4337 = vunpack.c.h.b16 %v3321
    %v4338 = vunpack.c.l.b16 %v3322
    %v4339 = vunpack.c.h.b16 %v3322
    %v4340 = vunpack.c.l.b16 %v3323
    %v4341 = vunpack.c.l.b16 %v3324
    %v4342 = vunpack.c.h.b16 %v3324
    %v4343 = vunpack.c.l.b16 %v3325
    %v4344 = vunpack.c.h.b16 %v3325
    %v4345 = vunpack.c.l.b16 %v3326
    %v4346 = vunpack.c.l.b16 %v3327
    %v4347 = vunpack.c.h.b16 %v3327
    %v4348 = vunpack.c.l.b16 %v3328
    %v4349 = vunpack.c.h.b16 %v3328
    %v4350 = vunpack.c.l.b16 %v3329
    %v4351 = vunpack.c.l.b16 %v3330
    %v4352 = vunpack.c.h.b16 %v3330
    %v4353 = vunpack.c.l.b16 %v3331
    %v4354 = vunpack.c.h.b16 %v3331
    %v4355 = vunpack.c.l.b16 %v3332
    %v4356 = vunpack.c.l.b16 %v3333
    %v4357 = vunpack.c.h.b16 %v3333
    %v4358 = vunpack.c.l.b16 %v3334
    %v4359 = vunpack.c.h.b16 %v3334
    %v4360 = vunpack.c.l.b16 %v3335
    %v4361 = vunpack.c.l.b16 %v3336
    %v4362 = vunpack.c.h.b16 %v3336
    %v4363 = vunpack.c.l.b16 %v3337
    %v4364 = vunpack.c.h.b16 %v3337
    %v4365 = vunpack.c.l.b16 %v3338
    %v4366 = vunpack.c.l.b16 %v3339
    %v4367 = vunpack.c.h.b16 %v3339
    %v4368 = vunpack.c.l.b16 %v3340
    %v4369 = vunpack.c.h.b16 %v3340
    %v4370 = vunpack.c.l.b16 %v3341
    %v4371 = vunpack.c.l.b16 %v3342
    %v4372 = vunpack.c.h.b16 %v3342
    %v4373 = vunpack.c.l.b16 %v3343
    %v4374 = vunpack.c.h.b16 %v3343
    %v4375 = vunpack.c.l.b16 %v3344
    %v4376 = vunpack.c.l.b16 %v3345
    %v4377 = vunpack.c.h.b16 %v3345
    %v4378 = vunpack.c.l.b16 %v3346
    %v4379 = vunpack.c.h.b16 %v3346
    %v4380 = vunpack.c.l.b16 %v3347
    %v4381 = vunpack.c.l.b16 %v3348
    %v4382 = vunpack.c.h.b16 %v3348
    %v4383 = vunpack.c.l.b16 %v3349
    %v4384 = vunpack.c.h.b16 %v3349
    %v4385 = vunpack.c.l.b16 %v3350
    %v4386 = vunpack.c.l.b16 %v3351
    %v4387 = vunpack.c.h.b16 %v3351
    %v4388 = vunpack.c.l.b16 %v3352
    %v4389 = vunpack.c.h.b16 %v3352
    %v4390 = vunpack.c.l.b16 %v3353
    %v4391 = vunpack.c.l.b16 %v3354
    %v4392 = vunpack.c.h.b16 %v3354
    %v4393 = vunpack.c.l.b16 %v3355
    %v4394 = vunpack.c.h.b16 %v3355
    %v4395 = vunpack.c.l.b16 %v3356
    %v4396 = vunpack.c.l.b16 %v3357
    %v4397 = vunpack.c.h.b16 %v3357
    %v4398 = vunpack.c.l.b16 %v3358
    %v4399 = vunpack.c.h.b16 %v3358
    %v4400 = vunpack.c.l.b16 %v3359
    %v4401 = vunpack.c.l.b16 %v3360
    %v4402 = vunpack.c.h.b16 %v3360
    %v4403 = vunpack.c.l.b16 %v3361
    %v4404 = vunpack.c.h.b16 %v3361
    %v4405 = vunpack.c.l.b16 %v3362
    %v4406 = vunpack.c.l.b16 %v3363
    %v4407 = vunpack.c.h.b16 %v3363
    %v4408 = vunpack.c.l.b16 %v3364
    %v4409 = vunpack.c.h.b16 %v3364
    %v4410 = vunpack.c.l.b16 %v3365
    %v4411 = vunpack.c.l.b16 %v3366
    %v4412 = vunpack.c.h.b16 %v3366
    %v4413 = vunpack.c.l.b16 %v3367
    %v4414 = vunpack.c.h.b16 %v3367
    %v4415 = vunpack.c.l.b16 %v3368
    %v4416 = vunpack.c.l.b16 %v3369
    %v4417 = vunpack.c.h.b16 %v3369
    %v4418 = vunpack.c.l.b16 %v3370
    %v4419 = vunpack.c.h.b16 %v3370
    %v4420 = vunpack.c.l.b16 %v3371
    %v4421 = vunpack.c.l.b16 %v3372
    %v4422 = vunpack.c.h.b16 %v3372
    %v4423 = vunpack.c.l.b16 %v3373
    %v4424 = vunpack.c.h.b16 %v3373
    %v4425 = vunpack.c.l.b16 %v3374
    %v4426 = vunpack.c.l.b16 %v3375
    %v4427 = vunpack.c.h.b16 %v3375
    %v4428 = vunpack.c.l.b16 %v3376
    %v4429 = vunpack.c.h.b16 %v3376
    %v4430 = vunpack.c.l.b16 %v3377
    %v4431 = vunpack.c.l.b16 %v3378
    %v4432 = vunpack.c.h.b16 %v3378
    %v4433 = vunpack.c.l.b16 %v3379
    %v4434 = vunpack.c.h.b16 %v3379
    %v4435 = vunpack.c.l.b16 %v3380
    %v4436 = vunpack.c.l.b16 %v3381
    %v4437 = vunpack.c.h.b16 %v3381
    %v4438 = vunpack.c.l.b16 %v3382
    %v4439 = vunpack.c.h.b16 %v3382
    %v4440 = vunpack.c.l.b16 %v3383
    %v4441 = vunpack.c.l.b16 %v3384
    %v4442 = vunpack.c.h.b16 %v3384
    %v4443 = vunpack.c.l.b16 %v3385
    %v4444 = vunpack.c.h.b16 %v3385
    %v4445 = vunpack.c.l.b16 %v3386
    %v4446 = vunpack.c.l.b16 %v3387
    %v4447 = vunpack.c.h.b16 %v3387
    %v4448 = vunpack.c.l.b16 %v3388
    %v4449 = vunpack.c.h.b16 %v3388
    %v4450 = vunpack.c.l.b16 %v3389
    %v4451 = vpack.c.b16 %v3891, %v3886
    %v4452 = vpack.c.b16 %v3892, %v3887
    %v4453 = vpack.c.b16 %v3893, %v3888
    %v4454 = vpack.c.b16 %v3894, %v3889
    %v4455 = vpack.c.b16 %v3895, %v3890
    %v4456 = vpack.c.b16 %v3901, %v3896
    %v4457 = vpack.c.b16 %v3902, %v3897
    %v4458 = vpack.c.b16 %v3903, %v3898
    %v4459 = vpack.c.b16 %v3904, %v3899
    %v4460 = vpack.c.b16 %v3905, %v3900
    %v4461 = vpack.c.b16 %v3911, %v3906
    %v4462 = vpack.c.b16 %v3912, %v3907
    %v4463 = vpack.c.b16 %v3913, %v3908
    %v4464 = vpack.c.b16 %v3914, %v3909
    %v4465 = vpack.c.b16 %v3915, %v3910
    %v4466 = vpack.c.b16 %v3921, %v3916
    %v4467 = vpack.c.b16 %v3922, %v3917
    %v4468 = vpack.c.b16 %v3923, %v3918
    %v4469 = vpack.c.b16 %v3924, %v3919
    %v4470 = vpack.c.b16 %v3925, %v3920
    %v4471 = vpack.c.b16 %v3931, %v3926
    %v4472 = vpack.c.b16 %v3932, %v3927
    %v4473 = vpack.c.b16 %v3933, %v3928
    %v4474 = vpack.c.b16 %v3934, %v3929
    %v4475 = vpack.c.b16 %v3935, %v3930
    %v4476 = vpack.c.b16 %v3941, %v3936
    %v4477 = vpack.c.b16 %v3942, %v3937
    %v4478 = vpack.c.b16 %v3943, %v3938
    %v4479 = vpack.c.b16 %v3944, %v3939
    %v4480 = vpack.c.b16 %v3945, %v3940
    %v4481 = vpack.c.b16 %v3951, %v3946
    %v4482 = vpack.c.b16 %v3952, %v3947
    %v4483 = vpack.c.b16 %v3953, %v3948
    %v4484 = vpack.c.b16 %v3954, %v3949
    %v4485 = vpack.c.b16 %v3955, %v3950
    %v4486 = vpack.c.b16 %v3961, %v3956
    %v4487 = vpack.c.b16 %v3962, %v3957
    %v4488 = vpack.c.b16 %v3963, %v3958
    %v4489 = vpack.c.b16 %v3964, %v3959
    %v4490 = vpack.c.b16 %v3965, %v3960
    %v4491 = vpack.c.b16 %v3971, %v3966
    %v4492 = vpack.c.b16 %v3972, %v3967
    %v4493 = vpack.c.b16 %v3973, %v3968
    %v4494 = vpack.c.b16 %v3974, %v3969
    %v4495 = vpack.c.b16 %v3975, %v3970
    %v4496 = vpack.c.b16 %v3981, %v3976
    %v4497 = vpack.c.b16 %v3982, %v3977
    %v4498 = vpack.c.b16 %v3983, %v3978
    %v4499 = vpack.c.b16 %v3984, %v3979
    %v4500 = vpack.c.b16 %v3985, %v3980
    %v4501 = vpack.c.b16 %v3991, %v3986
    %v4502 = vpack.c.b16 %v3992, %v3987
    %v4503 = vpack.c.b16 %v3993, %v3988
    %v4504 = vpack.c.b16 %v3994, %v3989
    %v4505 = vpack.c.b16 %v3995, %v3990
    %v4506 = vpack.c.b16 %v4001, %v3996
    %v4507 = vpack.c.b16 %v4002, %v3997
    %v4508 = vpack.c.b16 %v4003, %v3998
    %v4509 = vpack.c.b16 %v4004, %v3999
    %v4510 = vpack.c.b16 %v4005, %v4000
    %v4511 = vpack.c.b16 %v4011, %v4006
    %v4512 = vpack.c.b16 %v4012, %v4007
    %v4513 = vpack.c.b16 %v4013, %v4008
    %v4514 = vpack.c.b16 %v4014, %v4009
    %v4515 = vpack.c.b16 %v4015, %v4010
    %v4516 = vpack.c.b16 %v4021, %v4016
    %v4517 = vpack.c.b16 %v4022, %v4017
    %v4518 = vpack.c.b16 %v4023, %v4018
    %v4519 = vpack.c.b16 %v4024, %v4019
    %v4520 = vpack.c.b16 %v4025, %v4020
    %v4521 = vpack.c.b16 %v4031, %v4026
    %v4522 = vpack.c.b16 %v4032, %v4027
    %v4523 = vpack.c.b16 %v4033, %v4028
    %v4524 = vpack.c.b16 %v4034, %v4029
    %v4525 = vpack.c.b16 %v4035, %v4030
    %v4526 = vpack.c.b16 %v4041, %v4036
    %v4527 = vpack.c.b16 %v4042, %v4037
    %v4528 = vpack.c.b16 %v4043, %v4038
    %v4529 = vpack.c.b16 %v4044, %v4039
    %v4530 = vpack.c.b16 %v4045, %v4040
    %v4531 = vpack.c.b16 %v4051, %v4046
    %v4532 = vpack.c.b16 %v4052, %v4047
    %v4533 = vpack.c.b16 %v4053, %v4048
    %v4534 = vpack.c.b16 %v4054, %v4049
    %v4535 = vpack.c.b16 %v4055, %v4050
    %v4536 = vpack.c.b16 %v4061, %v4056
    %v4537 = vpack.c.b16 %v4062, %v4057
    %v4538 = vpack.c.b16 %v4063, %v4058
    %v4539 = vpack.c.b16 %v4064, %v4059
    %v4540 = vpack.c.b16 %v4065, %v4060
    %v4541 = vpack.c.b16 %v4071, %v4066
    %v4542 = vpack.c.b16 %v4072, %v4067
    %v4543 = vpack.c.b16 %v4073, %v4068
    %v4544 = vpack.c.b16 %v4074, %v4069
    %v4545 = vpack.c.b16 %v4075, %v4070
    %v4546 = vpack.c.b16 %v4081, %v4076
    %v4547 = vpack.c.b16 %v4082, %v4077
    %v4548 = vpack.c.b16 %v4083, %v4078
    %v4549 = vpack.c.b16 %v4084, %v4079
    %v4550 = vpack.c.b16 %v4085, %v4080
    %v4551 = vpack.c.b16 %v4091, %v4086
    %v4552 = vpack.c.b16 %v4092, %v4087
    %v4553 = vpack.c.b16 %v4093, %v4088
    %v4554 = vpack.c.b16 %v4094, %v4089
    %v4555 = vpack.c.b16 %v4095, %v4090
    %v4556 = vpack.c.b16 %v4101, %v4096
    %v4557 = vpack.c.b16 %v4102, %v4097
    %v4558 = vpack.c.b16 %v4103, %v4098
    %v4559 = vpack.c.b16 %v4104, %v4099
    %v4560 = vpack.c.b16 %v4105, %v4100
    %v4561 = vpack.c.b16 %v4111, %v4106
    %v4562 = vpack.c.b16 %v4112, %v4107
    %v4563 = vpack.c.b16 %v4113, %v4108
    %v4564 = vpack.c.b16 %v4114, %v4109
    %v4565 = vpack.c.b16 %v4115, %v4110
    %v4566 = vpack.c.b16 %v4121, %v4116
    %v4567 = vpack.c.b16 %v4122, %v4117
    %v4568 = vpack.c.b16 %v4123, %v4118
    %v4569 = vpack.c.b16 %v4124, %v4119
    %v4570 = vpack.c.b16 %v4125, %v4120
    %v4571 = vpack.c.b16 %v4131, %v4126
    %v4572 = vpack.c.b16 %v4132, %v4127
    %v4573 = vpack.c.b16 %v4133, %v4128
    %v4574 = vpack.c.b16 %v4134, %v4129
    %v4575 = vpack.c.b16 %v4135, %v4130
    %v4576 = vpack.c.b16 %v4141, %v4136
    %v4577 = vpack.c.b16 %v4142, %v4137
    %v4578 = vpack.c.b16 %v4143, %v4138
    %v4579 = vpack.c.b16 %v4144, %v4139
    %v4580 = vpack.c.b16 %v4145, %v4140
    %v4581 = vpack.c.b16 %v4151, %v4146
    %v4582 = vpack.c.b16 %v4152, %v4147
    %v4583 = vpack.c.b16 %v4153, %v4148
    %v4584 = vpack.c.b16 %v4154, %v4149
    %v4585 = vpack.c.b16 %v4155, %v4150
    %v4586 = vpack.c.b16 %v4161, %v4156
    %v4587 = vpack.c.b16 %v4162, %v4157
    %v4588 = vpack.c.b16 %v4163, %v4158
    %v4589 = vpack.c.b16 %v4164, %v4159
    %v4590 = vpack.c.b16 %v4165, %v4160
    %v4591 = vpack.c.b16 %v4171, %v4166
    %v4592 = vpack.c.b16 %v4172, %v4167
    %v4593 = vpack.c.b16 %v4173, %v4168
    %v4594 = vpack.c.b16 %v4174, %v4169
    %v4595 = vpack.c.b16 %v4175, %v4170
    %v4596 = vpack.c.b16 %v4181, %v4176
    %v4597 = vpack.c.b16 %v4182, %v4177
    %v4598 = vpack.c.b16 %v4183, %v4178
    %v4599 = vpack.c.b16 %v4184, %v4179
    %v4600 = vpack.c.b16 %v4185, %v4180
    %v4601 = vpack.c.b16 %v4191, %v4186
    %v4602 = vpack.c.b16 %v4192, %v4187
    %v4603 = vpack.c.b16 %v4193, %v4188
    %v4604 = vpack.c.b16 %v4194, %v4189
    %v4605 = vpack.c.b16 %v4195, %v4190
    %v4606 = vpack.c.b16 %v4201, %v4196
    %v4607 = vpack.c.b16 %v4202, %v4197
    %v4608 = vpack.c.b16 %v4203, %v4198
    %v4609 = vpack.c.b16 %v4204, %v4199
    %v4610 = vpack.c.b16 %v4205, %v4200
    %v4611 = vpack.c.b16 %v4211, %v4206
    %v4612 = vpack.c.b16 %v4212, %v4207
    %v4613 = vpack.c.b16 %v4213, %v4208
    %v4614 = vpack.c.b16 %v4214, %v4209
    %v4615 = vpack.c.b16 %v4215, %v4210
    %v4616 = vpack.c.b16 %v4221, %v4216
    %v4617 = vpack.c.b16 %v4222, %v4217
    %v4618 = vpack.c.b16 %v4223, %v4218
    %v4619 = vpack.c.b16 %v4224, %v4219
    %v4620 = vpack.c.b16 %v4225, %v4220
    %v4621 = vpack.c.b16 %v4231, %v4226
    %v4622 = vpack.c.b16 %v4232, %v4227
    %v4623 = vpack.c.b16 %v4233, %v4228
    %v4624 = vpack.c.b16 %v4234, %v4229
    %v4625 = vpack.c.b16 %v4235, %v4230
    %v4626 = vpack.c.b16 %v4241, %v4236
    %v4627 = vpack.c.b16 %v4242, %v4237
    %v4628 = vpack.c.b16 %v4243, %v4238
    %v4629 = vpack.c.b16 %v4244, %v4239
    %v4630 = vpack.c.b16 %v4245, %v4240
    %v4631 = vpack.c.b16 %v4251, %v4246
    %v4632 = vpack.c.b16 %v4252, %v4247
    %v4633 = vpack.c.b16 %v4253, %v4248
    %v4634 = vpack.c.b16 %v4254, %v4249
    %v4635 = vpack.c.b16 %v4255, %v4250
    %v4636 = vpack.c.b16 %v4261, %v4256
    %v4637 = vpack.c.b16 %v4262, %v4257
    %v4638 = vpack.c.b16 %v4263, %v4258
    %v4639 = vpack.c.b16 %v4264, %v4259
    %v4640 = vpack.c.b16 %v4265, %v4260
    %v4641 = vpack.c.b16 %v4271, %v4266
    %v4642 = vpack.c.b16 %v4272, %v4267
    %v4643 = vpack.c.b16 %v4273, %v4268
    %v4644 = vpack.c.b16 %v4274, %v4269
    %v4645 = vpack.c.b16 %v4275, %v4270
    %v4646 = vpack.c.b16 %v4281, %v4276
    %v4647 = vpack.c.b16 %v4282, %v4277
    %v4648 = vpack.c.b16 %v4283, %v4278
    %v4649 = vpack.c.b16 %v4284, %v4279
    %v4650 = vpack.c.b16 %v4285, %v4280
    %v4651 = vpack.c.b16 %v4291, %v4286
    %v4652 = vpack.c.b16 %v4292, %v4287
    %v4653 = vpack.c.b16 %v4293, %v4288
    %v4654 = vpack.c.b16 %v4294, %v4289
    %v4655 = vpack.c.b16 %v4295, %v4290
    %v4656 = vpack.c.b16 %v4301, %v4296
    %v4657 = vpack.c.b16 %v4302, %v4297
    %v4658 = vpack.c.b16 %v4303, %v4298
    %v4659 = vpack.c.b16 %v4304, %v4299
    %v4660 = vpack.c.b16 %v4305, %v4300
    %v4661 = vpack.c.b16 %v4311, %v4306
    %v4662 = vpack.c.b16 %v4312, %v4307
    %v4663 = vpack.c.b16 %v4313, %v4308
    %v4664 = vpack.c.b16 %v4314, %v4309
    %v4665 = vpack.c.b16 %v4315, %v4310
    %v4666 = vpack.c.b16 %v4321, %v4316
    %v4667 = vpack.c.b16 %v4322, %v4317
    %v4668 = vpack.c.b16 %v4323, %v4318
    %v4669 = vpack.c.b16 %v4324, %v4319
    %v4670 = vpack.c.b16 %v4325, %v4320
    %v4671 = vpack.c.b16 %v4331, %v4326
    %v4672 = vpack.c.b16 %v4332, %v4327
    %v4673 = vpack.c.b16 %v4333, %v4328
    %v4674 = vpack.c.b16 %v4334, %v4329
    %v4675 = vpack.c.b16 %v4335, %v4330
    %v4676 = vpack.c.b16 %v4341, %v4336
    %v4677 = vpack.c.b16 %v4342, %v4337
    %v4678 = vpack.c.b16 %v4343, %v4338
    %v4679 = vpack.c.b16 %v4344, %v4339
    %v4680 = vpack.c.b16 %v4345, %v4340
    %v4681 = vpack.c.b16 %v4351, %v4346
    %v4682 = vpack.c.b16 %v4352, %v4347
    %v4683 = vpack.c.b16 %v4353, %v4348
    %v4684 = vpack.c.b16 %v4354, %v4349
    %v4685 = vpack.c.b16 %v4355, %v4350
    %v4686 = vpack.c.b16 %v4361, %v4356
    %v4687 = vpack.c.b16 %v4362, %v4357
    %v4688 = vpack.c.b16 %v4363, %v4358
    %v4689 = vpack.c.b16 %v4364, %v4359
    %v4690 = vpack.c.b16 %v4365, %v4360
    %v4691 = vpack.c.b16 %v4371, %v4366
    %v4692 = vpack.c.b16 %v4372, %v4367
    %v4693 = vpack.c.b16 %v4373, %v4368
    %v4694 = vpack.c.b16 %v4374, %v4369
    %v4695 = vpack.c.b16 %v4375, %v4370
    %v4696 = vpack.c.b16 %v4381, %v4376
    %v4697 = vpack.c.b16 %v4382, %v4377
    %v4698 = vpack.c.b16 %v4383, %v4378
    %v4699 = vpack.c.b16 %v4384, %v4379
    %v4700 = vpack.c.b16 %v4385, %v4380
    %v4701 = vpack.c.b16 %v4391, %v4386
    %v4702 = vpack.c.b16 %v4392, %v4387
    %v4703 = vpack.c.b16 %v4393, %v4388
    %v4704 = vpack.c.b16 %v4394, %v4389
    %v4705 = vpack.c.b16 %v4395, %v4390
    %v4706 = vpack.c.b16 %v4401, %v4396
    %v4707 = vpack.c.b16 %v4402, %v4397
    %v4708 = vpack.c.b16 %v4403, %v4398
    %v4709 = vpack.c.b16 %v4404, %v4399
    %v4710 = vpack.c.b16 %v4405, %v4400
    %v4711 = vpack.c.b16 %v4411, %v4406
    %v4712 = vpack.c.b16 %v4412, %v4407
    %v4713 = vpack.c.b16 %v4413, %v4408
    %v4714 = vpack.c.b16 %v4414, %v4409
    %v4715 = vpack.c.b16 %v4415, %v4410
    %v4716 = vpack.c.b16 %v4421, %v4416
    %v4717 = vpack.c.b16 %v4422, %v4417
    %v4718 = vpack.c.b16 %v4423, %v4418
    %v4719 = vpack.c.b16 %v4424, %v4419
    %v4720 = vpack.c.b16 %v4425, %v4420
    %v4721 = vpack.c.b16 %v4431, %v4426
    %v4722 = vpack.c.b16 %v4432, %v4427
    %v4723 = vpack.c.b16 %v4433, %v4428
    %v4724 = vpack.c.b16 %v4434, %v4429
    %v4725 = vpack.c.b16 %v4435, %v4430
    %v4726 = vpack.c.b16 %v4441, %v4436
    %v4727 = vpack.c.b16 %v4442, %v4437
    %v4728 = vpack.c.b16 %v4443, %v4438
    %v4729 = vpack.c.b16 %v4444, %v4439
    %v4730 = vpack.c.b16 %v4445, %v4440
    %v4731 = vpack.c.b16 %v4446, %v4446
    %v4732 = vpack.c.b16 %v4447, %v4447
    %v4733 = vpack.c.b16 %v4448, %v4448
    %v4734 = vpack.c.b16 %v4449, %v4449
    %v4735 = vpack.c.b16 %v4450, %v4450
    %v5017 = vsel %vm2739, %v3539, 0
    %v5020 = vsel %vm2682, %v4731, 0
    %v5023 = vsel %vm2682, %v4732, 0
    %v5026 = vsel %vm2682, %v4733, 0
    %v5029 = vsel %vm2682, %v4734, 0
    %v5032 = vsel %vm2682, %v4735, 0
    %5034 = vmatprep.subr.bf16.mxu0 %v4452
    %5035 = vmatpush1.bf16.msra.mxu0 %v4451
    %5036 = vmatprep.subr.bf16.mxu0 %v4457
    %5037 = vmatpush1.bf16.msra.mxu0 %v4456
    %5038 = vmatprep.subr.bf16.mxu0 %v4462
    %5039 = vmatpush1.bf16.msra.mxu0 %v4461
    %5040 = vmatprep.subr.bf16.mxu0 %v4467
    %5041 = vmatpush1.bf16.msra.mxu0 %v4466
    %5042 = vmatprep.subr.bf16.mxu0 %v4472
    %5043 = vmatpush1.bf16.msra.mxu0 %v4471
    %5044 = vmatprep.subr.bf16.mxu0 %v4477
    %5045 = vmatpush1.bf16.msra.mxu0 %v4476
    %5046 = vmatprep.subr.bf16.mxu0 %v4482
    %5047 = vmatpush1.bf16.msra.mxu0 %v4481
    %5048 = vmatprep.subr.bf16.mxu0 %v4487
    %5049 = vmatpush1.bf16.msra.mxu0 %v4486
    %5050 = vmatprep.subr.bf16.mxu0 %v4492
    %5051 = vmatpush1.bf16.msra.mxu0 %v4491
    %5052 = vmatprep.subr.bf16.mxu0 %v4497
    %5053 = vmatpush1.bf16.msra.mxu0 %v4496
    %5054 = vmatprep.subr.bf16.mxu0 %v4502
    %5055 = vmatpush1.bf16.msra.mxu0 %v4501
    %5056 = vmatprep.subr.bf16.mxu0 %v4507
    %5057 = vmatpush1.bf16.msra.mxu0 %v4506
    %5058 = vmatprep.subr.bf16.mxu0 %v4512
    %5059 = vmatpush1.bf16.msra.mxu0 %v4511
    %5060 = vmatprep.subr.bf16.mxu0 %v4517
    %5061 = vmatpush1.bf16.msra.mxu0 %v4516
    %5062 = vmatprep.subr.bf16.mxu0 %v4522
    %5063 = vmatpush1.bf16.msra.mxu0 %v4521
    %5064 = vmatprep.subr.bf16.mxu0 %v4527
    %5065 = vmatpush1.bf16.msra.mxu0 %v4526
    %5066 = vmatprep.mubr.bf16.mxu0 %v3533
    %5067 = vmatmul.mubr.bf16.gmra.mrb[0].mxu0 %v3532
    %v5068 = vpop.f32.mrb[0].mxu0
    %v5069 = vadd.f32 %v3395, %v5068
    %v5070 = vpop.f32.mrb[0].mxu0
    %v5071 = vadd.f32 %v3399, %v5070
    %v5072 = vpop.f32.mrb[0].mxu0
    %v5073 = vpop.f32.mrb[0].mxu0
    %5074 = vdwg.mxu0
    %5075 = vmatprep.subr.bf16.mxu0 %v4532
    %5076 = vmatpush1.bf16.msra.mxu0 %v4531
    %5077 = vmatprep.subr.bf16.mxu0 %v4537
    %5078 = vmatpush1.bf16.msra.mxu0 %v4536
    %5079 = vmatprep.subr.bf16.mxu0 %v4542
    %5080 = vmatpush1.bf16.msra.mxu0 %v4541
    %5081 = vmatprep.subr.bf16.mxu0 %v4547
    %5082 = vmatpush1.bf16.msra.mxu0 %v4546
    %5083 = vmatprep.subr.bf16.mxu0 %v4552
    %5084 = vmatpush1.bf16.msra.mxu0 %v4551
    %5085 = vmatprep.subr.bf16.mxu0 %v4557
    %5086 = vmatpush1.bf16.msra.mxu0 %v4556
    %5087 = vmatprep.subr.bf16.mxu0 %v4562
    %5088 = vmatpush1.bf16.msra.mxu0 %v4561
    %5089 = vmatprep.subr.bf16.mxu0 %v4567
    %5090 = vmatpush1.bf16.msra.mxu0 %v4566
    %5091 = vmatprep.subr.bf16.mxu0 %v4572
    %5092 = vmatpush1.bf16.msra.mxu0 %v4571
    %5093 = vmatprep.subr.bf16.mxu0 %v4577
    %5094 = vmatpush1.bf16.msra.mxu0 %v4576
    %5095 = vmatprep.subr.bf16.mxu0 %v4582
    %5096 = vmatpush1.bf16.msra.mxu0 %v4581
    %5097 = vmatprep.subr.bf16.mxu0 %v4587
    %5098 = vmatpush1.bf16.msra.mxu0 %v4586
    %5099 = vmatprep.subr.bf16.mxu0 %v4592
    %5100 = vmatpush1.bf16.msra.mxu0 %v4591
    %5101 = vmatprep.subr.bf16.mxu0 %v4597
    %5102 = vmatpush1.bf16.msra.mxu0 %v4596
    %5103 = vmatprep.subr.bf16.mxu0 %v4602
    %5104 = vmatpush1.bf16.msra.mxu0 %v4601
    %5105 = vmatprep.subr.bf16.mxu0 %v4607
    %5106 = vmatpush1.bf16.msra.mxu0 %v4606
    %5107 = vmatprep.mubr.bf16.mxu0 %v3535
    %5108 = vmatmul.mubr.bf16.gmra.mrb[0].mxu0 %v3534
    %v5109 = vpop.f32.mrb[0].mxu0
    %v5110 = vadd.f32 %v5069, %v5109
    %v5111 = vpop.f32.mrb[0].mxu0
    %v5112 = vadd.f32 %v5071, %v5111
    %v5113 = vpop.f32.mrb[0].mxu0
    %v5114 = vpop.f32.mrb[0].mxu0
    %5115 = vdwg.mxu0
    %5116 = vmatprep.subr.bf16.mxu0 %v4612
    %5117 = vmatpush1.bf16.msra.mxu0 %v4611
    %5118 = vmatprep.subr.bf16.mxu0 %v4617
    %5119 = vmatpush1.bf16.msra.mxu0 %v4616
    %5120 = vmatprep.subr.bf16.mxu0 %v4622
    %5121 = vmatpush1.bf16.msra.mxu0 %v4621
    %5122 = vmatprep.subr.bf16.mxu0 %v4627
    %5123 = vmatpush1.bf16.msra.mxu0 %v4626
    %5124 = vmatprep.subr.bf16.mxu0 %v4632
    %5125 = vmatpush1.bf16.msra.mxu0 %v4631
    %5126 = vmatprep.subr.bf16.mxu0 %v4637
    %5127 = vmatpush1.bf16.msra.mxu0 %v4636
    %5128 = vmatprep.subr.bf16.mxu0 %v4642
    %5129 = vmatpush1.bf16.msra.mxu0 %v4641
    %5130 = vmatprep.subr.bf16.mxu0 %v4647
    %5131 = vmatpush1.bf16.msra.mxu0 %v4646
    %5132 = vmatprep.subr.bf16.mxu0 %v4652
    %5133 = vmatpush1.bf16.msra.mxu0 %v4651
    %5134 = vmatprep.subr.bf16.mxu0 %v4657
    %5135 = vmatpush1.bf16.msra.mxu0 %v4656
    %5136 = vmatprep.subr.bf16.mxu0 %v4662
    %5137 = vmatpush1.bf16.msra.mxu0 %v4661
    %5138 = vmatprep.subr.bf16.mxu0 %v4667
    %5139 = vmatpush1.bf16.msra.mxu0 %v4666
    %5140 = vmatprep.subr.bf16.mxu0 %v4672
    %5141 = vmatpush1.bf16.msra.mxu0 %v4671
    %5142 = vmatprep.subr.bf16.mxu0 %v4677
    %5143 = vmatpush1.bf16.msra.mxu0 %v4676
    %5144 = vmatprep.subr.bf16.mxu0 %v4682
    %5145 = vmatpush1.bf16.msra.mxu0 %v4681
    %5146 = vmatprep.subr.bf16.mxu0 %v4687
    %5147 = vmatpush1.bf16.msra.mxu0 %v4686
    %5148 = vmatprep.mubr.bf16.mxu0 %v3537
    %5149 = vmatmul.mubr.bf16.gmra.mrb[0].mxu0 %v3536
    %v5150 = vpop.f32.mrb[0].mxu0
    %v5151 = vadd.f32 %v5110, %v5150
    %v5152 = vpop.f32.mrb[0].mxu0
    %v5153 = vadd.f32 %v5112, %v5152
    %v5154 = vpop.f32.mrb[0].mxu0
    %v5155 = vpop.f32.mrb[0].mxu0
    %5156 = vdwg.mxu0
    %5157 = vmatprep.subr.bf16.mxu0 %v4692
    %5158 = vmatpush1.bf16.msra.mxu0 %v4691
    %5159 = vmatprep.subr.bf16.mxu0 %v4697
    %5160 = vmatpush1.bf16.msra.mxu0 %v4696
    %5161 = vmatprep.subr.bf16.mxu0 %v4702
    %5162 = vmatpush1.bf16.msra.mxu0 %v4701
    %5163 = vmatprep.subr.bf16.mxu0 %v4707
    %5164 = vmatpush1.bf16.msra.mxu0 %v4706
    %5165 = vmatprep.subr.bf16.mxu0 %v4712
    %5166 = vmatpush1.bf16.msra.mxu0 %v4711
    %5167 = vmatprep.subr.bf16.mxu0 %v4717
    %5168 = vmatpush1.bf16.msra.mxu0 %v4716
    %5169 = vmatprep.subr.bf16.mxu0 %v4722
    %5170 = vmatpush1.bf16.msra.mxu0 %v4721
    %5171 = vmatprep.subr.bf16.mxu0 %v4727
    %5172 = vmatpush1.bf16.msra.mxu0 %v4726
    %5173 = vmatprep.subr.bf16.mxu0 %v5023
    %5174 = vmatpush1.bf16.msra.mxu0 %v5020
    %5175 = vmatprep.subr.bf16.mxu0 0
    %5176 = vmatpush1.bf16.msra.mxu0 0
    %5177 = vmatprep.subr.bf16.mxu0 0
    %5178 = vmatpush1.bf16.msra.mxu0 0
    %5179 = vmatprep.subr.bf16.mxu0 0
    %5180 = vmatpush1.bf16.msra.mxu0 0
    %5181 = vmatprep.subr.bf16.mxu0 0
    %5182 = vmatpush1.bf16.msra.mxu0 0
    %5183 = vmatprep.subr.bf16.mxu0 0
    %5184 = vmatpush1.bf16.msra.mxu0 0
    %5185 = vmatprep.subr.bf16.mxu0 0
    %5186 = vmatpush1.bf16.msra.mxu0 0
    %5187 = vmatprep.subr.bf16.mxu0 0
    %5188 = vmatpush1.bf16.msra.mxu0 0
    %5189 = vmatprep.mubr.bf16.mxu0 %v5017
    %5190 = vmatmul.mubr.bf16.gmra.mrb[0].mxu0 %v3538
    %v5191 = vpop.f32.mrb[0].mxu0
    %v5192 = vadd.f32 %v5151, %v5191
    %v5193 = vpop.f32.mrb[0].mxu0
    %v5194 = vadd.f32 %v5153, %v5193
    %v5195 = vpop.f32.mrb[0].mxu0
    %v5196 = vpop.f32.mrb[0].mxu0
    %5197 = vdwg.mxu0
    %5198 = vmatprep.subr.bf16.mxu0 %v4454
    %5199 = vmatpush1.bf16.msra.mxu0 %v4453
    %5200 = vmatprep.subr.bf16.mxu0 %v4459
    %5201 = vmatpush1.bf16.msra.mxu0 %v4458
    %5202 = vmatprep.subr.bf16.mxu0 %v4464
    %5203 = vmatpush1.bf16.msra.mxu0 %v4463
    %5204 = vmatprep.subr.bf16.mxu0 %v4469
    %5205 = vmatpush1.bf16.msra.mxu0 %v4468
    %5206 = vmatprep.subr.bf16.mxu0 %v4474
    %5207 = vmatpush1.bf16.msra.mxu0 %v4473
    %5208 = vmatprep.subr.bf16.mxu0 %v4479
    %5209 = vmatpush1.bf16.msra.mxu0 %v4478
    %5210 = vmatprep.subr.bf16.mxu0 %v4484
    %5211 = vmatpush1.bf16.msra.mxu0 %v4483
    %5212 = vmatprep.subr.bf16.mxu0 %v4489
    %5213 = vmatpush1.bf16.msra.mxu0 %v4488
    %5214 = vmatprep.subr.bf16.mxu0 %v4494
    %5215 = vmatpush1.bf16.msra.mxu0 %v4493
    %5216 = vmatprep.subr.bf16.mxu0 %v4499
    %5217 = vmatpush1.bf16.msra.mxu0 %v4498
    %5218 = vmatprep.subr.bf16.mxu0 %v4504
    %5219 = vmatpush1.bf16.msra.mxu0 %v4503
    %5220 = vmatprep.subr.bf16.mxu0 %v4509
    %5221 = vmatpush1.bf16.msra.mxu0 %v4508
    %5222 = vmatprep.subr.bf16.mxu0 %v4514
    %5223 = vmatpush1.bf16.msra.mxu0 %v4513
    %5224 = vmatprep.subr.bf16.mxu0 %v4519
    %5225 = vmatpush1.bf16.msra.mxu0 %v4518
    %5226 = vmatprep.subr.bf16.mxu0 %v4524
    %5227 = vmatpush1.bf16.msra.mxu0 %v4523
    %5228 = vmatprep.subr.bf16.mxu0 %v4529
    %5229 = vmatpush1.bf16.msra.mxu0 %v4528
    %5230 = vmatprep.mubr.bf16.mxu0 %v3533
    %5231 = vmatmul.mubr.bf16.gmra.mrb[0].mxu0 %v3532
    %v5232 = vpop.f32.mrb[0].mxu0
    %v5233 = vadd.f32 %v3403, %v5232
    %v5234 = vpop.f32.mrb[0].mxu0
    %v5235 = vadd.f32 %v3407, %v5234
    %v5236 = vpop.f32.mrb[0].mxu0
    %v5237 = vpop.f32.mrb[0].mxu0
    %5238 = vdwg.mxu0
    %5239 = vmatprep.subr.bf16.mxu0 %v4534
    %5240 = vmatpush1.bf16.msra.mxu0 %v4533
    %5241 = vmatprep.subr.bf16.mxu0 %v4539
    %5242 = vmatpush1.bf16.msra.mxu0 %v4538
    %5243 = vmatprep.subr.bf16.mxu0 %v4544
    %5244 = vmatpush1.bf16.msra.mxu0 %v4543
    %5245 = vmatprep.subr.bf16.mxu0 %v4549
    %5246 = vmatpush1.bf16.msra.mxu0 %v4548
    %5247 = vmatprep.subr.bf16.mxu0 %v4554
    %5248 = vmatpush1.bf16.msra.mxu0 %v4553
    %5249 = vmatprep.subr.bf16.mxu0 %v4559
    %5250 = vmatpush1.bf16.msra.mxu0 %v4558
    %5251 = vmatprep.subr.bf16.mxu0 %v4564
    %5252 = vmatpush1.bf16.msra.mxu0 %v4563
    %5253 = vmatprep.subr.bf16.mxu0 %v4569
    %5254 = vmatpush1.bf16.msra.mxu0 %v4568
    %5255 = vmatprep.subr.bf16.mxu0 %v4574
    %5256 = vmatpush1.bf16.msra.mxu0 %v4573
    %5257 = vmatprep.subr.bf16.mxu0 %v4579
    %5258 = vmatpush1.bf16.msra.mxu0 %v4578
    %5259 = vmatprep.subr.bf16.mxu0 %v4584
    %5260 = vmatpush1.bf16.msra.mxu0 %v4583
    %5261 = vmatprep.subr.bf16.mxu0 %v4589
    %5262 = vmatpush1.bf16.msra.mxu0 %v4588
    %5263 = vmatprep.subr.bf16.mxu0 %v4594
    %5264 = vmatpush1.bf16.msra.mxu0 %v4593
    %5265 = vmatprep.subr.bf16.mxu0 %v4599
    %5266 = vmatpush1.bf16.msra.mxu0 %v4598
    %5267 = vmatprep.subr.bf16.mxu0 %v4604
    %5268 = vmatpush1.bf16.msra.mxu0 %v4603
    %5269 = vmatprep.subr.bf16.mxu0 %v4609
    %5270 = vmatpush1.bf16.msra.mxu0 %v4608
    %5271 = vmatprep.mubr.bf16.mxu0 %v3535
    %5272 = vmatmul.mubr.bf16.gmra.mrb[0].mxu0 %v3534
    %v5273 = vpop.f32.mrb[0].mxu0
    %v5274 = vadd.f32 %v5233, %v5273
    %v5275 = vpop.f32.mrb[0].mxu0
    %v5276 = vadd.f32 %v5235, %v5275
    %v5277 = vpop.f32.mrb[0].mxu0
    %v5278 = vpop.f32.mrb[0].mxu0
    %5279 = vdwg.mxu0
    %5280 = vmatprep.subr.bf16.mxu0 %v4614
    %5281 = vmatpush1.bf16.msra.mxu0 %v4613
    %5282 = vmatprep.subr.bf16.mxu0 %v4619
    %5283 = vmatpush1.bf16.msra.mxu0 %v4618
    %5284 = vmatprep.subr.bf16.mxu0 %v4624
    %5285 = vmatpush1.bf16.msra.mxu0 %v4623
    %5286 = vmatprep.subr.bf16.mxu0 %v4629
    %5287 = vmatpush1.bf16.msra.mxu0 %v4628
    %5288 = vmatprep.subr.bf16.mxu0 %v4634
    %5289 = vmatpush1.bf16.msra.mxu0 %v4633
    %5290 = vmatprep.subr.bf16.mxu0 %v4639
    %5291 = vmatpush1.bf16.msra.mxu0 %v4638
    %5292 = vmatprep.subr.bf16.mxu0 %v4644
    %5293 = vmatpush1.bf16.msra.mxu0 %v4643
    %5294 = vmatprep.subr.bf16.mxu0 %v4649
    %5295 = vmatpush1.bf16.msra.mxu0 %v4648
    %5296 = vmatprep.subr.bf16.mxu0 %v4654
    %5297 = vmatpush1.bf16.msra.mxu0 %v4653
    %5298 = vmatprep.subr.bf16.mxu0 %v4659
    %5299 = vmatpush1.bf16.msra.mxu0 %v4658
    %5300 = vmatprep.subr.bf16.mxu0 %v4664
    %5301 = vmatpush1.bf16.msra.mxu0 %v4663
    %5302 = vmatprep.subr.bf16.mxu0 %v4669
    %5303 = vmatpush1.bf16.msra.mxu0 %v4668
    %5304 = vmatprep.subr.bf16.mxu0 %v4674
    %5305 = vmatpush1.bf16.msra.mxu0 %v4673
    %5306 = vmatprep.subr.bf16.mxu0 %v4679
    %5307 = vmatpush1.bf16.msra.mxu0 %v4678
    %5308 = vmatprep.subr.bf16.mxu0 %v4684
    %5309 = vmatpush1.bf16.msra.mxu0 %v4683
    %5310 = vmatprep.subr.bf16.mxu0 %v4689
    %5311 = vmatpush1.bf16.msra.mxu0 %v4688
    %5312 = vmatprep.mubr.bf16.mxu0 %v3537
    %5313 = vmatmul.mubr.bf16.gmra.mrb[0].mxu0 %v3536
    %v5314 = vpop.f32.mrb[0].mxu0
    %v5315 = vadd.f32 %v5274, %v5314
    %v5316 = vpop.f32.mrb[0].mxu0
    %v5317 = vadd.f32 %v5276, %v5316
    %v5318 = vpop.f32.mrb[0].mxu0
    %v5319 = vpop.f32.mrb[0].mxu0
    %5320 = vdwg.mxu0
    %5321 = vmatprep.subr.bf16.mxu0 %v4694
    %5322 = vmatpush1.bf16.msra.mxu0 %v4693
    %5323 = vmatprep.subr.bf16.mxu0 %v4699
    %5324 = vmatpush1.bf16.msra.mxu0 %v4698
    %5325 = vmatprep.subr.bf16.mxu0 %v4704
    %5326 = vmatpush1.bf16.msra.mxu0 %v4703
    %5327 = vmatprep.subr.bf16.mxu0 %v4709
    %5328 = vmatpush1.bf16.msra.mxu0 %v4708
    %5329 = vmatprep.subr.bf16.mxu0 %v4714
    %5330 = vmatpush1.bf16.msra.mxu0 %v4713
    %5331 = vmatprep.subr.bf16.mxu0 %v4719
    %5332 = vmatpush1.bf16.msra.mxu0 %v4718
    %5333 = vmatprep.subr.bf16.mxu0 %v4724
    %5334 = vmatpush1.bf16.msra.mxu0 %v4723
    %5335 = vmatprep.subr.bf16.mxu0 %v4729
    %5336 = vmatpush1.bf16.msra.mxu0 %v4728
    %5337 = vmatprep.subr.bf16.mxu0 %v5029
    %5338 = vmatpush1.bf16.msra.mxu0 %v5026
    %5339 = vmatprep.subr.bf16.mxu0 0
    %5340 = vmatpush1.bf16.msra.mxu0 0
    %5341 = vmatprep.subr.bf16.mxu0 0
    %5342 = vmatpush1.bf16.msra.mxu0 0
    %5343 = vmatprep.subr.bf16.mxu0 0
    %5344 = vmatpush1.bf16.msra.mxu0 0
    %5345 = vmatprep.subr.bf16.mxu0 0
    %5346 = vmatpush1.bf16.msra.mxu0 0
    %5347 = vmatprep.subr.bf16.mxu0 0
    %5348 = vmatpush1.bf16.msra.mxu0 0
    %5349 = vmatprep.subr.bf16.mxu0 0
    %5350 = vmatpush1.bf16.msra.mxu0 0
    %5351 = vmatprep.subr.bf16.mxu0 0
    %5352 = vmatpush1.bf16.msra.mxu0 0
    %5353 = vmatprep.mubr.bf16.mxu0 %v5017
    %5354 = vmatmul.mubr.bf16.gmra.mrb[0].mxu0 %v3538
    %v5355 = vpop.f32.mrb[0].mxu0
    %v5356 = vadd.f32 %v5315, %v5355
    %v5357 = vpop.f32.mrb[0].mxu0
    %v5358 = vadd.f32 %v5317, %v5357
    %v5359 = vpop.f32.mrb[0].mxu0
    %v5360 = vpop.f32.mrb[0].mxu0
    %5361 = vdwg.mxu0
    %5362 = vmatprep.subr.bf16.mxu0 0
    %5363 = vmatpush1.bf16.msra.mxu0 %v4455
    %5364 = vmatprep.subr.bf16.mxu0 0
    %5365 = vmatpush1.bf16.msra.mxu0 %v4460
    %5366 = vmatprep.subr.bf16.mxu0 0
    %5367 = vmatpush1.bf16.msra.mxu0 %v4465
    %5368 = vmatprep.subr.bf16.mxu0 0
    %5369 = vmatpush1.bf16.msra.mxu0 %v4470
    %5370 = vmatprep.subr.bf16.mxu0 0
    %5371 = vmatpush1.bf16.msra.mxu0 %v4475
    %5372 = vmatprep.subr.bf16.mxu0 0
    %5373 = vmatpush1.bf16.msra.mxu0 %v4480
    %5374 = vmatprep.subr.bf16.mxu0 0
    %5375 = vmatpush1.bf16.msra.mxu0 %v4485
    %5376 = vmatprep.subr.bf16.mxu0 0
    %5377 = vmatpush1.bf16.msra.mxu0 %v4490
    %5378 = vmatprep.subr.bf16.mxu0 0
    %5379 = vmatpush1.bf16.msra.mxu0 %v4495
    %5380 = vmatprep.subr.bf16.mxu0 0
    %5381 = vmatpush1.bf16.msra.mxu0 %v4500
    %5382 = vmatprep.subr.bf16.mxu0 0
    %5383 = vmatpush1.bf16.msra.mxu0 %v4505
    %5384 = vmatprep.subr.bf16.mxu0 0
    %5385 = vmatpush1.bf16.msra.mxu0 %v4510
    %5386 = vmatprep.subr.bf16.mxu0 0
    %5387 = vmatpush1.bf16.msra.mxu0 %v4515
    %5388 = vmatprep.subr.bf16.mxu0 0
    %5389 = vmatpush1.bf16.msra.mxu0 %v4520
    %5390 = vmatprep.subr.bf16.mxu0 0
    %5391 = vmatpush1.bf16.msra.mxu0 %v4525
    %5392 = vmatprep.subr.bf16.mxu0 0
    %5393 = vmatpush1.bf16.msra.mxu0 %v4530
    %5394 = vmatprep.mubr.bf16.mxu0 %v3533
    %5395 = vmatmul.mubr.bf16.gmra.mrb[0].mxu0 %v3532
    %v5396 = vpop.f32.mrb[0].mxu0
    %v5397 = vadd.f32 %v3411, %v5396
    %v5398 = vpop.f32.mrb[0].mxu0
    %v5399 = vpop.f32.mrb[0].mxu0
    %v5400 = vpop.f32.mrb[0].mxu0
    %5401 = vdwg.mxu0
    %5402 = vmatprep.subr.bf16.mxu0 0
    %5403 = vmatpush1.bf16.msra.mxu0 %v4535
    %5404 = vmatprep.subr.bf16.mxu0 0
    %5405 = vmatpush1.bf16.msra.mxu0 %v4540
    %5406 = vmatprep.subr.bf16.mxu0 0
    %5407 = vmatpush1.bf16.msra.mxu0 %v4545
    %5408 = vmatprep.subr.bf16.mxu0 0
    %5409 = vmatpush1.bf16.msra.mxu0 %v4550
    %5410 = vmatprep.subr.bf16.mxu0 0
    %5411 = vmatpush1.bf16.msra.mxu0 %v4555
    %5412 = vmatprep.subr.bf16.mxu0 0
    %5413 = vmatpush1.bf16.msra.mxu0 %v4560
    %5414 = vmatprep.subr.bf16.mxu0 0
    %5415 = vmatpush1.bf16.msra.mxu0 %v4565
    %5416 = vmatprep.subr.bf16.mxu0 0
    %5417 = vmatpush1.bf16.msra.mxu0 %v4570
    %5418 = vmatprep.subr.bf16.mxu0 0
    %5419 = vmatpush1.bf16.msra.mxu0 %v4575
    %5420 = vmatprep.subr.bf16.mxu0 0
    %5421 = vmatpush1.bf16.msra.mxu0 %v4580
    %5422 = vmatprep.subr.bf16.mxu0 0
    %5423 = vmatpush1.bf16.msra.mxu0 %v4585
    %5424 = vmatprep.subr.bf16.mxu0 0
    %5425 = vmatpush1.bf16.msra.mxu0 %v4590
    %5426 = vmatprep.subr.bf16.mxu0 0
    %5427 = vmatpush1.bf16.msra.mxu0 %v4595
    %5428 = vmatprep.subr.bf16.mxu0 0
    %5429 = vmatpush1.bf16.msra.mxu0 %v4600
    %5430 = vmatprep.subr.bf16.mxu0 0
    %5431 = vmatpush1.bf16.msra.mxu0 %v4605
    %5432 = vmatprep.subr.bf16.mxu0 0
    %5433 = vmatpush1.bf16.msra.mxu0 %v4610
    %5434 = vmatprep.mubr.bf16.mxu0 %v3535
    %5435 = vmatmul.mubr.bf16.gmra.mrb[0].mxu0 %v3534
    %v5436 = vpop.f32.mrb[0].mxu0
    %v5437 = vadd.f32 %v5397, %v5436
    %v5438 = vpop.f32.mrb[0].mxu0
    %v5439 = vpop.f32.mrb[0].mxu0
    %v5440 = vpop.f32.mrb[0].mxu0
    %5441 = vdwg.mxu0
    %5442 = vmatprep.subr.bf16.mxu0 0
    %5443 = vmatpush1.bf16.msra.mxu0 %v4615
    %5444 = vmatprep.subr.bf16.mxu0 0
    %5445 = vmatpush1.bf16.msra.mxu0 %v4620
    %5446 = vmatprep.subr.bf16.mxu0 0
    %5447 = vmatpush1.bf16.msra.mxu0 %v4625
    %5448 = vmatprep.subr.bf16.mxu0 0
    %5449 = vmatpush1.bf16.msra.mxu0 %v4630
    %5450 = vmatprep.subr.bf16.mxu0 0
    %5451 = vmatpush1.bf16.msra.mxu0 %v4635
    %5452 = vmatprep.subr.bf16.mxu0 0
    %5453 = vmatpush1.bf16.msra.mxu0 %v4640
    %5454 = vmatprep.subr.bf16.mxu0 0
    %5455 = vmatpush1.bf16.msra.mxu0 %v4645
    %5456 = vmatprep.subr.bf16.mxu0 0
    %5457 = vmatpush1.bf16.msra.mxu0 %v4650
    %5458 = vmatprep.subr.bf16.mxu0 0
    %5459 = vmatpush1.bf16.msra.mxu0 %v4655
    %5460 = vmatprep.subr.bf16.mxu0 0
    %5461 = vmatpush1.bf16.msra.mxu0 %v4660
    %5462 = vmatprep.subr.bf16.mxu0 0
    %5463 = vmatpush1.bf16.msra.mxu0 %v4665
    %5464 = vmatprep.subr.bf16.mxu0 0
    %5465 = vmatpush1.bf16.msra.mxu0 %v4670
    %5466 = vmatprep.subr.bf16.mxu0 0
    %5467 = vmatpush1.bf16.msra.mxu0 %v4675
    %5468 = vmatprep.subr.bf16.mxu0 0
    %5469 = vmatpush1.bf16.msra.mxu0 %v4680
    %5470 = vmatprep.subr.bf16.mxu0 0
    %5471 = vmatpush1.bf16.msra.mxu0 %v4685
    %5472 = vmatprep.subr.bf16.mxu0 0
    %5473 = vmatpush1.bf16.msra.mxu0 %v4690
    %5474 = vmatprep.mubr.bf16.mxu0 %v3537
    %5475 = vmatmul.mubr.bf16.gmra.mrb[0].mxu0 %v3536
    %v5476 = vpop.f32.mrb[0].mxu0
    %v5477 = vadd.f32 %v5437, %v5476
    %v5478 = vpop.f32.mrb[0].mxu0
    %v5479 = vpop.f32.mrb[0].mxu0
    %v5480 = vpop.f32.mrb[0].mxu0
    %5481 = vdwg.mxu0
    %5482 = vmatprep.subr.bf16.mxu0 0
    %5483 = vmatpush1.bf16.msra.mxu0 %v4695
    %5484 = vmatprep.subr.bf16.mxu0 0
    %5485 = vmatpush1.bf16.msra.mxu0 %v4700
    %5486 = vmatprep.subr.bf16.mxu0 0
    %5487 = vmatpush1.bf16.msra.mxu0 %v4705
    %5488 = vmatprep.subr.bf16.mxu0 0
    %5489 = vmatpush1.bf16.msra.mxu0 %v4710
    %5490 = vmatprep.subr.bf16.mxu0 0
    %5491 = vmatpush1.bf16.msra.mxu0 %v4715
    %5492 = vmatprep.subr.bf16.mxu0 0
    %5493 = vmatpush1.bf16.msra.mxu0 %v4720
    %5494 = vmatprep.subr.bf16.mxu0 0
    %5495 = vmatpush1.bf16.msra.mxu0 %v4725
    %5496 = vmatprep.subr.bf16.mxu0 0
    %5497 = vmatpush1.bf16.msra.mxu0 %v4730
    %5498 = vmatprep.subr.bf16.mxu0 0
    %5499 = vmatpush1.bf16.msra.mxu0 %v5032
    %5500 = vmatprep.subr.bf16.mxu0 0
    %5501 = vmatpush1.bf16.msra.mxu0 0
    %5502 = vmatprep.subr.bf16.mxu0 0
    %5503 = vmatpush1.bf16.msra.mxu0 0
    %5504 = vmatprep.subr.bf16.mxu0 0
    %5505 = vmatpush1.bf16.msra.mxu0 0
    %5506 = vmatprep.subr.bf16.mxu0 0
    %5507 = vmatpush1.bf16.msra.mxu0 0
    %5508 = vmatprep.subr.bf16.mxu0 0
    %5509 = vmatpush1.bf16.msra.mxu0 0
    %5510 = vmatprep.subr.bf16.mxu0 0
    %5511 = vmatpush1.bf16.msra.mxu0 0
    %5512 = vmatprep.subr.bf16.mxu0 0
    %5513 = vmatpush1.bf16.msra.mxu0 0
    %5514 = vmatprep.mubr.bf16.mxu0 %v5017
    %5515 = vmatmul.mubr.bf16.gmra.mrb[0].mxu0 %v3538
    %v5516 = vpop.f32.mrb[0].mxu0
    %v5517 = vadd.f32 %v5477, %v5516
    %v5518 = vpop.f32.mrb[0].mxu0
    %v5519 = vpop.f32.mrb[0].mxu0
    %v5520 = vpop.f32.mrb[0].mxu0
    %5521 = vdwg.mxu0
    %v5522 = vtanh.pop %v5192
    %v5523 = vtanh.pop %v5194
    %v5524 = vtanh.pop %v5356
    %v5525 = vtanh.pop %v5358
    %v5526 = vtanh.pop %v5517
    %v5531 = vcombine.low %v5522, %v5523
    %v5532 = vcombine.low %v5524, %v5525
    %5535 = vst [vmem:[%s12] sm:$0xff] %v5531
    %5536 = vst [vmem:[%s12 + $0x8] sm:$0xff] %v5532
    %vm5537 = vcmask 715776
    %5538 = vst.msk [vmem:[%s12 + $0x10] sm:$0xf] %vm5537, %v5526
    %v5539 = vpack.c.bf16 %v5522, %v5522
    %v5540 = vpack.c.bf16 %v5523, %v5523
    %v5541 = vpack.c.bf16 %v5524, %v5524
    %v5542 = vpack.c.bf16 %v5525, %v5525
    %v5543 = vpack.c.bf16 %v5526, %v5526
    %v5544 = vld [vmem:[#allocation11] sm:$0xff]
    %v5545 = vld [vmem:[#allocation11 + $0x8] sm:$0xff]
    %v5546 = vld [vmem:[#allocation11 + $0x10] sm:$0xf]
    %v5547 = vld [vmem:[#allocation11 + $0x14] sm:$0xff]
    %v5548 = vld [vmem:[#allocation11 + $0x1c] sm:$0xff]
    %v5549 = vld [vmem:[#allocation11 + $0x24] sm:$0xf]
    %v5550 = vld [vmem:[#allocation11 + $0x28] sm:$0xff]
    %v5551 = vld [vmem:[#allocation11 + $0x30] sm:$0xff]
    %v5552 = vld [vmem:[#allocation11 + $0x38] sm:$0xf]
    %v5553 = vld [vmem:[#allocation11 + $0x3c] sm:$0xff]
    %v5554 = vld [vmem:[#allocation11 + $0x44] sm:$0xff]
    %v5555 = vld [vmem:[#allocation11 + $0x4c] sm:$0xf]
    %v5556 = vld [vmem:[#allocation11 + $0x50] sm:$0xff]
    %v5557 = vld [vmem:[#allocation11 + $0x58] sm:$0xff]
    %v5558 = vld [vmem:[#allocation11 + $0x60] sm:$0xf]
    %v5559 = vld [vmem:[#allocation11 + $0x64] sm:$0xff]
    %v5560 = vld [vmem:[#allocation11 + $0x6c] sm:$0xff]
    %v5561 = vld [vmem:[#allocation11 + $0x74] sm:$0xf]
    %v5562 = vld [vmem:[#allocation11 + $0x78] sm:$0xff]
    %v5563 = vld [vmem:[#allocation11 + $0x80] sm:$0xff]
    %v5564 = vld [vmem:[#allocation11 + $0x88] sm:$0xf]
    %v5565 = vld [vmem:[#allocation11 + $0x8c] sm:$0xff]
    %v5566 = vld [vmem:[#allocation11 + $0x94] sm:$0xff]
    %v5567 = vld [vmem:[#allocation11 + $0x9c] sm:$0xf]
    %v5568 = vld [vmem:[#allocation11 + $0xa0] sm:$0xff]
    %v5569 = vld [vmem:[#allocation11 + $0xa8] sm:$0xff]
    %v5570 = vld [vmem:[#allocation11 + $0xb0] sm:$0xf]
    %v5571 = vld [vmem:[#allocation11 + $0xb4] sm:$0xff]
    %v5572 = vld [vmem:[#allocation11 + $0xbc] sm:$0xff]
    %v5573 = vld [vmem:[#allocation11 + $0xc4] sm:$0xf]
    %v5574 = vld [vmem:[#allocation11 + $0xc8] sm:$0xff]
    %v5575 = vld [vmem:[#allocation11 + $0xd0] sm:$0xff]
    %v5576 = vld [vmem:[#allocation11 + $0xd8] sm:$0xf]
    %v5577 = vld [vmem:[#allocation11 + $0xdc] sm:$0xff]
    %v5578 = vld [vmem:[#allocation11 + $0xe4] sm:$0xff]
    %v5579 = vld [vmem:[#allocation11 + $0xec] sm:$0xf]
    %v5580 = vld [vmem:[#allocation11 + $0xf0] sm:$0xff]
    %v5581 = vld [vmem:[#allocation11 + $0xf8] sm:$0xff]
    %v5582 = vld [vmem:[#allocation11 + $0x100] sm:$0xf]
    %v5583 = vld [vmem:[#allocation11 + $0x104] sm:$0xff]
    %v5584 = vld [vmem:[#allocation11 + $0x10c] sm:$0xff]
    %v5585 = vld [vmem:[#allocation11 + $0x114] sm:$0xf]
    %v5586 = vld [vmem:[#allocation11 + $0x118] sm:$0xff]
    %v5587 = vld [vmem:[#allocation11 + $0x120] sm:$0xff]
    %v5588 = vld [vmem:[#allocation11 + $0x128] sm:$0xf]
    %v5589 = vld [vmem:[#allocation11 + $0x12c] sm:$0xff]
    %v5590 = vld [vmem:[#allocation11 + $0x134] sm:$0xff]
    %v5591 = vld [vmem:[#allocation11 + $0x13c] sm:$0xf]
    %v5592 = vld [vmem:[#allocation11 + $0x140] sm:$0xff]
    %v5593 = vld [vmem:[#allocation11 + $0x148] sm:$0xff]
    %v5594 = vld [vmem:[#allocation11 + $0x150] sm:$0xf]
    %v5595 = vld [vmem:[#allocation11 + $0x154] sm:$0xff]
    %v5596 = vld [vmem:[#allocation11 + $0x15c] sm:$0xff]
    %v5597 = vld [vmem:[#allocation11 + $0x164] sm:$0xf]
    %v5598 = vld [vmem:[#allocation11 + $0x168] sm:$0xff]
    %v5599 = vld [vmem:[#allocation11 + $0x170] sm:$0xff]
    %v5600 = vld [vmem:[#allocation11 + $0x178] sm:$0xf]
    %v5601 = vld [vmem:[#allocation11 + $0x17c] sm:$0xff]
    %v5602 = vld [vmem:[#allocation11 + $0x184] sm:$0xff]
    %v5603 = vld [vmem:[#allocation11 + $0x18c] sm:$0xf]
    %v5604 = vld [vmem:[#allocation11 + $0x190] sm:$0xff]
    %v5605 = vld [vmem:[#allocation11 + $0x198] sm:$0xff]
    %v5606 = vld [vmem:[#allocation11 + $0x1a0] sm:$0xf]
    %v5607 = vld [vmem:[#allocation11 + $0x1a4] sm:$0xff]
    %v5608 = vld [vmem:[#allocation11 + $0x1ac] sm:$0xff]
    %v5609 = vld [vmem:[#allocation11 + $0x1b4] sm:$0xf]
    %v5610 = vld [vmem:[#allocation11 + $0x1b8] sm:$0xff]
    %v5611 = vld [vmem:[#allocation11 + $0x1c0] sm:$0xff]
    %v5612 = vld [vmem:[#allocation11 + $0x1c8] sm:$0xf]
    %v5613 = vld [vmem:[#allocation11 + $0x1cc] sm:$0xff]
    %v5614 = vld [vmem:[#allocation11 + $0x1d4] sm:$0xff]
    %v5615 = vld [vmem:[#allocation11 + $0x1dc] sm:$0xf]
    %v5616 = vld [vmem:[#allocation11 + $0x1e0] sm:$0xff]
    %v5617 = vld [vmem:[#allocation11 + $0x1e8] sm:$0xff]
    %v5618 = vld [vmem:[#allocation11 + $0x1f0] sm:$0xf]
    %v5619 = vld [vmem:[#allocation11 + $0x1f4] sm:$0xff]
    %v5620 = vld [vmem:[#allocation11 + $0x1fc] sm:$0xff]
    %v5621 = vld [vmem:[#allocation11 + $0x204] sm:$0xf]
    %v5622 = vld [vmem:[#allocation11 + $0x208] sm:$0xff]
    %v5623 = vld [vmem:[#allocation11 + $0x210] sm:$0xff]
    %v5624 = vld [vmem:[#allocation11 + $0x218] sm:$0xf]
    %v5625 = vld [vmem:[#allocation11 + $0x21c] sm:$0xff]
    %v5626 = vld [vmem:[#allocation11 + $0x224] sm:$0xff]
    %v5627 = vld [vmem:[#allocation11 + $0x22c] sm:$0xf]
    %v5628 = vld [vmem:[#allocation11 + $0x230] sm:$0xff]
    %v5629 = vld [vmem:[#allocation11 + $0x238] sm:$0xff]
    %v5630 = vld [vmem:[#allocation11 + $0x240] sm:$0xf]
    %v5631 = vld [vmem:[#allocation11 + $0x244] sm:$0xff]
    %v5632 = vld [vmem:[#allocation11 + $0x24c] sm:$0xff]
    %v5633 = vld [vmem:[#allocation11 + $0x254] sm:$0xf]
    %v5634 = vld [vmem:[#allocation11 + $0x258] sm:$0xff]
    %v5635 = vld [vmem:[#allocation11 + $0x260] sm:$0xff]
    %v5636 = vld [vmem:[#allocation11 + $0x268] sm:$0xf]
    %v5637 = vld [vmem:[#allocation11 + $0x26c] sm:$0xff]
    %v5638 = vld [vmem:[#allocation11 + $0x274] sm:$0xff]
    %v5639 = vld [vmem:[#allocation11 + $0x27c] sm:$0xf]
    %v5640 = vld [vmem:[#allocation11 + $0x280] sm:$0xff]
    %v5641 = vld [vmem:[#allocation11 + $0x288] sm:$0xff]
    %v5642 = vld [vmem:[#allocation11 + $0x290] sm:$0xf]
    %v5643 = vld [vmem:[#allocation11 + $0x294] sm:$0xff]
    %v5644 = vld [vmem:[#allocation11 + $0x29c] sm:$0xff]
    %v5645 = vld [vmem:[#allocation11 + $0x2a4] sm:$0xf]
    %v5646 = vld [vmem:[#allocation11 + $0x2a8] sm:$0xff]
    %v5647 = vld [vmem:[#allocation11 + $0x2b0] sm:$0xff]
    %v5648 = vld [vmem:[#allocation11 + $0x2b8] sm:$0xf]
    %v5649 = vld [vmem:[#allocation11 + $0x2bc] sm:$0xff]
    %v5650 = vld [vmem:[#allocation11 + $0x2c4] sm:$0xff]
    %v5651 = vld [vmem:[#allocation11 + $0x2cc] sm:$0xf]
    %v5652 = vld [vmem:[#allocation11 + $0x2d0] sm:$0xff]
    %v5653 = vld [vmem:[#allocation11 + $0x2d8] sm:$0xff]
    %v5654 = vld [vmem:[#allocation11 + $0x2e0] sm:$0xf]
    %v5655 = vld [vmem:[#allocation11 + $0x2e4] sm:$0xff]
    %v5656 = vld [vmem:[#allocation11 + $0x2ec] sm:$0xff]
    %v5657 = vld [vmem:[#allocation11 + $0x2f4] sm:$0xf]
    %v5658 = vld [vmem:[#allocation11 + $0x2f8] sm:$0xff]
    %v5659 = vld [vmem:[#allocation11 + $0x300] sm:$0xff]
    %v5660 = vld [vmem:[#allocation11 + $0x308] sm:$0xf]
    %v5661 = vld [vmem:[#allocation11 + $0x30c] sm:$0xff]
    %v5662 = vld [vmem:[#allocation11 + $0x314] sm:$0xff]
    %v5663 = vld [vmem:[#allocation11 + $0x31c] sm:$0xf]
    %v5664 = vld [vmem:[#allocation11 + $0x320] sm:$0xff]
    %v5665 = vld [vmem:[#allocation11 + $0x328] sm:$0xff]
    %v5666 = vld [vmem:[#allocation11 + $0x330] sm:$0xf]
    %v5667 = vld [vmem:[#allocation11 + $0x334] sm:$0xff]
    %v5668 = vld [vmem:[#allocation11 + $0x33c] sm:$0xff]
    %v5669 = vld [vmem:[#allocation11 + $0x344] sm:$0xf]
    %v5670 = vld [vmem:[#allocation11 + $0x348] sm:$0xff]
    %v5671 = vld [vmem:[#allocation11 + $0x350] sm:$0xff]
    %v5672 = vld [vmem:[#allocation11 + $0x358] sm:$0xf]
    %v5673 = vld [vmem:[#allocation11 + $0x35c] sm:$0xff]
    %v5674 = vld [vmem:[#allocation11 + $0x364] sm:$0xff]
    %v5675 = vld [vmem:[#allocation11 + $0x36c] sm:$0xf]
    %v5676 = vld [vmem:[#allocation11 + $0x370] sm:$0xff]
    %v5677 = vld [vmem:[#allocation11 + $0x378] sm:$0xff]
    %v5678 = vld [vmem:[#allocation11 + $0x380] sm:$0xf]
    %v5679 = vld [vmem:[#allocation11 + $0x384] sm:$0xff]
    %v5680 = vld [vmem:[#allocation11 + $0x38c] sm:$0xff]
    %v5681 = vld [vmem:[#allocation11 + $0x394] sm:$0xf]
    %v5682 = vld [vmem:[#allocation11 + $0x398] sm:$0xff]
    %v5683 = vld [vmem:[#allocation11 + $0x3a0] sm:$0xff]
    %v5684 = vld [vmem:[#allocation11 + $0x3a8] sm:$0xf]
    %v5685 = vld [vmem:[#allocation11 + $0x3ac] sm:$0xff]
    %v5686 = vld [vmem:[#allocation11 + $0x3b4] sm:$0xff]
    %v5687 = vld [vmem:[#allocation11 + $0x3bc] sm:$0xf]
    %v5688 = vld [vmem:[#allocation11 + $0x3c0] sm:$0xff]
    %v5689 = vld [vmem:[#allocation11 + $0x3c8] sm:$0xff]
    %v5690 = vld [vmem:[#allocation11 + $0x3d0] sm:$0xf]
    %v5691 = vld [vmem:[#allocation11 + $0x3d4] sm:$0xff]
    %v5692 = vld [vmem:[#allocation11 + $0x3dc] sm:$0xff]
    %v5693 = vld [vmem:[#allocation11 + $0x3e4] sm:$0xf]
    %v5694 = vld [vmem:[#allocation11 + $0x3e8] sm:$0xff]
    %v5695 = vld [vmem:[#allocation11 + $0x3f0] sm:$0xff]
    %v5696 = vld [vmem:[#allocation11 + $0x3f8] sm:$0xf]
    %v5697 = vld [vmem:[#allocation11 + $0x3fc] sm:$0xff]
    %v5698 = vld [vmem:[#allocation11 + $0x404] sm:$0xff]
    %v5699 = vld [vmem:[#allocation11 + $0x40c] sm:$0xf]
    %v5700 = vld [vmem:[#allocation11 + $0x410] sm:$0xff]
    %v5701 = vld [vmem:[#allocation11 + $0x418] sm:$0xff]
    %v5702 = vld [vmem:[#allocation11 + $0x420] sm:$0xf]
    %v5703 = vld [vmem:[#allocation11 + $0x424] sm:$0xff]
    %v5704 = vld [vmem:[#allocation11 + $0x42c] sm:$0xff]
    %v5705 = vld [vmem:[#allocation11 + $0x434] sm:$0xf]
    %v5706 = vld [vmem:[#allocation11 + $0x438] sm:$0xff]
    %v5707 = vld [vmem:[#allocation11 + $0x440] sm:$0xff]
    %v5708 = vld [vmem:[#allocation11 + $0x448] sm:$0xf]
    %v5709 = vld [vmem:[#allocation11 + $0x44c] sm:$0xff]
    %v5710 = vld [vmem:[#allocation11 + $0x454] sm:$0xff]
    %v5711 = vld [vmem:[#allocation11 + $0x45c] sm:$0xf]
    %v5712 = vld [vmem:[#allocation11 + $0x460] sm:$0xff]
    %v5713 = vld [vmem:[#allocation11 + $0x468] sm:$0xff]
    %v5714 = vld [vmem:[#allocation11 + $0x470] sm:$0xf]
    %v5715 = vld [vmem:[#allocation11 + $0x474] sm:$0xff]
    %v5716 = vld [vmem:[#allocation11 + $0x47c] sm:$0xff]
    %v5717 = vld [vmem:[#allocation11 + $0x484] sm:$0xf]
    %v5718 = vld [vmem:[#allocation11 + $0x488] sm:$0xff]
    %v5719 = vld [vmem:[#allocation11 + $0x490] sm:$0xff]
    %v5720 = vld [vmem:[#allocation11 + $0x498] sm:$0xf]
    %v5721 = vld [vmem:[#allocation11 + $0x49c] sm:$0xff]
    %v5722 = vld [vmem:[#allocation11 + $0x4a4] sm:$0xff]
    %v5723 = vld [vmem:[#allocation11 + $0x4ac] sm:$0xf]
    %v5724 = vld [vmem:[#allocation11 + $0x4b0] sm:$0xff]
    %v5725 = vld [vmem:[#allocation11 + $0x4b8] sm:$0xff]
    %v5726 = vld [vmem:[#allocation11 + $0x4c0] sm:$0xf]
    %v5727 = vld [vmem:[#allocation11 + $0x4c4] sm:$0xff]
    %v5728 = vld [vmem:[#allocation11 + $0x4cc] sm:$0xff]
    %v5729 = vld [vmem:[#allocation11 + $0x4d4] sm:$0xf]
    %v5730 = vld [vmem:[#allocation11 + $0x4d8] sm:$0xff]
    %v5731 = vld [vmem:[#allocation11 + $0x4e0] sm:$0xff]
    %v5732 = vld [vmem:[#allocation11 + $0x4e8] sm:$0xf]
    %v5733 = vld [vmem:[#allocation11 + $0x4ec] sm:$0xff]
    %v5734 = vld [vmem:[#allocation11 + $0x4f4] sm:$0xff]
    %v5735 = vld [vmem:[#allocation11 + $0x4fc] sm:$0xf]
    %v5736 = vld [vmem:[#allocation11 + $0x500] sm:$0xff]
    %v5737 = vld [vmem:[#allocation11 + $0x508] sm:$0xff]
    %v5738 = vld [vmem:[#allocation11 + $0x510] sm:$0xf]
    %v5739 = vld [vmem:[#allocation11 + $0x514] sm:$0xff]
    %v5740 = vld [vmem:[#allocation11 + $0x51c] sm:$0xff]
    %v5741 = vld [vmem:[#allocation11 + $0x524] sm:$0xf]
    %v5742 = vld [vmem:[#allocation11 + $0x528] sm:$0xff]
    %v5743 = vld [vmem:[#allocation11 + $0x530] sm:$0xff]
    %v5744 = vld [vmem:[#allocation11 + $0x538] sm:$0xf]
    %v5745 = vld [vmem:[#allocation11 + $0x53c] sm:$0xff]
    %v5746 = vld [vmem:[#allocation11 + $0x544] sm:$0xff]
    %v5747 = vld [vmem:[#allocation11 + $0x54c] sm:$0xf]
    %v5748 = vld [vmem:[#allocation11 + $0x550] sm:$0xff]
    %v5749 = vld [vmem:[#allocation11 + $0x558] sm:$0xff]
    %v5750 = vld [vmem:[#allocation11 + $0x560] sm:$0xf]
    %v5751 = vld [vmem:[#allocation11 + $0x564] sm:$0xff]
    %v5752 = vld [vmem:[#allocation11 + $0x56c] sm:$0xff]
    %v5753 = vld [vmem:[#allocation11 + $0x574] sm:$0xf]
    %v5754 = vld [vmem:[#allocation11 + $0x578] sm:$0xff]
    %v5755 = vld [vmem:[#allocation11 + $0x580] sm:$0xff]
    %v5756 = vld [vmem:[#allocation11 + $0x588] sm:$0xf]
    %v5757 = vld [vmem:[#allocation11 + $0x58c] sm:$0xff]
    %v5758 = vld [vmem:[#allocation11 + $0x594] sm:$0xff]
    %v5759 = vld [vmem:[#allocation11 + $0x59c] sm:$0xf]
    %v5760 = vld [vmem:[#allocation11 + $0x5a0] sm:$0xff]
    %v5761 = vld [vmem:[#allocation11 + $0x5a8] sm:$0xff]
    %v5762 = vld [vmem:[#allocation11 + $0x5b0] sm:$0xf]
    %v5763 = vld [vmem:[#allocation11 + $0x5b4] sm:$0xff]
    %v5764 = vld [vmem:[#allocation11 + $0x5bc] sm:$0xff]
    %v5765 = vld [vmem:[#allocation11 + $0x5c4] sm:$0xf]
    %v5766 = vld [vmem:[#allocation11 + $0x5c8] sm:$0xff]
    %v5767 = vld [vmem:[#allocation11 + $0x5d0] sm:$0xff]
    %v5768 = vld [vmem:[#allocation11 + $0x5d8] sm:$0xf]
    %v5994 = vunpack.c.l.b16 %v5544
    %v5995 = vunpack.c.h.b16 %v5544
    %v5996 = vunpack.c.l.b16 %v5545
    %v5997 = vunpack.c.h.b16 %v5545
    %v5998 = vunpack.c.l.b16 %v5546
    %v5999 = vunpack.c.l.b16 %v5547
    %v6000 = vunpack.c.h.b16 %v5547
    %v6001 = vunpack.c.l.b16 %v5548
    %v6002 = vunpack.c.h.b16 %v5548
    %v6003 = vunpack.c.l.b16 %v5549
    %v6004 = vunpack.c.l.b16 %v5550
    %v6005 = vunpack.c.h.b16 %v5550
    %v6006 = vunpack.c.l.b16 %v5551
    %v6007 = vunpack.c.h.b16 %v5551
    %v6008 = vunpack.c.l.b16 %v5552
    %v6009 = vunpack.c.l.b16 %v5553
    %v6010 = vunpack.c.h.b16 %v5553
    %v6011 = vunpack.c.l.b16 %v5554
    %v6012 = vunpack.c.h.b16 %v5554
    %v6013 = vunpack.c.l.b16 %v5555
    %v6014 = vunpack.c.l.b16 %v5556
    %v6015 = vunpack.c.h.b16 %v5556
    %v6016 = vunpack.c.l.b16 %v5557
    %v6017 = vunpack.c.h.b16 %v5557
    %v6018 = vunpack.c.l.b16 %v5558
    %v6019 = vunpack.c.l.b16 %v5559
    %v6020 = vunpack.c.h.b16 %v5559
    %v6021 = vunpack.c.l.b16 %v5560
    %v6022 = vunpack.c.h.b16 %v5560
    %v6023 = vunpack.c.l.b16 %v5561
    %v6024 = vunpack.c.l.b16 %v5562
    %v6025 = vunpack.c.h.b16 %v5562
    %v6026 = vunpack.c.l.b16 %v5563
    %v6027 = vunpack.c.h.b16 %v5563
    %v6028 = vunpack.c.l.b16 %v5564
    %v6029 = vunpack.c.l.b16 %v5565
    %v6030 = vunpack.c.h.b16 %v5565
    %v6031 = vunpack.c.l.b16 %v5566
    %v6032 = vunpack.c.h.b16 %v5566
    %v6033 = vunpack.c.l.b16 %v5567
    %v6034 = vunpack.c.l.b16 %v5568
    %v6035 = vunpack.c.h.b16 %v5568
    %v6036 = vunpack.c.l.b16 %v5569
    %v6037 = vunpack.c.h.b16 %v5569
    %v6038 = vunpack.c.l.b16 %v5570
    %v6039 = vunpack.c.l.b16 %v5571
    %v6040 = vunpack.c.h.b16 %v5571
    %v6041 = vunpack.c.l.b16 %v5572
    %v6042 = vunpack.c.h.b16 %v5572
    %v6043 = vunpack.c.l.b16 %v5573
    %v6044 = vunpack.c.l.b16 %v5574
    %v6045 = vunpack.c.h.b16 %v5574
    %v6046 = vunpack.c.l.b16 %v5575
    %v6047 = vunpack.c.h.b16 %v5575
    %v6048 = vunpack.c.l.b16 %v5576
    %v6049 = vunpack.c.l.b16 %v5577
    %v6050 = vunpack.c.h.b16 %v5577
    %v6051 = vunpack.c.l.b16 %v5578
    %v6052 = vunpack.c.h.b16 %v5578
    %v6053 = vunpack.c.l.b16 %v5579
    %v6054 = vunpack.c.l.b16 %v5580
    %v6055 = vunpack.c.h.b16 %v5580
    %v6056 = vunpack.c.l.b16 %v5581
    %v6057 = vunpack.c.h.b16 %v5581
    %v6058 = vunpack.c.l.b16 %v5582
    %v6059 = vunpack.c.l.b16 %v5583
    %v6060 = vunpack.c.h.b16 %v5583
    %v6061 = vunpack.c.l.b16 %v5584
    %v6062 = vunpack.c.h.b16 %v5584
    %v6063 = vunpack.c.l.b16 %v5585
    %v6064 = vunpack.c.l.b16 %v5586
    %v6065 = vunpack.c.h.b16 %v5586
    %v6066 = vunpack.c.l.b16 %v5587
    %v6067 = vunpack.c.h.b16 %v5587
    %v6068 = vunpack.c.l.b16 %v5588
    %v6069 = vunpack.c.l.b16 %v5589
    %v6070 = vunpack.c.h.b16 %v5589
    %v6071 = vunpack.c.l.b16 %v5590
    %v6072 = vunpack.c.h.b16 %v5590
    %v6073 = vunpack.c.l.b16 %v5591
    %v6074 = vunpack.c.l.b16 %v5592
    %v6075 = vunpack.c.h.b16 %v5592
    %v6076 = vunpack.c.l.b16 %v5593
    %v6077 = vunpack.c.h.b16 %v5593
    %v6078 = vunpack.c.l.b16 %v5594
    %v6079 = vunpack.c.l.b16 %v5595
    %v6080 = vunpack.c.h.b16 %v5595
    %v6081 = vunpack.c.l.b16 %v5596
    %v6082 = vunpack.c.h.b16 %v5596
    %v6083 = vunpack.c.l.b16 %v5597
    %v6084 = vunpack.c.l.b16 %v5598
    %v6085 = vunpack.c.h.b16 %v5598
    %v6086 = vunpack.c.l.b16 %v5599
    %v6087 = vunpack.c.h.b16 %v5599
    %v6088 = vunpack.c.l.b16 %v5600
    %v6089 = vunpack.c.l.b16 %v5601
    %v6090 = vunpack.c.h.b16 %v5601
    %v6091 = vunpack.c.l.b16 %v5602
    %v6092 = vunpack.c.h.b16 %v5602
    %v6093 = vunpack.c.l.b16 %v5603
    %v6094 = vunpack.c.l.b16 %v5604
    %v6095 = vunpack.c.h.b16 %v5604
    %v6096 = vunpack.c.l.b16 %v5605
    %v6097 = vunpack.c.h.b16 %v5605
    %v6098 = vunpack.c.l.b16 %v5606
    %v6099 = vunpack.c.l.b16 %v5607
    %v6100 = vunpack.c.h.b16 %v5607
    %v6101 = vunpack.c.l.b16 %v5608
    %v6102 = vunpack.c.h.b16 %v5608
    %v6103 = vunpack.c.l.b16 %v5609
    %v6104 = vunpack.c.l.b16 %v5610
    %v6105 = vunpack.c.h.b16 %v5610
    %v6106 = vunpack.c.l.b16 %v5611
    %v6107 = vunpack.c.h.b16 %v5611
    %v6108 = vunpack.c.l.b16 %v5612
    %v6109 = vunpack.c.l.b16 %v5613
    %v6110 = vunpack.c.h.b16 %v5613
    %v6111 = vunpack.c.l.b16 %v5614
    %v6112 = vunpack.c.h.b16 %v5614
    %v6113 = vunpack.c.l.b16 %v5615
    %v6114 = vunpack.c.l.b16 %v5616
    %v6115 = vunpack.c.h.b16 %v5616
    %v6116 = vunpack.c.l.b16 %v5617
    %v6117 = vunpack.c.h.b16 %v5617
    %v6118 = vunpack.c.l.b16 %v5618
    %v6119 = vunpack.c.l.b16 %v5619
    %v6120 = vunpack.c.h.b16 %v5619
    %v6121 = vunpack.c.l.b16 %v5620
    %v6122 = vunpack.c.h.b16 %v5620
    %v6123 = vunpack.c.l.b16 %v5621
    %v6124 = vunpack.c.l.b16 %v5622
    %v6125 = vunpack.c.h.b16 %v5622
    %v6126 = vunpack.c.l.b16 %v5623
    %v6127 = vunpack.c.h.b16 %v5623
    %v6128 = vunpack.c.l.b16 %v5624
    %v6129 = vunpack.c.l.b16 %v5625
    %v6130 = vunpack.c.h.b16 %v5625
    %v6131 = vunpack.c.l.b16 %v5626
    %v6132 = vunpack.c.h.b16 %v5626
    %v6133 = vunpack.c.l.b16 %v5627
    %v6134 = vunpack.c.l.b16 %v5628
    %v6135 = vunpack.c.h.b16 %v5628
    %v6136 = vunpack.c.l.b16 %v5629
    %v6137 = vunpack.c.h.b16 %v5629
    %v6138 = vunpack.c.l.b16 %v5630
    %v6139 = vunpack.c.l.b16 %v5631
    %v6140 = vunpack.c.h.b16 %v5631
    %v6141 = vunpack.c.l.b16 %v5632
    %v6142 = vunpack.c.h.b16 %v5632
    %v6143 = vunpack.c.l.b16 %v5633
    %v6144 = vunpack.c.l.b16 %v5634
    %v6145 = vunpack.c.h.b16 %v5634
    %v6146 = vunpack.c.l.b16 %v5635
    %v6147 = vunpack.c.h.b16 %v5635
    %v6148 = vunpack.c.l.b16 %v5636
    %v6149 = vunpack.c.l.b16 %v5637
    %v6150 = vunpack.c.h.b16 %v5637
    %v6151 = vunpack.c.l.b16 %v5638
    %v6152 = vunpack.c.h.b16 %v5638
    %v6153 = vunpack.c.l.b16 %v5639
    %v6154 = vunpack.c.l.b16 %v5640
    %v6155 = vunpack.c.h.b16 %v5640
    %v6156 = vunpack.c.l.b16 %v5641
    %v6157 = vunpack.c.h.b16 %v5641
    %v6158 = vunpack.c.l.b16 %v5642
    %v6159 = vunpack.c.l.b16 %v5643
    %v6160 = vunpack.c.h.b16 %v5643
    %v6161 = vunpack.c.l.b16 %v5644
    %v6162 = vunpack.c.h.b16 %v5644
    %v6163 = vunpack.c.l.b16 %v5645
    %v6164 = vunpack.c.l.b16 %v5646
    %v6165 = vunpack.c.h.b16 %v5646
    %v6166 = vunpack.c.l.b16 %v5647
    %v6167 = vunpack.c.h.b16 %v5647
    %v6168 = vunpack.c.l.b16 %v5648
    %v6169 = vunpack.c.l.b16 %v5649
    %v6170 = vunpack.c.h.b16 %v5649
    %v6171 = vunpack.c.l.b16 %v5650
    %v6172 = vunpack.c.h.b16 %v5650
    %v6173 = vunpack.c.l.b16 %v5651
    %v6174 = vunpack.c.l.b16 %v5652
    %v6175 = vunpack.c.h.b16 %v5652
    %v6176 = vunpack.c.l.b16 %v5653
    %v6177 = vunpack.c.h.b16 %v5653
    %v6178 = vunpack.c.l.b16 %v5654
    %v6179 = vunpack.c.l.b16 %v5655
    %v6180 = vunpack.c.h.b16 %v5655
    %v6181 = vunpack.c.l.b16 %v5656
    %v6182 = vunpack.c.h.b16 %v5656
    %v6183 = vunpack.c.l.b16 %v5657
    %v6184 = vunpack.c.l.b16 %v5658
    %v6185 = vunpack.c.h.b16 %v5658
    %v6186 = vunpack.c.l.b16 %v5659
    %v6187 = vunpack.c.h.b16 %v5659
    %v6188 = vunpack.c.l.b16 %v5660
    %v6189 = vunpack.c.l.b16 %v5661
    %v6190 = vunpack.c.h.b16 %v5661
    %v6191 = vunpack.c.l.b16 %v5662
    %v6192 = vunpack.c.h.b16 %v5662
    %v6193 = vunpack.c.l.b16 %v5663
    %v6194 = vunpack.c.l.b16 %v5664
    %v6195 = vunpack.c.h.b16 %v5664
    %v6196 = vunpack.c.l.b16 %v5665
    %v6197 = vunpack.c.h.b16 %v5665
    %v6198 = vunpack.c.l.b16 %v5666
    %v6199 = vunpack.c.l.b16 %v5667
    %v6200 = vunpack.c.h.b16 %v5667
    %v6201 = vunpack.c.l.b16 %v5668
    %v6202 = vunpack.c.h.b16 %v5668
    %v6203 = vunpack.c.l.b16 %v5669
    %v6204 = vunpack.c.l.b16 %v5670
    %v6205 = vunpack.c.h.b16 %v5670
    %v6206 = vunpack.c.l.b16 %v5671
    %v6207 = vunpack.c.h.b16 %v5671
    %v6208 = vunpack.c.l.b16 %v5672
    %v6209 = vunpack.c.l.b16 %v5673
    %v6210 = vunpack.c.h.b16 %v5673
    %v6211 = vunpack.c.l.b16 %v5674
    %v6212 = vunpack.c.h.b16 %v5674
    %v6213 = vunpack.c.l.b16 %v5675
    %v6214 = vunpack.c.l.b16 %v5676
    %v6215 = vunpack.c.h.b16 %v5676
    %v6216 = vunpack.c.l.b16 %v5677
    %v6217 = vunpack.c.h.b16 %v5677
    %v6218 = vunpack.c.l.b16 %v5678
    %v6219 = vunpack.c.l.b16 %v5679
    %v6220 = vunpack.c.h.b16 %v5679
    %v6221 = vunpack.c.l.b16 %v5680
    %v6222 = vunpack.c.h.b16 %v5680
    %v6223 = vunpack.c.l.b16 %v5681
    %v6224 = vunpack.c.l.b16 %v5682
    %v6225 = vunpack.c.h.b16 %v5682
    %v6226 = vunpack.c.l.b16 %v5683
    %v6227 = vunpack.c.h.b16 %v5683
    %v6228 = vunpack.c.l.b16 %v5684
    %v6229 = vunpack.c.l.b16 %v5685
    %v6230 = vunpack.c.h.b16 %v5685
    %v6231 = vunpack.c.l.b16 %v5686
    %v6232 = vunpack.c.h.b16 %v5686
    %v6233 = vunpack.c.l.b16 %v5687
    %v6234 = vunpack.c.l.b16 %v5688
    %v6235 = vunpack.c.h.b16 %v5688
    %v6236 = vunpack.c.l.b16 %v5689
    %v6237 = vunpack.c.h.b16 %v5689
    %v6238 = vunpack.c.l.b16 %v5690
    %v6239 = vunpack.c.l.b16 %v5691
    %v6240 = vunpack.c.h.b16 %v5691
    %v6241 = vunpack.c.l.b16 %v5692
    %v6242 = vunpack.c.h.b16 %v5692
    %v6243 = vunpack.c.l.b16 %v5693
    %v6244 = vunpack.c.l.b16 %v5694
    %v6245 = vunpack.c.h.b16 %v5694
    %v6246 = vunpack.c.l.b16 %v5695
    %v6247 = vunpack.c.h.b16 %v5695
    %v6248 = vunpack.c.l.b16 %v5696
    %v6249 = vunpack.c.l.b16 %v5697
    %v6250 = vunpack.c.h.b16 %v5697
    %v6251 = vunpack.c.l.b16 %v5698
    %v6252 = vunpack.c.h.b16 %v5698
    %v6253 = vunpack.c.l.b16 %v5699
    %v6254 = vunpack.c.l.b16 %v5700
    %v6255 = vunpack.c.h.b16 %v5700
    %v6256 = vunpack.c.l.b16 %v5701
    %v6257 = vunpack.c.h.b16 %v5701
    %v6258 = vunpack.c.l.b16 %v5702
    %v6259 = vunpack.c.l.b16 %v5703
    %v6260 = vunpack.c.h.b16 %v5703
    %v6261 = vunpack.c.l.b16 %v5704
    %v6262 = vunpack.c.h.b16 %v5704
    %v6263 = vunpack.c.l.b16 %v5705
    %v6264 = vunpack.c.l.b16 %v5706
    %v6265 = vunpack.c.h.b16 %v5706
    %v6266 = vunpack.c.l.b16 %v5707
    %v6267 = vunpack.c.h.b16 %v5707
    %v6268 = vunpack.c.l.b16 %v5708
    %v6269 = vunpack.c.l.b16 %v5709
    %v6270 = vunpack.c.h.b16 %v5709
    %v6271 = vunpack.c.l.b16 %v5710
    %v6272 = vunpack.c.h.b16 %v5710
    %v6273 = vunpack.c.l.b16 %v5711
    %v6274 = vunpack.c.l.b16 %v5712
    %v6275 = vunpack.c.h.b16 %v5712
    %v6276 = vunpack.c.l.b16 %v5713
    %v6277 = vunpack.c.h.b16 %v5713
    %v6278 = vunpack.c.l.b16 %v5714
    %v6279 = vunpack.c.l.b16 %v5715
    %v6280 = vunpack.c.h.b16 %v5715
    %v6281 = vunpack.c.l.b16 %v5716
    %v6282 = vunpack.c.h.b16 %v5716
    %v6283 = vunpack.c.l.b16 %v5717
    %v6284 = vunpack.c.l.b16 %v5718
    %v6285 = vunpack.c.h.b16 %v5718
    %v6286 = vunpack.c.l.b16 %v5719
    %v6287 = vunpack.c.h.b16 %v5719
    %v6288 = vunpack.c.l.b16 %v5720
    %v6289 = vunpack.c.l.b16 %v5721
    %v6290 = vunpack.c.h.b16 %v5721
    %v6291 = vunpack.c.l.b16 %v5722
    %v6292 = vunpack.c.h.b16 %v5722
    %v6293 = vunpack.c.l.b16 %v5723
    %v6294 = vunpack.c.l.b16 %v5724
    %v6295 = vunpack.c.h.b16 %v5724
    %v6296 = vunpack.c.l.b16 %v5725
    %v6297 = vunpack.c.h.b16 %v5725
    %v6298 = vunpack.c.l.b16 %v5726
    %v6299 = vunpack.c.l.b16 %v5727
    %v6300 = vunpack.c.h.b16 %v5727
    %v6301 = vunpack.c.l.b16 %v5728
    %v6302 = vunpack.c.h.b16 %v5728
    %v6303 = vunpack.c.l.b16 %v5729
    %v6304 = vunpack.c.l.b16 %v5730
    %v6305 = vunpack.c.h.b16 %v5730
    %v6306 = vunpack.c.l.b16 %v5731
    %v6307 = vunpack.c.h.b16 %v5731
    %v6308 = vunpack.c.l.b16 %v5732
    %v6309 = vunpack.c.l.b16 %v5733
    %v6310 = vunpack.c.h.b16 %v5733
    %v6311 = vunpack.c.l.b16 %v5734
    %v6312 = vunpack.c.h.b16 %v5734
    %v6313 = vunpack.c.l.b16 %v5735
    %v6314 = vunpack.c.l.b16 %v5736
    %v6315 = vunpack.c.h.b16 %v5736
    %v6316 = vunpack.c.l.b16 %v5737
    %v6317 = vunpack.c.h.b16 %v5737
    %v6318 = vunpack.c.l.b16 %v5738
    %v6319 = vunpack.c.l.b16 %v5739
    %v6320 = vunpack.c.h.b16 %v5739
    %v6321 = vunpack.c.l.b16 %v5740
    %v6322 = vunpack.c.h.b16 %v5740
    %v6323 = vunpack.c.l.b16 %v5741
    %v6324 = vunpack.c.l.b16 %v5742
    %v6325 = vunpack.c.h.b16 %v5742
    %v6326 = vunpack.c.l.b16 %v5743
    %v6327 = vunpack.c.h.b16 %v5743
    %v6328 = vunpack.c.l.b16 %v5744
    %v6329 = vunpack.c.l.b16 %v5745
    %v6330 = vunpack.c.h.b16 %v5745
    %v6331 = vunpack.c.l.b16 %v5746
    %v6332 = vunpack.c.h.b16 %v5746
    %v6333 = vunpack.c.l.b16 %v5747
    %v6334 = vunpack.c.l.b16 %v5748
    %v6335 = vunpack.c.h.b16 %v5748
    %v6336 = vunpack.c.l.b16 %v5749
    %v6337 = vunpack.c.h.b16 %v5749
    %v6338 = vunpack.c.l.b16 %v5750
    %v6339 = vunpack.c.l.b16 %v5751
    %v6340 = vunpack.c.h.b16 %v5751
    %v6341 = vunpack.c.l.b16 %v5752
    %v6342 = vunpack.c.h.b16 %v5752
    %v6343 = vunpack.c.l.b16 %v5753
    %v6344 = vunpack.c.l.b16 %v5754
    %v6345 = vunpack.c.h.b16 %v5754
    %v6346 = vunpack.c.l.b16 %v5755
    %v6347 = vunpack.c.h.b16 %v5755
    %v6348 = vunpack.c.l.b16 %v5756
    %v6349 = vunpack.c.l.b16 %v5757
    %v6350 = vunpack.c.h.b16 %v5757
    %v6351 = vunpack.c.l.b16 %v5758
    %v6352 = vunpack.c.h.b16 %v5758
    %v6353 = vunpack.c.l.b16 %v5759
    %v6354 = vunpack.c.l.b16 %v5760
    %v6355 = vunpack.c.h.b16 %v5760
    %v6356 = vunpack.c.l.b16 %v5761
    %v6357 = vunpack.c.h.b16 %v5761
    %v6358 = vunpack.c.l.b16 %v5762
    %v6359 = vunpack.c.l.b16 %v5763
    %v6360 = vunpack.c.h.b16 %v5763
    %v6361 = vunpack.c.l.b16 %v5764
    %v6362 = vunpack.c.h.b16 %v5764
    %v6363 = vunpack.c.l.b16 %v5765
    %v6364 = vunpack.c.l.b16 %v5766
    %v6365 = vunpack.c.h.b16 %v5766
    %v6366 = vunpack.c.l.b16 %v5767
    %v6367 = vunpack.c.h.b16 %v5767
    %v6368 = vunpack.c.l.b16 %v5768
    %v6369 = vpack.c.b16 %v5999, %v5994
    %v6370 = vpack.c.b16 %v6000, %v5995
    %v6371 = vpack.c.b16 %v6001, %v5996
    %v6372 = vpack.c.b16 %v6002, %v5997
    %v6373 = vpack.c.b16 %v6003, %v5998
    %v6374 = vpack.c.b16 %v6009, %v6004
    %v6375 = vpack.c.b16 %v6010, %v6005
    %v6376 = vpack.c.b16 %v6011, %v6006
    %v6377 = vpack.c.b16 %v6012, %v6007
    %v6378 = vpack.c.b16 %v6013, %v6008
    %v6379 = vpack.c.b16 %v6019, %v6014
    %v6380 = vpack.c.b16 %v6020, %v6015
    %v6381 = vpack.c.b16 %v6021, %v6016
    %v6382 = vpack.c.b16 %v6022, %v6017
    %v6383 = vpack.c.b16 %v6023, %v6018
    %v6384 = vpack.c.b16 %v6029, %v6024
    %v6385 = vpack.c.b16 %v6030, %v6025
    %v6386 = vpack.c.b16 %v6031, %v6026
    %v6387 = vpack.c.b16 %v6032, %v6027
    %v6388 = vpack.c.b16 %v6033, %v6028
    %v6389 = vpack.c.b16 %v6039, %v6034
    %v6390 = vpack.c.b16 %v6040, %v6035
    %v6391 = vpack.c.b16 %v6041, %v6036
    %v6392 = vpack.c.b16 %v6042, %v6037
    %v6393 = vpack.c.b16 %v6043, %v6038
    %v6394 = vpack.c.b16 %v6049, %v6044
    %v6395 = vpack.c.b16 %v6050, %v6045
    %v6396 = vpack.c.b16 %v6051, %v6046
    %v6397 = vpack.c.b16 %v6052, %v6047
    %v6398 = vpack.c.b16 %v6053, %v6048
    %v6399 = vpack.c.b16 %v6059, %v6054
    %v6400 = vpack.c.b16 %v6060, %v6055
    %v6401 = vpack.c.b16 %v6061, %v6056
    %v6402 = vpack.c.b16 %v6062, %v6057
    %v6403 = vpack.c.b16 %v6063, %v6058
    %v6404 = vpack.c.b16 %v6069, %v6064
    %v6405 = vpack.c.b16 %v6070, %v6065
    %v6406 = vpack.c.b16 %v6071, %v6066
    %v6407 = vpack.c.b16 %v6072, %v6067
    %v6408 = vpack.c.b16 %v6073, %v6068
    %v6409 = vpack.c.b16 %v6079, %v6074
    %v6410 = vpack.c.b16 %v6080, %v6075
    %v6411 = vpack.c.b16 %v6081, %v6076
    %v6412 = vpack.c.b16 %v6082, %v6077
    %v6413 = vpack.c.b16 %v6083, %v6078
    %v6414 = vpack.c.b16 %v6089, %v6084
    %v6415 = vpack.c.b16 %v6090, %v6085
    %v6416 = vpack.c.b16 %v6091, %v6086
    %v6417 = vpack.c.b16 %v6092, %v6087
    %v6418 = vpack.c.b16 %v6093, %v6088
    %v6419 = vpack.c.b16 %v6099, %v6094
    %v6420 = vpack.c.b16 %v6100, %v6095
    %v6421 = vpack.c.b16 %v6101, %v6096
    %v6422 = vpack.c.b16 %v6102, %v6097
    %v6423 = vpack.c.b16 %v6103, %v6098
    %v6424 = vpack.c.b16 %v6109, %v6104
    %v6425 = vpack.c.b16 %v6110, %v6105
    %v6426 = vpack.c.b16 %v6111, %v6106
    %v6427 = vpack.c.b16 %v6112, %v6107
    %v6428 = vpack.c.b16 %v6113, %v6108
    %v6429 = vpack.c.b16 %v6119, %v6114
    %v6430 = vpack.c.b16 %v6120, %v6115
    %v6431 = vpack.c.b16 %v6121, %v6116
    %v6432 = vpack.c.b16 %v6122, %v6117
    %v6433 = vpack.c.b16 %v6123, %v6118
    %v6434 = vpack.c.b16 %v6129, %v6124
    %v6435 = vpack.c.b16 %v6130, %v6125
    %v6436 = vpack.c.b16 %v6131, %v6126
    %v6437 = vpack.c.b16 %v6132, %v6127
    %v6438 = vpack.c.b16 %v6133, %v6128
    %v6439 = vpack.c.b16 %v6139, %v6134
    %v6440 = vpack.c.b16 %v6140, %v6135
    %v6441 = vpack.c.b16 %v6141, %v6136
    %v6442 = vpack.c.b16 %v6142, %v6137
    %v6443 = vpack.c.b16 %v6143, %v6138
    %v6444 = vpack.c.b16 %v6149, %v6144
    %v6445 = vpack.c.b16 %v6150, %v6145
    %v6446 = vpack.c.b16 %v6151, %v6146
    %v6447 = vpack.c.b16 %v6152, %v6147
    %v6448 = vpack.c.b16 %v6153, %v6148
    %v6449 = vpack.c.b16 %v6159, %v6154
    %v6450 = vpack.c.b16 %v6160, %v6155
    %v6451 = vpack.c.b16 %v6161, %v6156
    %v6452 = vpack.c.b16 %v6162, %v6157
    %v6453 = vpack.c.b16 %v6163, %v6158
    %v6454 = vpack.c.b16 %v6169, %v6164
    %v6455 = vpack.c.b16 %v6170, %v6165
    %v6456 = vpack.c.b16 %v6171, %v6166
    %v6457 = vpack.c.b16 %v6172, %v6167
    %v6458 = vpack.c.b16 %v6173, %v6168
    %v6459 = vpack.c.b16 %v6179, %v6174
    %v6460 = vpack.c.b16 %v6180, %v6175
    %v6461 = vpack.c.b16 %v6181, %v6176
    %v6462 = vpack.c.b16 %v6182, %v6177
    %v6463 = vpack.c.b16 %v6183, %v6178
    %v6464 = vpack.c.b16 %v6189, %v6184
    %v6465 = vpack.c.b16 %v6190, %v6185
    %v6466 = vpack.c.b16 %v6191, %v6186
    %v6467 = vpack.c.b16 %v6192, %v6187
    %v6468 = vpack.c.b16 %v6193, %v6188
    %v6469 = vpack.c.b16 %v6199, %v6194
    %v6470 = vpack.c.b16 %v6200, %v6195
    %v6471 = vpack.c.b16 %v6201, %v6196
    %v6472 = vpack.c.b16 %v6202, %v6197
    %v6473 = vpack.c.b16 %v6203, %v6198
    %v6474 = vpack.c.b16 %v6209, %v6204
    %v6475 = vpack.c.b16 %v6210, %v6205
    %v6476 = vpack.c.b16 %v6211, %v6206
    %v6477 = vpack.c.b16 %v6212, %v6207
    %v6478 = vpack.c.b16 %v6213, %v6208
    %v6479 = vpack.c.b16 %v6219, %v6214
    %v6480 = vpack.c.b16 %v6220, %v6215
    %v6481 = vpack.c.b16 %v6221, %v6216
    %v6482 = vpack.c.b16 %v6222, %v6217
    %v6483 = vpack.c.b16 %v6223, %v6218
    %v6484 = vpack.c.b16 %v6229, %v6224
    %v6485 = vpack.c.b16 %v6230, %v6225
    %v6486 = vpack.c.b16 %v6231, %v6226
    %v6487 = vpack.c.b16 %v6232, %v6227
    %v6488 = vpack.c.b16 %v6233, %v6228
    %v6489 = vpack.c.b16 %v6239, %v6234
    %v6490 = vpack.c.b16 %v6240, %v6235
    %v6491 = vpack.c.b16 %v6241, %v6236
    %v6492 = vpack.c.b16 %v6242, %v6237
    %v6493 = vpack.c.b16 %v6243, %v6238
    %v6494 = vpack.c.b16 %v6249, %v6244
    %v6495 = vpack.c.b16 %v6250, %v6245
    %v6496 = vpack.c.b16 %v6251, %v6246
    %v6497 = vpack.c.b16 %v6252, %v6247
    %v6498 = vpack.c.b16 %v6253, %v6248
    %v6499 = vpack.c.b16 %v6259, %v6254
    %v6500 = vpack.c.b16 %v6260, %v6255
    %v6501 = vpack.c.b16 %v6261, %v6256
    %v6502 = vpack.c.b16 %v6262, %v6257
    %v6503 = vpack.c.b16 %v6263, %v6258
    %v6504 = vpack.c.b16 %v6269, %v6264
    %v6505 = vpack.c.b16 %v6270, %v6265
    %v6506 = vpack.c.b16 %v6271, %v6266
    %v6507 = vpack.c.b16 %v6272, %v6267
    %v6508 = vpack.c.b16 %v6273, %v6268
    %v6509 = vpack.c.b16 %v6279, %v6274
    %v6510 = vpack.c.b16 %v6280, %v6275
    %v6511 = vpack.c.b16 %v6281, %v6276
    %v6512 = vpack.c.b16 %v6282, %v6277
    %v6513 = vpack.c.b16 %v6283, %v6278
    %v6514 = vpack.c.b16 %v6289, %v6284
    %v6515 = vpack.c.b16 %v6290, %v6285
    %v6516 = vpack.c.b16 %v6291, %v6286
    %v6517 = vpack.c.b16 %v6292, %v6287
    %v6518 = vpack.c.b16 %v6293, %v6288
    %v6519 = vpack.c.b16 %v6299, %v6294
    %v6520 = vpack.c.b16 %v6300, %v6295
    %v6521 = vpack.c.b16 %v6301, %v6296
    %v6522 = vpack.c.b16 %v6302, %v6297
    %v6523 = vpack.c.b16 %v6303, %v6298
    %v6524 = vpack.c.b16 %v6309, %v6304
    %v6525 = vpack.c.b16 %v6310, %v6305
    %v6526 = vpack.c.b16 %v6311, %v6306
    %v6527 = vpack.c.b16 %v6312, %v6307
    %v6528 = vpack.c.b16 %v6313, %v6308
    %v6529 = vpack.c.b16 %v6319, %v6314
    %v6530 = vpack.c.b16 %v6320, %v6315
    %v6531 = vpack.c.b16 %v6321, %v6316
    %v6532 = vpack.c.b16 %v6322, %v6317
    %v6533 = vpack.c.b16 %v6323, %v6318
    %v6534 = vpack.c.b16 %v6329, %v6324
    %v6535 = vpack.c.b16 %v6330, %v6325
    %v6536 = vpack.c.b16 %v6331, %v6326
    %v6537 = vpack.c.b16 %v6332, %v6327
    %v6538 = vpack.c.b16 %v6333, %v6328
    %v6539 = vpack.c.b16 %v6339, %v6334
    %v6540 = vpack.c.b16 %v6340, %v6335
    %v6541 = vpack.c.b16 %v6341, %v6336
    %v6542 = vpack.c.b16 %v6342, %v6337
    %v6543 = vpack.c.b16 %v6343, %v6338
    %v6544 = vpack.c.b16 %v6349, %v6344
    %v6545 = vpack.c.b16 %v6350, %v6345
    %v6546 = vpack.c.b16 %v6351, %v6346
    %v6547 = vpack.c.b16 %v6352, %v6347
    %v6548 = vpack.c.b16 %v6353, %v6348
    %v6549 = vpack.c.b16 %v6359, %v6354
    %v6550 = vpack.c.b16 %v6360, %v6355
    %v6551 = vpack.c.b16 %v6361, %v6356
    %v6552 = vpack.c.b16 %v6362, %v6357
    %v6553 = vpack.c.b16 %v6363, %v6358
    %v6554 = vpack.c.b16 %v6364, %v6364
    %v6555 = vpack.c.b16 %v6365, %v6365
    %v6556 = vpack.c.b16 %v6366, %v6366
    %v6557 = vpack.c.b16 %v6367, %v6367
    %v6558 = vpack.c.b16 %v6368, %v6368
    %vm6744 = vcmask 719872
    %v6746 = vsel %vm6744, %v5543, 0
    %vm6748 = vcmask 1043456
    %v6750 = vsel %vm6748, %v6554, 0
    %v6753 = vsel %vm6748, %v6555, 0
    %v6756 = vsel %vm6748, %v6556, 0
    %v6759 = vsel %vm6748, %v6557, 0
    %v6762 = vsel %vm6748, %v6558, 0
    %6764 = vmatprep.subr.bf16.mxu0 %v6370
    %6765 = vmatpush1.bf16.msra.mxu0 %v6369
    %6766 = vmatprep.subr.bf16.mxu0 %v6375
    %6767 = vmatpush1.bf16.msra.mxu0 %v6374
    %6768 = vmatprep.subr.bf16.mxu0 %v6380
    %6769 = vmatpush1.bf16.msra.mxu0 %v6379
    %6770 = vmatprep.subr.bf16.mxu0 %v6385
    %6771 = vmatpush1.bf16.msra.mxu0 %v6384
    %6772 = vmatprep.subr.bf16.mxu0 %v6390
    %6773 = vmatpush1.bf16.msra.mxu0 %v6389
    %6774 = vmatprep.subr.bf16.mxu0 %v6395
    %6775 = vmatpush1.bf16.msra.mxu0 %v6394
    %6776 = vmatprep.subr.bf16.mxu0 %v6400
    %6777 = vmatpush1.bf16.msra.mxu0 %v6399
    %6778 = vmatprep.subr.bf16.mxu0 %v6405
    %6779 = vmatpush1.bf16.msra.mxu0 %v6404
    %6780 = vmatprep.subr.bf16.mxu0 %v6410
    %6781 = vmatpush1.bf16.msra.mxu0 %v6409
    %6782 = vmatprep.subr.bf16.mxu0 %v6415
    %6783 = vmatpush1.bf16.msra.mxu0 %v6414
    %6784 = vmatprep.subr.bf16.mxu0 %v6420
    %6785 = vmatpush1.bf16.msra.mxu0 %v6419
    %6786 = vmatprep.subr.bf16.mxu0 %v6425
    %6787 = vmatpush1.bf16.msra.mxu0 %v6424
    %6788 = vmatprep.subr.bf16.mxu0 %v6430
    %6789 = vmatpush1.bf16.msra.mxu0 %v6429
    %6790 = vmatprep.subr.bf16.mxu0 %v6435
    %6791 = vmatpush1.bf16.msra.mxu0 %v6434
    %6792 = vmatprep.subr.bf16.mxu0 %v6440
    %6793 = vmatpush1.bf16.msra.mxu0 %v6439
    %6794 = vmatprep.subr.bf16.mxu0 %v6445
    %6795 = vmatpush1.bf16.msra.mxu0 %v6444
    %6796 = vmatprep.mubr.bf16.mxu0 %v5540
    %6797 = vmatmul.mubr.bf16.gmra.mrb[0].mxu0 %v5539
    %v6798 = vpop.f32.mrb[0].mxu0
    %v6799 = vadd.f32 0.0, %v6798
    %v6800 = vpop.f32.mrb[0].mxu0
    %v6801 = vadd.f32 0.0, %v6800
    %v6802 = vpop.f32.mrb[0].mxu0
    %v6803 = vpop.f32.mrb[0].mxu0
    %6804 = vdwg.mxu0
    %6805 = vmatprep.subr.bf16.mxu0 %v6450
    %6806 = vmatpush1.bf16.msra.mxu0 %v6449
    %6807 = vmatprep.subr.bf16.mxu0 %v6455
    %6808 = vmatpush1.bf16.msra.mxu0 %v6454
    %6809 = vmatprep.subr.bf16.mxu0 %v6460
    %6810 = vmatpush1.bf16.msra.mxu0 %v6459
    %6811 = vmatprep.subr.bf16.mxu0 %v6465
    %6812 = vmatpush1.bf16.msra.mxu0 %v6464
    %6813 = vmatprep.subr.bf16.mxu0 %v6470
    %6814 = vmatpush1.bf16.msra.mxu0 %v6469
    %6815 = vmatprep.subr.bf16.mxu0 %v6475
    %6816 = vmatpush1.bf16.msra.mxu0 %v6474
    %6817 = vmatprep.subr.bf16.mxu0 %v6480
    %6818 = vmatpush1.bf16.msra.mxu0 %v6479
    %6819 = vmatprep.subr.bf16.mxu0 %v6485
    %6820 = vmatpush1.bf16.msra.mxu0 %v6484
    %6821 = vmatprep.subr.bf16.mxu0 %v6490
    %6822 = vmatpush1.bf16.msra.mxu0 %v6489
    %6823 = vmatprep.subr.bf16.mxu0 %v6495
    %6824 = vmatpush1.bf16.msra.mxu0 %v6494
    %6825 = vmatprep.subr.bf16.mxu0 %v6500
    %6826 = vmatpush1.bf16.msra.mxu0 %v6499
    %6827 = vmatprep.subr.bf16.mxu0 %v6505
    %6828 = vmatpush1.bf16.msra.mxu0 %v6504
    %6829 = vmatprep.subr.bf16.mxu0 %v6510
    %6830 = vmatpush1.bf16.msra.mxu0 %v6509
    %6831 = vmatprep.subr.bf16.mxu0 %v6515
    %6832 = vmatpush1.bf16.msra.mxu0 %v6514
    %6833 = vmatprep.subr.bf16.mxu0 %v6520
    %6834 = vmatpush1.bf16.msra.mxu0 %v6519
    %6835 = vmatprep.subr.bf16.mxu0 %v6525
    %6836 = vmatpush1.bf16.msra.mxu0 %v6524
    %6837 = vmatprep.mubr.bf16.mxu0 %v5542
    %6838 = vmatmul.mubr.bf16.gmra.mrb[0].mxu0 %v5541
    %v6839 = vpop.f32.mrb[0].mxu0
    %v6840 = vadd.f32 %v6799, %v6839
    %v6841 = vpop.f32.mrb[0].mxu0
    %v6842 = vadd.f32 %v6801, %v6841
    %v6843 = vpop.f32.mrb[0].mxu0
    %v6844 = vpop.f32.mrb[0].mxu0
    %6845 = vdwg.mxu0
    %6846 = vmatprep.subr.bf16.mxu0 %v6530
    %6847 = vmatpush1.bf16.msra.mxu0 %v6529
    %6848 = vmatprep.subr.bf16.mxu0 %v6535
    %6849 = vmatpush1.bf16.msra.mxu0 %v6534
    %6850 = vmatprep.subr.bf16.mxu0 %v6540
    %6851 = vmatpush1.bf16.msra.mxu0 %v6539
    %6852 = vmatprep.subr.bf16.mxu0 %v6545
    %6853 = vmatpush1.bf16.msra.mxu0 %v6544
    %6854 = vmatprep.subr.bf16.mxu0 %v6550
    %6855 = vmatpush1.bf16.msra.mxu0 %v6549
    %6856 = vmatprep.subr.bf16.mxu0 %v6753
    %6857 = vmatpush1.bf16.msra.mxu0 %v6750
    %6858 = vmatprep.subr.bf16.mxu0 0
    %6859 = vmatpush1.bf16.msra.mxu0 0
    %6860 = vmatprep.subr.bf16.mxu0 0
    %6861 = vmatpush1.bf16.msra.mxu0 0
    %6862 = vmatprep.subr.bf16.mxu0 0
    %6863 = vmatpush1.bf16.msra.mxu0 0
    %6864 = vmatprep.subr.bf16.mxu0 0
    %6865 = vmatpush1.bf16.msra.mxu0 0
    %6866 = vmatprep.subr.bf16.mxu0 0
    %6867 = vmatpush1.bf16.msra.mxu0 0
    %6868 = vmatprep.subr.bf16.mxu0 0
    %6869 = vmatpush1.bf16.msra.mxu0 0
    %6870 = vmatprep.subr.bf16.mxu0 0
    %6871 = vmatpush1.bf16.msra.mxu0 0
    %6872 = vmatprep.subr.bf16.mxu0 0
    %6873 = vmatpush1.bf16.msra.mxu0 0
    %6874 = vmatprep.subr.bf16.mxu0 0
    %6875 = vmatpush1.bf16.msra.mxu0 0
    %6876 = vmatprep.subr.bf16.mxu0 0
    %6877 = vmatpush1.bf16.msra.mxu0 0
    %6878 = vmatprep.mubr.bf16.mxu0 0
    %6879 = vmatmul.mubr.bf16.gmra.mrb[0].mxu0 %v6746
    %v6880 = vpop.f32.mrb[0].mxu0
    %v6881 = vadd.f32 %v6840, %v6880
    %v6882 = vpop.f32.mrb[0].mxu0
    %v6883 = vadd.f32 %v6842, %v6882
    %v6884 = vpop.f32.mrb[0].mxu0
    %v6885 = vpop.f32.mrb[0].mxu0
    %6886 = vdwg.mxu0
    %6887 = vmatprep.subr.bf16.mxu0 %v6372
    %6888 = vmatpush1.bf16.msra.mxu0 %v6371
    %6889 = vmatprep.subr.bf16.mxu0 %v6377
    %6890 = vmatpush1.bf16.msra.mxu0 %v6376
    %6891 = vmatprep.subr.bf16.mxu0 %v6382
    %6892 = vmatpush1.bf16.msra.mxu0 %v6381
    %6893 = vmatprep.subr.bf16.mxu0 %v6387
    %6894 = vmatpush1.bf16.msra.mxu0 %v6386
    %6895 = vmatprep.subr.bf16.mxu0 %v6392
    %6896 = vmatpush1.bf16.msra.mxu0 %v6391
    %6897 = vmatprep.subr.bf16.mxu0 %v6397
    %6898 = vmatpush1.bf16.msra.mxu0 %v6396
    %6899 = vmatprep.subr.bf16.mxu0 %v6402
    %6900 = vmatpush1.bf16.msra.mxu0 %v6401
    %6901 = vmatprep.subr.bf16.mxu0 %v6407
    %6902 = vmatpush1.bf16.msra.mxu0 %v6406
    %6903 = vmatprep.subr.bf16.mxu0 %v6412
    %6904 = vmatpush1.bf16.msra.mxu0 %v6411
    %6905 = vmatprep.subr.bf16.mxu0 %v6417
    %6906 = vmatpush1.bf16.msra.mxu0 %v6416
    %6907 = vmatprep.subr.bf16.mxu0 %v6422
    %6908 = vmatpush1.bf16.msra.mxu0 %v6421
    %6909 = vmatprep.subr.bf16.mxu0 %v6427
    %6910 = vmatpush1.bf16.msra.mxu0 %v6426
    %6911 = vmatprep.subr.bf16.mxu0 %v6432
    %6912 = vmatpush1.bf16.msra.mxu0 %v6431
    %6913 = vmatprep.subr.bf16.mxu0 %v6437
    %6914 = vmatpush1.bf16.msra.mxu0 %v6436
    %6915 = vmatprep.subr.bf16.mxu0 %v6442
    %6916 = vmatpush1.bf16.msra.mxu0 %v6441
    %6917 = vmatprep.subr.bf16.mxu0 %v6447
    %6918 = vmatpush1.bf16.msra.mxu0 %v6446
    %6919 = vmatprep.mubr.bf16.mxu0 %v5540
    %6920 = vmatmul.mubr.bf16.gmra.mrb[0].mxu0 %v5539
    %v6921 = vpop.f32.mrb[0].mxu0
    %v6922 = vadd.f32 0.0, %v6921
    %v6923 = vpop.f32.mrb[0].mxu0
    %v6924 = vadd.f32 0.0, %v6923
    %v6925 = vpop.f32.mrb[0].mxu0
    %v6926 = vpop.f32.mrb[0].mxu0
    %6927 = vdwg.mxu0
    %6928 = vmatprep.subr.bf16.mxu0 %v6452
    %6929 = vmatpush1.bf16.msra.mxu0 %v6451
    %6930 = vmatprep.subr.bf16.mxu0 %v6457
    %6931 = vmatpush1.bf16.msra.mxu0 %v6456
    %6932 = vmatprep.subr.bf16.mxu0 %v6462
    %6933 = vmatpush1.bf16.msra.mxu0 %v6461
    %6934 = vmatprep.subr.bf16.mxu0 %v6467
    %6935 = vmatpush1.bf16.msra.mxu0 %v6466
    %6936 = vmatprep.subr.bf16.mxu0 %v6472
    %6937 = vmatpush1.bf16.msra.mxu0 %v6471
    %6938 = vmatprep.subr.bf16.mxu0 %v6477
    %6939 = vmatpush1.bf16.msra.mxu0 %v6476
    %6940 = vmatprep.subr.bf16.mxu0 %v6482
    %6941 = vmatpush1.bf16.msra.mxu0 %v6481
    %6942 = vmatprep.subr.bf16.mxu0 %v6487
    %6943 = vmatpush1.bf16.msra.mxu0 %v6486
    %6944 = vmatprep.subr.bf16.mxu0 %v6492
    %6945 = vmatpush1.bf16.msra.mxu0 %v6491
    %6946 = vmatprep.subr.bf16.mxu0 %v6497
    %6947 = vmatpush1.bf16.msra.mxu0 %v6496
    %6948 = vmatprep.subr.bf16.mxu0 %v6502
    %6949 = vmatpush1.bf16.msra.mxu0 %v6501
    %6950 = vmatprep.subr.bf16.mxu0 %v6507
    %6951 = vmatpush1.bf16.msra.mxu0 %v6506
    %6952 = vmatprep.subr.bf16.mxu0 %v6512
    %6953 = vmatpush1.bf16.msra.mxu0 %v6511
    %6954 = vmatprep.subr.bf16.mxu0 %v6517
    %6955 = vmatpush1.bf16.msra.mxu0 %v6516
    %6956 = vmatprep.subr.bf16.mxu0 %v6522
    %6957 = vmatpush1.bf16.msra.mxu0 %v6521
    %6958 = vmatprep.subr.bf16.mxu0 %v6527
    %6959 = vmatpush1.bf16.msra.mxu0 %v6526
    %6960 = vmatprep.mubr.bf16.mxu0 %v5542
    %6961 = vmatmul.mubr.bf16.gmra.mrb[0].mxu0 %v5541
    %v6962 = vpop.f32.mrb[0].mxu0
    %v6963 = vadd.f32 %v6922, %v6962
    %v6964 = vpop.f32.mrb[0].mxu0
    %v6965 = vadd.f32 %v6924, %v6964
    %v6966 = vpop.f32.mrb[0].mxu0
    %v6967 = vpop.f32.mrb[0].mxu0
    %6968 = vdwg.mxu0
    %6969 = vmatprep.subr.bf16.mxu0 %v6532
    %6970 = vmatpush1.bf16.msra.mxu0 %v6531
    %6971 = vmatprep.subr.bf16.mxu0 %v6537
    %6972 = vmatpush1.bf16.msra.mxu0 %v6536
    %6973 = vmatprep.subr.bf16.mxu0 %v6542
    %6974 = vmatpush1.bf16.msra.mxu0 %v6541
    %6975 = vmatprep.subr.bf16.mxu0 %v6547
    %6976 = vmatpush1.bf16.msra.mxu0 %v6546
    %6977 = vmatprep.subr.bf16.mxu0 %v6552
    %6978 = vmatpush1.bf16.msra.mxu0 %v6551
    %6979 = vmatprep.subr.bf16.mxu0 %v6759
    %6980 = vmatpush1.bf16.msra.mxu0 %v6756
    %6981 = vmatprep.subr.bf16.mxu0 0
    %6982 = vmatpush1.bf16.msra.mxu0 0
    %6983 = vmatprep.subr.bf16.mxu0 0
    %6984 = vmatpush1.bf16.msra.mxu0 0
    %6985 = vmatprep.subr.bf16.mxu0 0
    %6986 = vmatpush1.bf16.msra.mxu0 0
    %6987 = vmatprep.subr.bf16.mxu0 0
    %6988 = vmatpush1.bf16.msra.mxu0 0
    %6989 = vmatprep.subr.bf16.mxu0 0
    %6990 = vmatpush1.bf16.msra.mxu0 0
    %6991 = vmatprep.subr.bf16.mxu0 0
    %6992 = vmatpush1.bf16.msra.mxu0 0
    %6993 = vmatprep.subr.bf16.mxu0 0
    %6994 = vmatpush1.bf16.msra.mxu0 0
    %6995 = vmatprep.subr.bf16.mxu0 0
    %6996 = vmatpush1.bf16.msra.mxu0 0
    %6997 = vmatprep.subr.bf16.mxu0 0
    %6998 = vmatpush1.bf16.msra.mxu0 0
    %6999 = vmatprep.subr.bf16.mxu0 0
    %7000 = vmatpush1.bf16.msra.mxu0 0
    %7001 = vmatprep.mubr.bf16.mxu0 0
    %7002 = vmatmul.mubr.bf16.gmra.mrb[0].mxu0 %v6746
    %v7003 = vpop.f32.mrb[0].mxu0
    %v7004 = vadd.f32 %v6963, %v7003
    %v7005 = vpop.f32.mrb[0].mxu0
    %v7006 = vadd.f32 %v6965, %v7005
    %v7007 = vpop.f32.mrb[0].mxu0
    %v7008 = vpop.f32.mrb[0].mxu0
    %7009 = vdwg.mxu0
    %7010 = vmatprep.subr.bf16.mxu0 0
    %7011 = vmatpush1.bf16.msra.mxu0 %v6373
    %7012 = vmatprep.subr.bf16.mxu0 0
    %7013 = vmatpush1.bf16.msra.mxu0 %v6378
    %7014 = vmatprep.subr.bf16.mxu0 0
    %7015 = vmatpush1.bf16.msra.mxu0 %v6383
    %7016 = vmatprep.subr.bf16.mxu0 0
    %7017 = vmatpush1.bf16.msra.mxu0 %v6388
    %7018 = vmatprep.subr.bf16.mxu0 0
    %7019 = vmatpush1.bf16.msra.mxu0 %v6393
    %7020 = vmatprep.subr.bf16.mxu0 0
    %7021 = vmatpush1.bf16.msra.mxu0 %v6398
    %7022 = vmatprep.subr.bf16.mxu0 0
    %7023 = vmatpush1.bf16.msra.mxu0 %v6403
    %7024 = vmatprep.subr.bf16.mxu0 0
    %7025 = vmatpush1.bf16.msra.mxu0 %v6408
    %7026 = vmatprep.subr.bf16.mxu0 0
    %7027 = vmatpush1.bf16.msra.mxu0 %v6413
    %7028 = vmatprep.subr.bf16.mxu0 0
    %7029 = vmatpush1.bf16.msra.mxu0 %v6418
    %7030 = vmatprep.subr.bf16.mxu0 0
    %7031 = vmatpush1.bf16.msra.mxu0 %v6423
    %7032 = vmatprep.subr.bf16.mxu0 0
    %7033 = vmatpush1.bf16.msra.mxu0 %v6428
    %7034 = vmatprep.subr.bf16.mxu0 0
    %7035 = vmatpush1.bf16.msra.mxu0 %v6433
    %7036 = vmatprep.subr.bf16.mxu0 0
    %7037 = vmatpush1.bf16.msra.mxu0 %v6438
    %7038 = vmatprep.subr.bf16.mxu0 0
    %7039 = vmatpush1.bf16.msra.mxu0 %v6443
    %7040 = vmatprep.subr.bf16.mxu0 0
    %7041 = vmatpush1.bf16.msra.mxu0 %v6448
    %7042 = vmatprep.mubr.bf16.mxu0 %v5540
    %7043 = vmatmul.mubr.bf16.gmra.mrb[0].mxu0 %v5539
    %v7044 = vpop.f32.mrb[0].mxu0
    %v7045 = vadd.f32 0.0, %v7044
    %v7046 = vpop.f32.mrb[0].mxu0
    %v7047 = vpop.f32.mrb[0].mxu0
    %v7048 = vpop.f32.mrb[0].mxu0
    %7049 = vdwg.mxu0
    %7050 = vmatprep.subr.bf16.mxu0 0
    %7051 = vmatpush1.bf16.msra.mxu0 %v6453
    %7052 = vmatprep.subr.bf16.mxu0 0
    %7053 = vmatpush1.bf16.msra.mxu0 %v6458
    %7054 = vmatprep.subr.bf16.mxu0 0
    %7055 = vmatpush1.bf16.msra.mxu0 %v6463
    %7056 = vmatprep.subr.bf16.mxu0 0
    %7057 = vmatpush1.bf16.msra.mxu0 %v6468
    %7058 = vmatprep.subr.bf16.mxu0 0
    %7059 = vmatpush1.bf16.msra.mxu0 %v6473
    %7060 = vmatprep.subr.bf16.mxu0 0
    %7061 = vmatpush1.bf16.msra.mxu0 %v6478
    %7062 = vmatprep.subr.bf16.mxu0 0
    %7063 = vmatpush1.bf16.msra.mxu0 %v6483
    %7064 = vmatprep.subr.bf16.mxu0 0
    %7065 = vmatpush1.bf16.msra.mxu0 %v6488
    %7066 = vmatprep.subr.bf16.mxu0 0
    %7067 = vmatpush1.bf16.msra.mxu0 %v6493
    %7068 = vmatprep.subr.bf16.mxu0 0
    %7069 = vmatpush1.bf16.msra.mxu0 %v6498
    %7070 = vmatprep.subr.bf16.mxu0 0
    %7071 = vmatpush1.bf16.msra.mxu0 %v6503
    %7072 = vmatprep.subr.bf16.mxu0 0
    %7073 = vmatpush1.bf16.msra.mxu0 %v6508
    %7074 = vmatprep.subr.bf16.mxu0 0
    %7075 = vmatpush1.bf16.msra.mxu0 %v6513
    %7076 = vmatprep.subr.bf16.mxu0 0
    %7077 = vmatpush1.bf16.msra.mxu0 %v6518
    %7078 = vmatprep.subr.bf16.mxu0 0
    %7079 = vmatpush1.bf16.msra.mxu0 %v6523
    %7080 = vmatprep.subr.bf16.mxu0 0
    %7081 = vmatpush1.bf16.msra.mxu0 %v6528
    %7082 = vmatprep.mubr.bf16.mxu0 %v5542
    %7083 = vmatmul.mubr.bf16.gmra.mrb[0].mxu0 %v5541
    %v7084 = vpop.f32.mrb[0].mxu0
    %v7085 = vadd.f32 %v7045, %v7084
    %v7086 = vpop.f32.mrb[0].mxu0
    %v7087 = vpop.f32.mrb[0].mxu0
    %v7088 = vpop.f32.mrb[0].mxu0
    %7089 = vdwg.mxu0
    %7090 = vmatprep.subr.bf16.mxu0 0
    %7091 = vmatpush1.bf16.msra.mxu0 %v6533
    %7092 = vmatprep.subr.bf16.mxu0 0
    %7093 = vmatpush1.bf16.msra.mxu0 %v6538
    %7094 = vmatprep.subr.bf16.mxu0 0
    %7095 = vmatpush1.bf16.msra.mxu0 %v6543
    %7096 = vmatprep.subr.bf16.mxu0 0
    %7097 = vmatpush1.bf16.msra.mxu0 %v6548
    %7098 = vmatprep.subr.bf16.mxu0 0
    %7099 = vmatpush1.bf16.msra.mxu0 %v6553
    %7100 = vmatprep.subr.bf16.mxu0 0
    %7101 = vmatpush1.bf16.msra.mxu0 %v6762
    %7102 = vmatprep.subr.bf16.mxu0 0
    %7103 = vmatpush1.bf16.msra.mxu0 0
    %7104 = vmatprep.subr.bf16.mxu0 0
    %7105 = vmatpush1.bf16.msra.mxu0 0
    %7106 = vmatprep.subr.bf16.mxu0 0
    %7107 = vmatpush1.bf16.msra.mxu0 0
    %7108 = vmatprep.subr.bf16.mxu0 0
    %7109 = vmatpush1.bf16.msra.mxu0 0
    %7110 = vmatprep.subr.bf16.mxu0 0
    %7111 = vmatpush1.bf16.msra.mxu0 0
    %7112 = vmatprep.subr.bf16.mxu0 0
    %7113 = vmatpush1.bf16.msra.mxu0 0
    %7114 = vmatprep.subr.bf16.mxu0 0
    %7115 = vmatpush1.bf16.msra.mxu0 0
    %7116 = vmatprep.subr.bf16.mxu0 0
    %7117 = vmatpush1.bf16.msra.mxu0 0
    %7118 = vmatprep.subr.bf16.mxu0 0
    %7119 = vmatpush1.bf16.msra.mxu0 0
    %7120 = vmatprep.subr.bf16.mxu0 0
    %7121 = vmatpush1.bf16.msra.mxu0 0
    %7122 = vmatprep.mubr.bf16.mxu0 0
    %7123 = vmatmul.mubr.bf16.gmra.mrb[0].mxu0 %v6746
    %v7124 = vpop.f32.mrb[0].mxu0
    %v7125 = vadd.f32 %v7085, %v7124
    %v7126 = vpop.f32.mrb[0].mxu0
    %v7127 = vpop.f32.mrb[0].mxu0
    %v7128 = vpop.f32.mrb[0].mxu0
    %7129 = vdwg.mxu0
    %s7130 = sld [smem:[#allocation2]]
    %v7131 = vstv %s7130
    %v7132 = vmul.f32 %v7131, %v6881
    %v7133 = vmul.f32 %v7131, %v6883
    %v7134 = vmul.f32 %v7131, %v7004
    %v7135 = vmul.f32 %v7131, %v7006
    %v7136 = vmul.f32 %v7131, %v7125
    %s7137 = ssub.f32 1.0, %s7130
    %v7138 = vstv %s7137
    %v7139 = vmul.f32 %v7138, %v6881
    %v7140 = vmul.f32 %v7138, %v6883
    %v7141 = vmul.f32 %v7138, %v7004
    %v7142 = vmul.f32 %v7138, %v7006
    %v7143 = vmul.f32 %v7138, %v7125
    %v7149 = vrot.slane %v7139, 2
    %v7150 = vrot.slane %v7140, 2
    %v7151 = vrot.slane %v7141, 2
    %v7152 = vrot.slane %v7142, 2
    %v7153 = vrot.slane %v7143, 2
    %v7159 = vadd.f32 %v7132, %v7149
    %v7160 = vadd.f32 %v7133, %v7150
    %v7161 = vadd.f32 %v7134, %v7151
    %v7162 = vadd.f32 %v7135, %v7152
    %v7163 = vadd.f32 %v7136, %v7153
    %v7164 = vld [vmem:[#allocation12] sm:$0x1f]
    %v7166 = vlaneseq
    %v7167 = vshrl.u32 %v7166, 7
    %v7168 = vsub.s32 0, %v7167
    %v7169 = vrot.slane %v7164, %v7168
    %v7170 = vlaneseq
    %v7171 = vshrl.u32 %v7170, 7
    %v7172 = vsub.s32 1, %v7171
    %v7173 = vrot.slane %v7164, %v7172
    %v7174 = vlaneseq
    %v7175 = vshrl.u32 %v7174, 7
    %v7176 = vsub.s32 2, %v7175
    %v7177 = vrot.slane %v7164, %v7176
    %v7178 = vlaneseq
    %v7179 = vshrl.u32 %v7178, 7
    %v7180 = vsub.s32 3, %v7179
    %v7181 = vrot.slane %v7164, %v7180
    %v7182 = vlaneseq
    %v7183 = vshrl.u32 %v7182, 7
    %v7184 = vsub.s32 4, %v7183
    %v7185 = vrot.slane %v7164, %v7184
    %v7191 = vadd.f32 %v7159, %v7169
    %v7192 = vadd.f32 %v7160, %v7173
    %v7193 = vadd.f32 %v7161, %v7177
    %v7194 = vadd.f32 %v7162, %v7181
    %v7195 = vadd.f32 %v7163, %v7185
    %v7196 = vmax.f32 %v7191, 0.0
    %v7197 = vmax.f32 %v7192, 0.0
    %v7198 = vmax.f32 %v7193, 0.0
    %v7199 = vmax.f32 %v7194, 0.0
    %v7200 = vmax.f32 %v7195, 0.0
    %v7201 = vpack.c.bf16 %v7196, %v7196
    %v7202 = vpack.c.bf16 %v7197, %v7197
    %v7203 = vpack.c.bf16 %v7198, %v7198
    %v7204 = vpack.c.bf16 %v7199, %v7199
    %v7205 = vpack.c.bf16 %v7200, %v7200
    %v7206 = vld [vmem:[#allocation14] sm:$0xf]
    %v7207 = vld [vmem:[#allocation14 + $0x4] sm:$0xf]
    %v7208 = vld [vmem:[#allocation14 + $0x8] sm:$0xf]
    %v7209 = vld [vmem:[#allocation14 + $0xc] sm:$0xf]
    %v7210 = vld [vmem:[#allocation14 + $0x10] sm:$0xf]
    %v7211 = vld [vmem:[#allocation14 + $0x14] sm:$0xf]
    %v7212 = vld [vmem:[#allocation14 + $0x18] sm:$0xf]
    %v7213 = vld [vmem:[#allocation14 + $0x1c] sm:$0xf]
    %v7214 = vld [vmem:[#allocation14 + $0x20] sm:$0xf]
    %v7215 = vld [vmem:[#allocation14 + $0x24] sm:$0xf]
    %v7216 = vld [vmem:[#allocation14 + $0x28] sm:$0xf]
    %v7217 = vld [vmem:[#allocation14 + $0x2c] sm:$0xf]
    %v7218 = vld [vmem:[#allocation14 + $0x30] sm:$0xf]
    %v7219 = vld [vmem:[#allocation14 + $0x34] sm:$0xf]
    %v7220 = vld [vmem:[#allocation14 + $0x38] sm:$0xf]
    %v7221 = vld [vmem:[#allocation14 + $0x3c] sm:$0xf]
    %v7222 = vld [vmem:[#allocation14 + $0x40] sm:$0xf]
    %v7223 = vld [vmem:[#allocation14 + $0x44] sm:$0xf]
    %v7224 = vld [vmem:[#allocation14 + $0x48] sm:$0xf]
    %v7225 = vld [vmem:[#allocation14 + $0x4c] sm:$0xf]
    %v7226 = vld [vmem:[#allocation14 + $0x50] sm:$0xf]
    %v7227 = vld [vmem:[#allocation14 + $0x54] sm:$0xf]
    %v7228 = vld [vmem:[#allocation14 + $0x58] sm:$0xf]
    %v7229 = vld [vmem:[#allocation14 + $0x5c] sm:$0xf]
    %v7230 = vld [vmem:[#allocation14 + $0x60] sm:$0xf]
    %v7231 = vld [vmem:[#allocation14 + $0x64] sm:$0xf]
    %v7232 = vld [vmem:[#allocation14 + $0x68] sm:$0xf]
    %v7233 = vld [vmem:[#allocation14 + $0x6c] sm:$0xf]
    %v7234 = vld [vmem:[#allocation14 + $0x70] sm:$0xf]
    %v7235 = vld [vmem:[#allocation14 + $0x74] sm:$0xf]
    %v7236 = vld [vmem:[#allocation14 + $0x78] sm:$0xf]
    %v7237 = vld [vmem:[#allocation14 + $0x7c] sm:$0xf]
    %v7238 = vld [vmem:[#allocation14 + $0x80] sm:$0xf]
    %v7239 = vld [vmem:[#allocation14 + $0x84] sm:$0xf]
    %v7240 = vld [vmem:[#allocation14 + $0x88] sm:$0xf]
    %v7241 = vld [vmem:[#allocation14 + $0x8c] sm:$0xf]
    %v7242 = vld [vmem:[#allocation14 + $0x90] sm:$0xf]
    %v7243 = vld [vmem:[#allocation14 + $0x94] sm:$0xf]
    %v7244 = vld [vmem:[#allocation14 + $0x98] sm:$0xf]
    %v7245 = vld [vmem:[#allocation14 + $0x9c] sm:$0xf]
    %v7246 = vld [vmem:[#allocation14 + $0xa0] sm:$0xf]
    %v7247 = vld [vmem:[#allocation14 + $0xa4] sm:$0xf]
    %v7248 = vld [vmem:[#allocation14 + $0xa8] sm:$0xf]
    %v7249 = vld [vmem:[#allocation14 + $0xac] sm:$0xf]
    %v7250 = vld [vmem:[#allocation14 + $0xb0] sm:$0xf]
    %v7251 = vld [vmem:[#allocation14 + $0xb4] sm:$0xf]
    %v7252 = vld [vmem:[#allocation14 + $0xb8] sm:$0xf]
    %v7253 = vld [vmem:[#allocation14 + $0xbc] sm:$0xf]
    %v7254 = vld [vmem:[#allocation14 + $0xc0] sm:$0xf]
    %v7255 = vld [vmem:[#allocation14 + $0xc4] sm:$0xf]
    %v7256 = vld [vmem:[#allocation14 + $0xc8] sm:$0xf]
    %v7257 = vld [vmem:[#allocation14 + $0xcc] sm:$0xf]
    %v7258 = vld [vmem:[#allocation14 + $0xd0] sm:$0xf]
    %v7259 = vld [vmem:[#allocation14 + $0xd4] sm:$0xf]
    %v7260 = vld [vmem:[#allocation14 + $0xd8] sm:$0xf]
    %v7261 = vld [vmem:[#allocation14 + $0xdc] sm:$0xf]
    %v7262 = vld [vmem:[#allocation14 + $0xe0] sm:$0xf]
    %v7263 = vld [vmem:[#allocation14 + $0xe4] sm:$0xf]
    %v7264 = vld [vmem:[#allocation14 + $0xe8] sm:$0xf]
    %v7265 = vld [vmem:[#allocation14 + $0xec] sm:$0xf]
    %v7266 = vld [vmem:[#allocation14 + $0xf0] sm:$0xf]
    %v7267 = vld [vmem:[#allocation14 + $0xf4] sm:$0xf]
    %v7268 = vld [vmem:[#allocation14 + $0xf8] sm:$0xf]
    %v7269 = vld [vmem:[#allocation14 + $0xfc] sm:$0xf]
    %v7270 = vld [vmem:[#allocation14 + $0x100] sm:$0xf]
    %v7271 = vld [vmem:[#allocation14 + $0x104] sm:$0xf]
    %v7272 = vld [vmem:[#allocation14 + $0x108] sm:$0xf]
    %v7273 = vld [vmem:[#allocation14 + $0x10c] sm:$0xf]
    %v7274 = vld [vmem:[#allocation14 + $0x110] sm:$0xf]
    %v7275 = vld [vmem:[#allocation14 + $0x114] sm:$0xf]
    %v7276 = vld [vmem:[#allocation14 + $0x118] sm:$0xf]
    %v7277 = vld [vmem:[#allocation14 + $0x11c] sm:$0xf]
    %v7278 = vld [vmem:[#allocation14 + $0x120] sm:$0xf]
    %v7279 = vld [vmem:[#allocation14 + $0x124] sm:$0xf]
    %v7280 = vld [vmem:[#allocation14 + $0x128] sm:$0xf]
    %v7281 = vld [vmem:[#allocation15] sm:$0x1]
    %v7283 = vlaneseq
    %v7284 = vshrl.u32 %v7283, 7
    %v7285 = vsub.s32 0, %v7284
    %v7286 = vrot.slane %v7281, %v7285
    %v7363 = vunpack.c.l.b16 %v7206
    %v7364 = vunpack.c.l.b16 %v7207
    %v7365 = vunpack.c.l.b16 %v7208
    %v7366 = vunpack.c.l.b16 %v7209
    %v7367 = vunpack.c.l.b16 %v7210
    %v7368 = vunpack.c.l.b16 %v7211
    %v7369 = vunpack.c.l.b16 %v7212
    %v7370 = vunpack.c.l.b16 %v7213
    %v7371 = vunpack.c.l.b16 %v7214
    %v7372 = vunpack.c.l.b16 %v7215
    %v7373 = vunpack.c.l.b16 %v7216
    %v7374 = vunpack.c.l.b16 %v7217
    %v7375 = vunpack.c.l.b16 %v7218
    %v7376 = vunpack.c.l.b16 %v7219
    %v7377 = vunpack.c.l.b16 %v7220
    %v7378 = vunpack.c.l.b16 %v7221
    %v7379 = vunpack.c.l.b16 %v7222
    %v7380 = vunpack.c.l.b16 %v7223
    %v7381 = vunpack.c.l.b16 %v7224
    %v7382 = vunpack.c.l.b16 %v7225
    %v7383 = vunpack.c.l.b16 %v7226
    %v7384 = vunpack.c.l.b16 %v7227
    %v7385 = vunpack.c.l.b16 %v7228
    %v7386 = vunpack.c.l.b16 %v7229
    %v7387 = vunpack.c.l.b16 %v7230
    %v7388 = vunpack.c.l.b16 %v7231
    %v7389 = vunpack.c.l.b16 %v7232
    %v7390 = vunpack.c.l.b16 %v7233
    %v7391 = vunpack.c.l.b16 %v7234
    %v7392 = vunpack.c.l.b16 %v7235
    %v7393 = vunpack.c.l.b16 %v7236
    %v7394 = vunpack.c.l.b16 %v7237
    %v7395 = vunpack.c.l.b16 %v7238
    %v7396 = vunpack.c.l.b16 %v7239
    %v7397 = vunpack.c.l.b16 %v7240
    %v7398 = vunpack.c.l.b16 %v7241
    %v7399 = vunpack.c.l.b16 %v7242
    %v7400 = vunpack.c.l.b16 %v7243
    %v7401 = vunpack.c.l.b16 %v7244
    %v7402 = vunpack.c.l.b16 %v7245
    %v7403 = vunpack.c.l.b16 %v7246
    %v7404 = vunpack.c.l.b16 %v7247
    %v7405 = vunpack.c.l.b16 %v7248
    %v7406 = vunpack.c.l.b16 %v7249
    %v7407 = vunpack.c.l.b16 %v7250
    %v7408 = vunpack.c.l.b16 %v7251
    %v7409 = vunpack.c.l.b16 %v7252
    %v7410 = vunpack.c.l.b16 %v7253
    %v7411 = vunpack.c.l.b16 %v7254
    %v7412 = vunpack.c.l.b16 %v7255
    %v7413 = vunpack.c.l.b16 %v7256
    %v7414 = vunpack.c.l.b16 %v7257
    %v7415 = vunpack.c.l.b16 %v7258
    %v7416 = vunpack.c.l.b16 %v7259
    %v7417 = vunpack.c.l.b16 %v7260
    %v7418 = vunpack.c.l.b16 %v7261
    %v7419 = vunpack.c.l.b16 %v7262
    %v7420 = vunpack.c.l.b16 %v7263
    %v7421 = vunpack.c.l.b16 %v7264
    %v7422 = vunpack.c.l.b16 %v7265
    %v7423 = vunpack.c.l.b16 %v7266
    %v7424 = vunpack.c.l.b16 %v7267
    %v7425 = vunpack.c.l.b16 %v7268
    %v7426 = vunpack.c.l.b16 %v7269
    %v7427 = vunpack.c.l.b16 %v7270
    %v7428 = vunpack.c.l.b16 %v7271
    %v7429 = vunpack.c.l.b16 %v7272
    %v7430 = vunpack.c.l.b16 %v7273
    %v7431 = vunpack.c.l.b16 %v7274
    %v7432 = vunpack.c.l.b16 %v7275
    %v7433 = vunpack.c.l.b16 %v7276
    %v7434 = vunpack.c.l.b16 %v7277
    %v7435 = vunpack.c.l.b16 %v7278
    %v7436 = vunpack.c.l.b16 %v7279
    %v7437 = vunpack.c.l.b16 %v7280
    %v7438 = vpack.c.b16 %v7364, %v7363
    %v7439 = vpack.c.b16 %v7366, %v7365
    %v7440 = vpack.c.b16 %v7368, %v7367
    %v7441 = vpack.c.b16 %v7370, %v7369
    %v7442 = vpack.c.b16 %v7372, %v7371
    %v7443 = vpack.c.b16 %v7374, %v7373
    %v7444 = vpack.c.b16 %v7376, %v7375
    %v7445 = vpack.c.b16 %v7378, %v7377
    %v7446 = vpack.c.b16 %v7380, %v7379
    %v7447 = vpack.c.b16 %v7382, %v7381
    %v7448 = vpack.c.b16 %v7384, %v7383
    %v7449 = vpack.c.b16 %v7386, %v7385
    %v7450 = vpack.c.b16 %v7388, %v7387
    %v7451 = vpack.c.b16 %v7390, %v7389
    %v7452 = vpack.c.b16 %v7392, %v7391
    %v7453 = vpack.c.b16 %v7394, %v7393
    %v7454 = vpack.c.b16 %v7396, %v7395
    %v7455 = vpack.c.b16 %v7398, %v7397
    %v7456 = vpack.c.b16 %v7400, %v7399
    %v7457 = vpack.c.b16 %v7402, %v7401
    %v7458 = vpack.c.b16 %v7404, %v7403
    %v7459 = vpack.c.b16 %v7406, %v7405
    %v7460 = vpack.c.b16 %v7408, %v7407
    %v7461 = vpack.c.b16 %v7410, %v7409
    %v7462 = vpack.c.b16 %v7412, %v7411
    %v7463 = vpack.c.b16 %v7414, %v7413
    %v7464 = vpack.c.b16 %v7416, %v7415
    %v7465 = vpack.c.b16 %v7418, %v7417
    %v7466 = vpack.c.b16 %v7420, %v7419
    %v7467 = vpack.c.b16 %v7422, %v7421
    %v7468 = vpack.c.b16 %v7424, %v7423
    %v7469 = vpack.c.b16 %v7426, %v7425
    %v7470 = vpack.c.b16 %v7428, %v7427
    %v7471 = vpack.c.b16 %v7430, %v7429
    %v7472 = vpack.c.b16 %v7432, %v7431
    %v7473 = vpack.c.b16 %v7434, %v7433
    %v7474 = vpack.c.b16 %v7436, %v7435
    %v7475 = vpack.c.b16 %v7437, %v7437
    %v7514 = vsel %vm6744, %v7205, 0
    %v7517 = vsel %vm6748, %v7475, 0
    %7519 = vmatprep.subr.bf16.mxu0 0
    %7520 = vmatpush1.bf16.msra.mxu0 %v7438
    %7521 = vmatprep.subr.bf16.mxu0 0
    %7522 = vmatpush1.bf16.msra.mxu0 %v7439
    %7523 = vmatprep.subr.bf16.mxu0 0
    %7524 = vmatpush1.bf16.msra.mxu0 %v7440
    %7525 = vmatprep.subr.bf16.mxu0 0
    %7526 = vmatpush1.bf16.msra.mxu0 %v7441
    %7527 = vmatprep.subr.bf16.mxu0 0
    %7528 = vmatpush1.bf16.msra.mxu0 %v7442
    %7529 = vmatprep.subr.bf16.mxu0 0
    %7530 = vmatpush1.bf16.msra.mxu0 %v7443
    %7531 = vmatprep.subr.bf16.mxu0 0
    %7532 = vmatpush1.bf16.msra.mxu0 %v7444
    %7533 = vmatprep.subr.bf16.mxu0 0
    %7534 = vmatpush1.bf16.msra.mxu0 %v7445
    %7535 = vmatprep.subr.bf16.mxu0 0
    %7536 = vmatpush1.bf16.msra.mxu0 %v7446
    %7537 = vmatprep.subr.bf16.mxu0 0
    %7538 = vmatpush1.bf16.msra.mxu0 %v7447
    %7539 = vmatprep.subr.bf16.mxu0 0
    %7540 = vmatpush1.bf16.msra.mxu0 %v7448
    %7541 = vmatprep.subr.bf16.mxu0 0
    %7542 = vmatpush1.bf16.msra.mxu0 %v7449
    %7543 = vmatprep.subr.bf16.mxu0 0
    %7544 = vmatpush1.bf16.msra.mxu0 %v7450
    %7545 = vmatprep.subr.bf16.mxu0 0
    %7546 = vmatpush1.bf16.msra.mxu0 %v7451
    %7547 = vmatprep.subr.bf16.mxu0 0
    %7548 = vmatpush1.bf16.msra.mxu0 %v7452
    %7549 = vmatprep.subr.bf16.mxu0 0
    %7550 = vmatpush1.bf16.msra.mxu0 %v7453
    %7551 = vmatprep.mubr.bf16.mxu0 %v7202
    %7552 = vmatmul.mubr.bf16.gmra.mrb[0].mxu0 %v7201
    %v7553 = vpop.f32.mrb[0].mxu0
    %v7554 = vadd.f32 %v7286, %v7553
    %v7555 = vpop.f32.mrb[0].mxu0
    %v7556 = vpop.f32.mrb[0].mxu0
    %v7557 = vpop.f32.mrb[0].mxu0
    %7558 = vdwg.mxu0
    %7559 = vmatprep.subr.bf16.mxu0 0
    %7560 = vmatpush1.bf16.msra.mxu0 %v7454
    %7561 = vmatprep.subr.bf16.mxu0 0
    %7562 = vmatpush1.bf16.msra.mxu0 %v7455
    %7563 = vmatprep.subr.bf16.mxu0 0
    %7564 = vmatpush1.bf16.msra.mxu0 %v7456
    %7565 = vmatprep.subr.bf16.mxu0 0
    %7566 = vmatpush1.bf16.msra.mxu0 %v7457
    %7567 = vmatprep.subr.bf16.mxu0 0
    %7568 = vmatpush1.bf16.msra.mxu0 %v7458
    %7569 = vmatprep.subr.bf16.mxu0 0
    %7570 = vmatpush1.bf16.msra.mxu0 %v7459
    %7571 = vmatprep.subr.bf16.mxu0 0
    %7572 = vmatpush1.bf16.msra.mxu0 %v7460
    %7573 = vmatprep.subr.bf16.mxu0 0
    %7574 = vmatpush1.bf16.msra.mxu0 %v7461
    %7575 = vmatprep.subr.bf16.mxu0 0
    %7576 = vmatpush1.bf16.msra.mxu0 %v7462
    %7577 = vmatprep.subr.bf16.mxu0 0
    %7578 = vmatpush1.bf16.msra.mxu0 %v7463
    %7579 = vmatprep.subr.bf16.mxu0 0
    %7580 = vmatpush1.bf16.msra.mxu0 %v7464
    %7581 = vmatprep.subr.bf16.mxu0 0
    %7582 = vmatpush1.bf16.msra.mxu0 %v7465
    %7583 = vmatprep.subr.bf16.mxu0 0
    %7584 = vmatpush1.bf16.msra.mxu0 %v7466
    %7585 = vmatprep.subr.bf16.mxu0 0
    %7586 = vmatpush1.bf16.msra.mxu0 %v7467
    %7587 = vmatprep.subr.bf16.mxu0 0
    %7588 = vmatpush1.bf16.msra.mxu0 %v7468
    %7589 = vmatprep.subr.bf16.mxu0 0
    %7590 = vmatpush1.bf16.msra.mxu0 %v7469
    %7591 = vmatprep.mubr.bf16.mxu0 %v7204
    %7592 = vmatmul.mubr.bf16.gmra.mrb[0].mxu0 %v7203
    %v7593 = vpop.f32.mrb[0].mxu0
    %v7594 = vadd.f32 %v7554, %v7593
    %v7595 = vpop.f32.mrb[0].mxu0
    %v7596 = vpop.f32.mrb[0].mxu0
    %v7597 = vpop.f32.mrb[0].mxu0
    %7598 = vdwg.mxu0
    %7599 = vmatprep.subr.bf16.mxu0 0
    %7600 = vmatpush1.bf16.msra.mxu0 %v7470
    %7601 = vmatprep.subr.bf16.mxu0 0
    %7602 = vmatpush1.bf16.msra.mxu0 %v7471
    %7603 = vmatprep.subr.bf16.mxu0 0
    %7604 = vmatpush1.bf16.msra.mxu0 %v7472
    %7605 = vmatprep.subr.bf16.mxu0 0
    %7606 = vmatpush1.bf16.msra.mxu0 %v7473
    %7607 = vmatprep.subr.bf16.mxu0 0
    %7608 = vmatpush1.bf16.msra.mxu0 %v7474
    %7609 = vmatprep.subr.bf16.mxu0 0
    %7610 = vmatpush1.bf16.msra.mxu0 %v7517
    %7611 = vmatprep.subr.bf16.mxu0 0
    %7612 = vmatpush1.bf16.msra.mxu0 0
    %7613 = vmatprep.subr.bf16.mxu0 0
    %7614 = vmatpush1.bf16.msra.mxu0 0
    %7615 = vmatprep.subr.bf16.mxu0 0
    %7616 = vmatpush1.bf16.msra.mxu0 0
    %7617 = vmatprep.subr.bf16.mxu0 0
    %7618 = vmatpush1.bf16.msra.mxu0 0
    %7619 = vmatprep.subr.bf16.mxu0 0
    %7620 = vmatpush1.bf16.msra.mxu0 0
    %7621 = vmatprep.subr.bf16.mxu0 0
    %7622 = vmatpush1.bf16.msra.mxu0 0
    %7623 = vmatprep.subr.bf16.mxu0 0
    %7624 = vmatpush1.bf16.msra.mxu0 0
    %7625 = vmatprep.subr.bf16.mxu0 0
    %7626 = vmatpush1.bf16.msra.mxu0 0
    %7627 = vmatprep.subr.bf16.mxu0 0
    %7628 = vmatpush1.bf16.msra.mxu0 0
    %7629 = vmatprep.subr.bf16.mxu0 0
    %7630 = vmatpush1.bf16.msra.mxu0 0
    %7631 = vmatprep.mubr.bf16.mxu0 0
    %7632 = vmatmul.mubr.bf16.gmra.mrb[0].mxu0 %v7514
    %v7633 = vpop.f32.mrb[0].mxu0
    %v7634 = vadd.f32 %v7594, %v7633
    %v7635 = vpop.f32.mrb[0].mxu0
    %v7636 = vpop.f32.mrb[0].mxu0
    %v7637 = vpop.f32.mrb[0].mxu0
    %7638 = vdwg.mxu0
    %7639 = vst [vmem:[#allocation17] sm:$0x3] %v7634
    // Predicated region
    $region78: #{_forward_impl.1} parent=1 // pred_check
      _
    $region79: #{_forward_impl.1} parent=1 // pred_check_branch
      %7641 = sbr.rel (0) target = $region81
    $region80: #{_forward_impl.1} parent=1 // pred_region
      %s7643 = ssub.s32 32, 32
      %7644 = vsyncadd [#allocation5], %s7643
      %s7646 = sshll.u32 [#allocation17], 4
      %s7647 = int_to_ptr.vmem [resolvable:$true] %s7646
      %7649 = dma.vmem_to_hbm [thread:$0]  %s7647, 32, %s11, [#allocation5]
    $region81: #{_forward_impl.1} parent=1 // pred_fallthru
      _
    // Predicated region
    $region82: #{_forward_impl.1} parent=1 // pred_check
      _
    $region83: #{_forward_impl.1} parent=1 // pred_check_branch
      %7651 = sbr.rel (0) target = $region85
    $region84: #{_forward_impl.1} parent=1 // pred_region
      _
    $region85: #{_forward_impl.1} parent=1 // pred_fallthru
      _
    // Predicated region
    $region86: #{_forward_impl.1} parent=1 // pred_check
      _
    $region87: #{_forward_impl.1} parent=1 // pred_check_branch
      %7653 = sbr.rel (0) target = $region89
    $region88: #{_forward_impl.1} parent=1 // pred_region
      %7654 = dma.done [#allocation5], 32
    $region89: #{_forward_impl.1} parent=1 // pred_fallthru
      _
    // Predicated region
    $region90: #{_forward_impl.1} parent=1 // pred_check
      _
    $region91: #{_forward_impl.1} parent=1 // pred_check_branch
      %7656 = sbr.rel (0) target = $region93
    $region92: #{_forward_impl.1} parent=1 // pred_region
      _
    $region93: #{_forward_impl.1} parent=1 // pred_fallthru
      _
    %7657 = vsyncpa [#allocation4], 1
    %7658 = vsyncpa [#allocation7], 1
    %7659 = vsyncpa [#allocation10], 1
    %7660 = vsyncpa [#allocation13], 1
    %7661 = vsyncpa [#allocation16], 1
    %7662 = vsyncpa [#allocation5], 1

</llo_original>
